<compile_context>
chip_gen: v6e
topology: v6e:2x2x1
jax: 0.10.0
libtpu: 0.0.40
codegen_flags: <defaults>
</compile_context>

<pallas_src>
import jax
import jax.numpy as jnp
from jax.experimental import pallas as pl
from jax.experimental.pallas import tpu as pltpu

_EPS = 1e-5


def _round_up(x, m):
    return ((x + m - 1) // m) * m


# ---------------------------------------------------------------------------
# Kernel 1: streaming stride-1 3x3 conv (+shift, +residual, +ReLU epilogue)
#   Inputs per grid step i (rows = flattened padded NHWC grid):
#     a_ref: activation rows [i*tm, (i+1)*tm)          (tm, Cin)  bf16
#     b_ref: activation rows [(i+1)*tm, (i+2)*tm)      (tm, Cin)  bf16
#     w_ref: all 9 taps of the (BN-scaled) weight      (9, Cin, Coutp) bf16, resident
#     shift_ref: folded BN shift                       (1, Coutp) f32
#     res_ref (optional): residual rows                (tm, Coutp) bf16
#   For tap offset d (static): rows [i*tm + d, i*tm + d + tm) of the padded grid.
# ---------------------------------------------------------------------------
def _make_stream_kernel(tap_offsets, tm, relu, add_res):
    def kernel(*refs):
        if add_res:
            a_ref, b_ref, w_ref, shift_ref, res_ref, o_ref = refs
        else:
            a_ref, b_ref, w_ref, shift_ref, o_ref = refs
            res_ref = None

        # One contiguous window of 2*tm activation rows.  Work in f32 for the
        # (unaligned) sublane-offset slices, cast back to bf16 right before the
        # MXU dot (exact round-trip, keeps the native bf16 MXU path).
        win = jnp.concatenate([a_ref[...], b_ref[...]], axis=0).astype(jnp.float32)

        acc = None
        for t, d in enumerate(tap_offsets):          # static 9-tap unrolled loop
            xt = win[d:d + tm, :].astype(jnp.bfloat16)
            contrib = jnp.dot(xt, w_ref[t], preferred_element_type=jnp.float32)
            acc = contrib if acc is None else acc + contrib

        y = acc + shift_ref[...]                     # f32 epilogue
        if add_res:
            y = y + res_ref[...].astype(jnp.float32)
        if relu:
            y = jnp.maximum(y, 0.0)
        o_ref[...] = y.astype(o_ref.dtype)

    return kernel


def _conv3x3_s1_stream(x_nhwc, w_oihw, scale, shift, residual=None, relu=True,
                       out_dtype=jnp.bfloat16, tm=512):
    """stride-1 3x3 conv + folded BN (+residual) (+ReLU), tap-streamed in-kernel."""
    N, H, W, Cin = x_nhwc.shape
    Cout = w_oihw.shape[0]
    coutp = _round_up(Cout, 128)
    hp2, wp2 = H + 2, W + 2
    R = N * hp2 * wp2                                 # rows of the padded grid
    offs = tuple(ky * wp2 + kx for ky in range(3) for kx in range(3))
    dmax = offs[-1]

    tm = min(tm, _round_up(R, 16))
    tm = max(tm, _round_up(dmax, 16))                 # window must cover max tap shift
    ntiles = (R + tm - 1) // tm
    mp = ntiles * tm

    # zero-padded activation, flattened to rows; extra tm rows so the (i+1) block
    # of the last tile stays in range.
    xflat = jnp.pad(x_nhwc, ((0, 0), (1, 1), (1, 1), (0, 0))).astype(jnp.bfloat16)
    xflat = xflat.reshape(R, Cin)
    xflat = jnp.pad(xflat, ((0, mp + tm - R), (0, 0)))

    # (Cout, Cin, 3, 3) -> (ky, kx, ci, co) -> (9, Cin, Coutp), BN scale folded in.
    wt = jnp.transpose(w_oihw, (2, 3, 1, 0)).reshape(9, Cin, Cout).astype(jnp.float32)
    wt = wt * scale.astype(jnp.float32).reshape(1, 1, Cout)
    wt = jnp.pad(wt, ((0, 0), (0, 0), (0, coutp - Cout))).astype(jnp.bfloat16)

    shift_p = jnp.pad(shift.astype(jnp.float32), (0, coutp - Cout)).reshape(1, coutp)

    add_res = residual is not None
    inputs = [xflat, xflat, wt, shift_p]
    in_specs = [
        pl.BlockSpec((tm, Cin), lambda i: (i, 0)),
        pl.BlockSpec((tm, Cin), lambda i: (i + 1, 0)),
        pl.BlockSpec((9, Cin, coutp), lambda i: (0, 0, 0)),   # VMEM-resident weight
        pl.BlockSpec((1, coutp), lambda i: (0, 0)),
    ]
    if add_res:
        # Residual laid out on the same padded output grid (pad rows are junk and
        # get sliced off below).
        resp = jnp.pad(residual, ((0, 0), (0, 2), (0, 2), (0, 0)))
        resp = resp.reshape(R, Cout)
        resp = jnp.pad(resp, ((0, mp - R), (0, coutp - Cout))).astype(jnp.bfloat16)
        inputs.append(resp)
        in_specs.append(pl.BlockSpec((tm, coutp), lambda i: (i, 0)))

    out = pl.pallas_call(
        _make_stream_kernel(offs, tm, relu, add_res),
        out_shape=jax.ShapeDtypeStruct((mp, coutp), out_dtype),
        grid_spec=pltpu.PrefetchScalarGridSpec(
            num_scalar_prefetch=0,
            grid=(ntiles,),
            in_specs=in_specs,
            out_specs=pl.BlockSpec((tm, coutp), lambda i: (i, 0)),
        ),
        compiler_params=pltpu.CompilerParams(dimension_semantics=("parallel",)),
    )(*inputs)

    out = out[:R, :Cout].reshape(N, hp2, wp2, Cout)[:, :H, :W, :]
    return out


# ---------------------------------------------------------------------------
# Kernel 2: plain matmul + shift (+residual) (+ReLU) with a VMEM-resident weight.
# Used for the strided conv1 (im2col fallback) and the option-B 1x1 shortcut conv.
# ---------------------------------------------------------------------------
def _make_matmul_kernel(relu, add_res):
    def kernel(*refs):
        if add_res:
            p_ref, w_ref, shift_ref, res_ref, o_ref = refs
        else:
            p_ref, w_ref, shift_ref, o_ref = refs
            res_ref = None
        y = jnp.dot(p_ref[...], w_ref[...], preferred_element_type=jnp.float32)
        y = y + shift_ref[...]
        if add_res:
            y = y + res_ref[...].astype(jnp.float32)
        if relu:
            y = jnp.maximum(y, 0.0)
        o_ref[...] = y.astype(o_ref.dtype)

    return kernel


def _matmul_bn_act(patches, wmat_scaled, shift, residual=None, relu=True,
                   out_dtype=jnp.bfloat16, tm=512):
    """out = act(patches @ wmat_scaled + shift [+residual]); weight stays VMEM-resident."""
    M, K = patches.shape
    Cout = wmat_scaled.shape[1]
    coutp = _round_up(Cout, 128)

    tm = min(tm, _round_up(M, 16))
    mp = _round_up(M, tm)
    ntiles = mp // tm

    p_p = jnp.pad(patches, ((0, mp - M), (0, 0))).astype(jnp.bfloat16)
    w_p = jnp.pad(wmat_scaled, ((0, 0), (0, coutp - Cout))).astype(jnp.bfloat16)
    sh_p = jnp.pad(shift.astype(jnp.float32), (0, coutp - Cout)).reshape(1, coutp)

    add_res = residual is not None
    inputs = [p_p, w_p, sh_p]
    in_specs = [
        pl.BlockSpec((tm, K), lambda i: (i, 0)),
        pl.BlockSpec((K, coutp), lambda i: (0, 0)),          # VMEM-resident weight
        pl.BlockSpec((1, coutp), lambda i: (0, 0)),
    ]
    if add_res:
        r_p = jnp.pad(residual, ((0, mp - M), (0, coutp - Cout))).astype(jnp.bfloat16)
        inputs.append(r_p)
        in_specs.append(pl.BlockSpec((tm, coutp), lambda i: (i, 0)))

    out = pl.pallas_call(
        _make_matmul_kernel(relu, add_res),
        out_shape=jax.ShapeDtypeStruct((mp, coutp), out_dtype),
        grid_spec=pltpu.PrefetchScalarGridSpec(
            num_scalar_prefetch=0,
            grid=(ntiles,),
            in_specs=in_specs,
            out_specs=pl.BlockSpec((tm, coutp), lambda i: (i, 0)),
        ),
        compiler_params=pltpu.CompilerParams(dimension_semantics=("parallel",)),
    )(*inputs)
    return out[:M, :Cout]


# ---------------------------------------------------------------------------
# conv3x3 (pad=1, no bias) + folded BN + optional residual/ReLU dispatch
# ---------------------------------------------------------------------------
def _fold_bn(bn):
    scale = bn["gamma"] / jnp.sqrt(bn["var"] + _EPS)
    shift = bn["beta"] - bn["mean"] * scale
    return scale, shift


def _conv3x3_bn_act(x_nhwc, w_oihw, scale, shift, stride,
                    residual=None, relu=True, out_dtype=jnp.bfloat16):
    if stride == 1:
        return _conv3x3_s1_stream(x_nhwc, w_oihw, scale, shift,
                                  residual=residual, relu=relu, out_dtype=out_dtype)

    # TODO(synk): strided conv still uses an HBM-materialized im2col.
    N, H, W, Cin = x_nhwc.shape
    Cout = w_oihw.shape[0]
    ho = (H - 1) // stride + 1
    wo = (W - 1) // stride + 1

    xp = jnp.pad(x_nhwc, ((0, 0), (1, 1), (1, 1), (0, 0)))
    cols = []
    for ky in range(3):
        for kx in range(3):
            cols.append(xp[:, ky:ky + (ho - 1) * stride + 1:stride,
                              kx:kx + (wo - 1) * stride + 1:stride, :])
    patches = jnp.concatenate(cols, axis=-1).reshape(N * ho * wo, 9 * Cin)

    wmat = jnp.transpose(w_oihw, (2, 3, 1, 0)).reshape(9 * Cin, Cout).astype(jnp.float32)
    wmat = wmat * scale.astype(jnp.float32)[None, :]

    res2d = None
    if residual is not None:
        res2d = residual.reshape(N * ho * wo, Cout)

    out2d = _matmul_bn_act(patches, wmat, shift, residual=res2d, relu=relu,
                           out_dtype=out_dtype)
    return out2d.reshape(N, ho, wo, Cout)


# ---------------------------------------------------------------------------
# BasicBlock forward
# ---------------------------------------------------------------------------
def basic_block_forward_nhwc(x_nhwc, params, stride=1, option="A"):
    N, H, W, Cin = x_nhwc.shape
    planes = params["conv1_w"].shape[0]

    # conv1 + bn1 + relu  (bf16 intermediate)
    s1, b1 = _fold_bn(params["bn1"])
    out1 = _conv3x3_bn_act(x_nhwc, params["conv1_w"], s1, b1, stride,
                           residual=None, relu=True, out_dtype=jnp.bfloat16)

    # shortcut
    if stride != 1 or Cin != planes:
        if option == "A":
            # matches the PyTorch lambda (hardcoded ::2 spatial subsample + channel pad)
            xs = x_nhwc[:, ::2, ::2, :]
            p4 = planes // 4
            short = jnp.pad(xs, ((0, 0), (0, 0), (0, 0), (p4, p4)))
        else:  # option 'B': 1x1 conv (stride) + BN, via the matmul kernel
            xs = x_nhwc[:, ::stride, ::stride, :]
            ns, hs, ws, _ = xs.shape
            ss, sb = _fold_bn(params["bn_sc"])
            wmat = jnp.transpose(params["conv_sc_w"][:, :, 0, 0], (1, 0)).astype(jnp.float32)
            wmat = wmat * ss.astype(jnp.float32)[None, :]
            sc2d = _matmul_bn_act(xs.reshape(ns * hs * ws, Cin), wmat, sb,
                                  residual=None, relu=False, out_dtype=jnp.bfloat16)
            short = sc2d.reshape(ns, hs, ws, planes)
    else:
        short = x_nhwc

    # conv2 + bn2 + residual add + relu, fused in the kernel epilogue (f32 output)
    s2, b2 = _fold_bn(params["bn2"])
    out = _conv3x3_bn_act(out1, params["conv2_w"], s2, b2, 1,
                          residual=short, relu=True, out_dtype=jnp.float32)
    return out


def basic_block_forward(x, params, stride=1, option="A"):
    x_nhwc = jnp.transpose(x.astype(jnp.float32), (0, 2, 3, 1))
    out = basic_block_forward_nhwc(x_nhwc, params, stride, option)
    return jnp.transpose(out, (0, 3, 1, 2))  # back to NCHW


# ---------------------------------------------------------------------------
# Pure-JAX f32 reference (mirrors the PyTorch forward, eval-mode BN)
# ---------------------------------------------------------------------------
def _reference_basic_block(x, params, stride=1, option="A"):
    x = x.astype(jnp.float32)

    def conv(x, w, s, pad):
        return jax.lax.conv_general_dilated(
            x, w, (s, s), [(pad, pad), (pad, pad)],
            dimension_numbers=("NCHW", "OIHW", "NCHW"))

    def bn(x, p):
        inv = 1.0 / jnp.sqrt(p["var"] + _EPS)
        return ((x - p["mean"][None, :, None, None]) * inv[None, :, None, None]
                * p["gamma"][None, :, None, None] + p["beta"][None, :, None, None])

    out = jax.nn.relu(bn(conv(x, params["conv1_w"], stride, 1), params["bn1"]))
    out = bn(conv(out, params["conv2_w"], 1, 1), params["bn2"])

    Cin = x.shape[1]
    planes = params["conv1_w"].shape[0]
    if stride != 1 or Cin != planes:
        if option == "A":
            xs = x[:, :, ::2, ::2]
            p4 = planes // 4
            short = jnp.pad(xs, ((0, 0), (p4, p4), (0, 0), (0, 0)))
        else:
            short = bn(conv(x, params["conv_sc_w"], stride, 0), params["bn_sc"])
    else:
        short = x
    return jax.nn.relu(out + short)


# ---------------------------------------------------------------------------
# Demo / self-check
# ---------------------------------------------------------------------------
def _make_bn(key, c):
    k1, k2, k3, k4 = jax.random.split(key, 4)
    return dict(
        gamma=jax.random.uniform(k1, (c,), minval=0.5, maxval=1.5, dtype=jnp.float32),
        beta=jax.random.normal(k2, (c,), dtype=jnp.float32) * 0.1,
        mean=jax.random.normal(k3, (c,), dtype=jnp.float32) * 0.1,
        var=jax.random.uniform(k4, (c,), minval=0.5, maxval=1.5, dtype=jnp.float32),
    )


def _make_params(key, in_planes, planes, option_b=False):
    k1, k2, k3, k4, k5, k6 = jax.random.split(key, 6)
    p = dict(
        conv1_w=jax.random.normal(k1, (planes, in_planes, 3, 3), jnp.float32) * 0.1,
        bn1=_make_bn(k2, planes),
        conv2_w=jax.random.normal(k3, (planes, planes, 3, 3), jnp.float32) * 0.1,
        bn2=_make_bn(k4, planes),
    )
    if option_b:
        p["conv_sc_w"] = jax.random.normal(k5, (planes, in_planes, 1, 1),
                                           jnp.float32) * 0.1
        p["bn_sc"] = _make_bn(k6, planes)
    return p


if __name__ == "__main__":
    key = jax.random.PRNGKey(0)
    kx1, kp1, kx2, kp2, kp3 = jax.random.split(key, 5)

    # Config 1: stride=1, in_planes == planes -> identity shortcut (streaming path)
    x1 = jax.random.normal(kx1, (2, 16, 16, 16), jnp.float32)    # NCHW
    params1 = _make_params(kp1, 16, 16)
    y1 = basic_block_forward(x1, params1, stride=1, option="A")
    r1 = _reference_basic_block(x1, params1, stride=1, option="A")

    # Config 2: stride=2, 16 -> 32 planes, option 'A' shortcut
    x2 = jax.random.normal(kx2, (2, 16, 16, 16), jnp.float32)
    params2 = _make_params(kp2, 16, 32)
    y2 = basic_block_forward(x2, params2, stride=2, option="A")
    r2 = _reference_basic_block(x2, params2, stride=2, option="A")

    # Config 3: stride=2, 16 -> 32 planes, option 'B' shortcut (1x1 conv + BN)
    params3 = _make_params(kp3, 16, 32, option_b=True)
    y3 = basic_block_forward(x2, params3, stride=2, option="B")
    r3 = _reference_basic_block(x2, params3, stride=2, option="B")

    jax.block_until_ready((y1, y2, y3))

    assert y1.shape == (2, 16, 16, 16), y1.shape
    assert y2.shape == (2, 32, 8, 8), y2.shape
    assert y3.shape == (2, 32, 8, 8), y3.shape
    # bf16 MXU operands -> small numerical drift vs the f32 reference, so the
    # tolerances are looser than the old all-f32 check.
    assert jnp.allclose(y1, r1, atol=1e-1, rtol=1e-1)
    assert jnp.allclose(y2, r2, atol=1e-1, rtol=1e-1)
    assert jnp.allclose(y3, r3, atol=1e-1, rtol=1e-1)

    print("KERNEL_OK")
</pallas_src>

<mosaic_0001>
module attributes {stable_mosaic.version = 11 : i64} {
  func.func @kernel(%arg0: i32, %arg1: memref<512x16xbf16, #tpu.memory_space<vmem>>, %arg2: memref<512x16xbf16, #tpu.memory_space<vmem>>, %arg3: memref<9x16x128xbf16, #tpu.memory_space<vmem>>, %arg4: memref<1x128xf32, #tpu.memory_space<vmem>>, %arg5: memref<512x128xbf16, #tpu.memory_space<vmem>>) attributes {dimension_semantics = [#tpu.dimension_semantics<parallel>], iteration_bounds = array<i64: 2>, scalar_prefetch = 0 : i64, scratch_operands = 0 : i64, tpu.core_type = #tpu.core_type<tc>, window_params = [{transform_indices = @transform_0, window_bounds = array<i64: 512, 16>}, {transform_indices = @transform_1, window_bounds = array<i64: 512, 16>}, {pipeline_mode = #tpu.pipeline_mode<synchronous>, transform_indices = @transform_2, window_bounds = array<i64: 9, 16, 128>}, {pipeline_mode = #tpu.pipeline_mode<synchronous>, transform_indices = @transform_3, window_bounds = array<i64: 1, 128>}, {transform_indices = @transform_4, window_bounds = array<i64: 512, 128>}]} {
    %c0 = arith.constant 0 : index
    %c0_0 = arith.constant 0 : index
    %0 = vector.load %arg1[%c0, %c0_0] : memref<512x16xbf16, #tpu.memory_space<vmem>>, vector<512x16xbf16>
    %c0_1 = arith.constant 0 : index
    %c0_2 = arith.constant 0 : index
    %1 = vector.load %arg2[%c0_1, %c0_2] : memref<512x16xbf16, #tpu.memory_space<vmem>>, vector<512x16xbf16>
    %2 = tpu.concatenate %0, %1 in 0 : vector<512x16xbf16>, vector<512x16xbf16> -> vector<1024x16xbf16>
    %3 = arith.extf %2 : vector<1024x16xbf16> to vector<1024x16xf32>
    %4 = vector.extract_strided_slice %3 {offsets = [0, 0], sizes = [512, 16], strides = [1, 1]} : vector<1024x16xf32> to vector<512x16xf32>
    %5 = arith.truncf %4 : vector<512x16xf32> to vector<512x16xbf16>
    %c0_3 = arith.constant 0 : index
    %c0_4 = arith.constant 0 : index
    %c0_5 = arith.constant 0 : index
    %6 = vector.load %arg3[%c0_3, %c0_4, %c0_5] : memref<9x16x128xbf16, #tpu.memory_space<vmem>>, vector<1x16x128xbf16>
    %7 = vector.shape_cast %6 : vector<1x16x128xbf16> to vector<16x128xbf16>
    %cst = arith.constant dense<0.000000e+00> : vector<512x128xf32>
    %8 = tpu.matmul %5, %7, %cst {dimension_numbers = #tpu.dot_dimension_numbers<[1], [0], [0], [1], [0, 0, 1, 1], [], []>} : vector<512x16xbf16>, vector<16x128xbf16>, vector<512x128xf32> -> vector<512x128xf32>
    %9 = vector.extract_strided_slice %3 {offsets = [1, 0], sizes = [512, 16], strides = [1, 1]} : vector<1024x16xf32> to vector<512x16xf32>
    %10 = arith.truncf %9 : vector<512x16xf32> to vector<512x16xbf16>
    %c1 = arith.constant 1 : index
    %c0_6 = arith.constant 0 : index
    %c0_7 = arith.constant 0 : index
    %11 = vector.load %arg3[%c1, %c0_6, %c0_7] : memref<9x16x128xbf16, #tpu.memory_space<vmem>>, vector<1x16x128xbf16>
    %12 = vector.shape_cast %11 : vector<1x16x128xbf16> to vector<16x128xbf16>
    %cst_8 = arith.constant dense<0.000000e+00> : vector<512x128xf32>
    %13 = tpu.matmul %10, %12, %cst_8 {dimension_numbers = #tpu.dot_dimension_numbers<[1], [0], [0], [1], [0, 0, 1, 1], [], []>} : vector<512x16xbf16>, vector<16x128xbf16>, vector<512x128xf32> -> vector<512x128xf32>
    %14 = arith.addf %8, %13 : vector<512x128xf32>
    %15 = vector.extract_strided_slice %3 {offsets = [2, 0], sizes = [512, 16], strides = [1, 1]} : vector<1024x16xf32> to vector<512x16xf32>
    %16 = arith.truncf %15 : vector<512x16xf32> to vector<512x16xbf16>
    %c2 = arith.constant 2 : index
    %c0_9 = arith.constant 0 : index
    %c0_10 = arith.constant 0 : index
    %17 = vector.load %arg3[%c2, %c0_9, %c0_10] : memref<9x16x128xbf16, #tpu.memory_space<vmem>>, vector<1x16x128xbf16>
    %18 = vector.shape_cast %17 : vector<1x16x128xbf16> to vector<16x128xbf16>
    %cst_11 = arith.constant dense<0.000000e+00> : vector<512x128xf32>
    %19 = tpu.matmul %16, %18, %cst_11 {dimension_numbers = #tpu.dot_dimension_numbers<[1], [0], [0], [1], [0, 0, 1, 1], [], []>} : vector<512x16xbf16>, vector<16x128xbf16>, vector<512x128xf32> -> vector<512x128xf32>
    %20 = arith.addf %14, %19 : vector<512x128xf32>
    %21 = vector.extract_strided_slice %3 {offsets = [18, 0], sizes = [512, 16], strides = [1, 1]} : vector<1024x16xf32> to vector<512x16xf32>
    %22 = arith.truncf %21 : vector<512x16xf32> to vector<512x16xbf16>
    %c3 = arith.constant 3 : index
    %c0_12 = arith.constant 0 : index
    %c0_13 = arith.constant 0 : index
    %23 = vector.load %arg3[%c3, %c0_12, %c0_13] : memref<9x16x128xbf16, #tpu.memory_space<vmem>>, vector<1x16x128xbf16>
    %24 = vector.shape_cast %23 : vector<1x16x128xbf16> to vector<16x128xbf16>
    %cst_14 = arith.constant dense<0.000000e+00> : vector<512x128xf32>
    %25 = tpu.matmul %22, %24, %cst_14 {dimension_numbers = #tpu.dot_dimension_numbers<[1], [0], [0], [1], [0, 0, 1, 1], [], []>} : vector<512x16xbf16>, vector<16x128xbf16>, vector<512x128xf32> -> vector<512x128xf32>
    %26 = arith.addf %20, %25 : vector<512x128xf32>
    %27 = vector.extract_strided_slice %3 {offsets = [19, 0], sizes = [512, 16], strides = [1, 1]} : vector<1024x16xf32> to vector<512x16xf32>
    %28 = arith.truncf %27 : vector<512x16xf32> to vector<512x16xbf16>
    %c4 = arith.constant 4 : index
    %c0_15 = arith.constant 0 : index
    %c0_16 = arith.constant 0 : index
    %29 = vector.load %arg3[%c4, %c0_15, %c0_16] : memref<9x16x128xbf16, #tpu.memory_space<vmem>>, vector<1x16x128xbf16>
    %30 = vector.shape_cast %29 : vector<1x16x128xbf16> to vector<16x128xbf16>
    %cst_17 = arith.constant dense<0.000000e+00> : vector<512x128xf32>
    %31 = tpu.matmul %28, %30, %cst_17 {dimension_numbers = #tpu.dot_dimension_numbers<[1], [0], [0], [1], [0, 0, 1, 1], [], []>} : vector<512x16xbf16>, vector<16x128xbf16>, vector<512x128xf32> -> vector<512x128xf32>
    %32 = arith.addf %26, %31 : vector<512x128xf32>
    %33 = vector.extract_strided_slice %3 {offsets = [20, 0], sizes = [512, 16], strides = [1, 1]} : vector<1024x16xf32> to vector<512x16xf32>
    %34 = arith.truncf %33 : vector<512x16xf32> to vector<512x16xbf16>
    %c5 = arith.constant 5 : index
    %c0_18 = arith.constant 0 : index
    %c0_19 = arith.constant 0 : index
    %35 = vector.load %arg3[%c5, %c0_18, %c0_19] : memref<9x16x128xbf16, #tpu.memory_space<vmem>>, vector<1x16x128xbf16>
    %36 = vector.shape_cast %35 : vector<1x16x128xbf16> to vector<16x128xbf16>
    %cst_20 = arith.constant dense<0.000000e+00> : vector<512x128xf32>
    %37 = tpu.matmul %34, %36, %cst_20 {dimension_numbers = #tpu.dot_dimension_numbers<[1], [0], [0], [1], [0, 0, 1, 1], [], []>} : vector<512x16xbf16>, vector<16x128xbf16>, vector<512x128xf32> -> vector<512x128xf32>
    %38 = arith.addf %32, %37 : vector<512x128xf32>
    %39 = vector.extract_strided_slice %3 {offsets = [36, 0], sizes = [512, 16], strides = [1, 1]} : vector<1024x16xf32> to vector<512x16xf32>
    %40 = arith.truncf %39 : vector<512x16xf32> to vector<512x16xbf16>
    %c6 = arith.constant 6 : index
    %c0_21 = arith.constant 0 : index
    %c0_22 = arith.constant 0 : index
    %41 = vector.load %arg3[%c6, %c0_21, %c0_22] : memref<9x16x128xbf16, #tpu.memory_space<vmem>>, vector<1x16x128xbf16>
    %42 = vector.shape_cast %41 : vector<1x16x128xbf16> to vector<16x128xbf16>
    %cst_23 = arith.constant dense<0.000000e+00> : vector<512x128xf32>
    %43 = tpu.matmul %40, %42, %cst_23 {dimension_numbers = #tpu.dot_dimension_numbers<[1], [0], [0], [1], [0, 0, 1, 1], [], []>} : vector<512x16xbf16>, vector<16x128xbf16>, vector<512x128xf32> -> vector<512x128xf32>
    %44 = arith.addf %38, %43 : vector<512x128xf32>
    %45 = vector.extract_strided_slice %3 {offsets = [37, 0], sizes = [512, 16], strides = [1, 1]} : vector<1024x16xf32> to vector<512x16xf32>
    %46 = arith.truncf %45 : vector<512x16xf32> to vector<512x16xbf16>
    %c7 = arith.constant 7 : index
    %c0_24 = arith.constant 0 : index
    %c0_25 = arith.constant 0 : index
    %47 = vector.load %arg3[%c7, %c0_24, %c0_25] : memref<9x16x128xbf16, #tpu.memory_space<vmem>>, vector<1x16x128xbf16>
    %48 = vector.shape_cast %47 : vector<1x16x128xbf16> to vector<16x128xbf16>
    %cst_26 = arith.constant dense<0.000000e+00> : vector<512x128xf32>
    %49 = tpu.matmul %46, %48, %cst_26 {dimension_numbers = #tpu.dot_dimension_numbers<[1], [0], [0], [1], [0, 0, 1, 1], [], []>} : vector<512x16xbf16>, vector<16x128xbf16>, vector<512x128xf32> -> vector<512x128xf32>
    %50 = arith.addf %44, %49 : vector<512x128xf32>
    %51 = vector.extract_strided_slice %3 {offsets = [38, 0], sizes = [512, 16], strides = [1, 1]} : vector<1024x16xf32> to vector<512x16xf32>
    %52 = arith.truncf %51 : vector<512x16xf32> to vector<512x16xbf16>
    %c8 = arith.constant 8 : index
    %c0_27 = arith.constant 0 : index
    %c0_28 = arith.constant 0 : index
    %53 = vector.load %arg3[%c8, %c0_27, %c0_28] : memref<9x16x128xbf16, #tpu.memory_space<vmem>>, vector<1x16x128xbf16>
    %54 = vector.shape_cast %53 : vector<1x16x128xbf16> to vector<16x128xbf16>
    %cst_29 = arith.constant dense<0.000000e+00> : vector<512x128xf32>
    %55 = tpu.matmul %52, %54, %cst_29 {dimension_numbers = #tpu.dot_dimension_numbers<[1], [0], [0], [1], [0, 0, 1, 1], [], []>} : vector<512x16xbf16>, vector<16x128xbf16>, vector<512x128xf32> -> vector<512x128xf32>
    %56 = arith.addf %50, %55 : vector<512x128xf32>
    %c0_30 = arith.constant 0 : index
    %c0_31 = arith.constant 0 : index
    %57 = vector.load %arg4[%c0_30, %c0_31] : memref<1x128xf32, #tpu.memory_space<vmem>>, vector<1x128xf32>
    %58 = vector.broadcast %57 : vector<1x128xf32> to vector<512x128xf32>
    %59 = arith.addf %56, %58 : vector<512x128xf32>
    %cst_32 = arith.constant 0.000000e+00 : f32
    %60 = vector.broadcast %cst_32 : f32 to vector<512x128xf32>
    %61 = arith.maximumf %59, %60 : vector<512x128xf32>
    %62 = arith.truncf %61 : vector<512x128xf32> to vector<512x128xbf16>
    %c0_33 = arith.constant 0 : index
    %c0_34 = arith.constant 0 : index
    %63 = vector.load %arg5[%c0_33, %c0_34] : memref<512x128xbf16, #tpu.memory_space<vmem>>, vector<512x128xbf16>
    tpu.vector_store %arg5[%c0_33, %c0_34], %62 {strides = array<i32>} : memref<512x128xbf16, #tpu.memory_space<vmem>>, vector<512x128xbf16>,
    return
  }
  func.func @transform_0(%arg0: i32) -> (i32, i32) {
    %c0_i32 = arith.constant 0 : i32
    %c0_i32_0 = arith.constant 0 : i32
    return %arg0, %c0_i32 : i32, i32
  }
  func.func @transform_1(%arg0: i32) -> (i32, i32) {
    %c1_i32 = arith.constant 1 : i32
    %0 = arith.addi %arg0, %c1_i32 : i32
    %c0_i32 = arith.constant 0 : i32
    %c0_i32_0 = arith.constant 0 : i32
    return %0, %c0_i32 : i32, i32
  }
  func.func @transform_2(%arg0: i32) -> (i32, i32, i32) {
    %c0_i32 = arith.constant 0 : i32
    %c0_i32_0 = arith.constant 0 : i32
    %c0_i32_1 = arith.constant 0 : i32
    %c0_i32_2 = arith.constant 0 : i32
    return %c0_i32, %c0_i32_0, %c0_i32_1 : i32, i32, i32
  }
  func.func @transform_3(%arg0: i32) -> (i32, i32) {
    %c0_i32 = arith.constant 0 : i32
    %c0_i32_0 = arith.constant 0 : i32
    %c0_i32_1 = arith.constant 0 : i32
    return %c0_i32, %c0_i32_0 : i32, i32
  }
  func.func @transform_4(%arg0: i32) -> (i32, i32) {
    %c0_i32 = arith.constant 0 : i32
    %c0_i32_0 = arith.constant 0 : i32
    return %arg0, %c0_i32 : i32, i32
  }
}

</mosaic_0001>

<llo_original>
// kernel: tpu_custom_call.1
$region0: #{tpu_custom_call.1}
  #allocation0 [shape = 'u32[]', space=smem, size = 0x4, offset = 0x4, fixed_abs, tag = 'smem constant byte address 0x4 - core index']
  #allocation1 [shape = 'u32[144,128]{1,0:T(1,128)}', space=vmem, size = 0x12000, scoped, tag = 'internal scratch']
  %s0 = inlined_call_operand.vmem [shape: bf16[1536,16], index: 0, kind: input, shape index: {}]
  %s1 = inlined_call_operand.vmem [shape: bf16[1536,16], index: 1, kind: input, shape index: {}]
  %s2 = inlined_call_operand.vmem [shape: bf16[9,16,128], index: 2, kind: input, shape index: {}]
  %s3 = inlined_call_operand.vmem [shape: f32[1,128], index: 3, kind: input, shape index: {}]
  %s4 = inlined_call_operand.hbm [shape: bf16[1024,128], index: 4, kind: output, shape index: {}]
  %s5 = sld [smem:[#allocation0]]
  $region49: #{tpu_custom_call.1} parent=0
    _
  %s7 = ssub.s32 1, %s5
  %s8 = scalar_select 0, %s7, %s5
  $region1: #{tpu_custom_call.1} parent=0
    #allocation2 [shape = 'u8[262144]{0}', space=vmem, size = 0x40000, scoped, tag = 'output window, operand 0']
    #allocation3 [shape = 's32[2]{0}', space=sflag, size = 0x8, scoped, tag = 'scoped memory for tpu_custom_call.1']
    %9 = vsyncpa [#allocation3], 0
    %s10 = scalar_lea.sflag [#allocation3], 1
    %11 = vsyncpa %s10, 0
    loop: start=0, step=1, limit=4
    $region2: #{tpu_custom_call.1} parent=1 // loop_pre_header
      _
    $region3: #{tpu_custom_call.1} parent=1 // loop_header
      %s13 = sphi 0, %s17
      %p14 = scmp.ge.s32.totalorder %s13, 4
      %s23 = sphi 0, %s25
      %s26 = sphi 0, %s23
      %s27 = sphi 0, %s26
      %s43 = sphi 0, %s27
      %s51 = sphi 0, %s53
      %s54 = sphi 0, %s51
      %s55 = sphi 0, %s54
      %s71 = sphi 0, %s55
      %s75 = sphi 0, %s75
      %s77 = sphi 0, %s75
      %s78 = sphi 0, %s77
      %s92 = sphi 0, %s78
      %s96 = sphi 0, %s96
      %s98 = sphi 0, %s96
      %s99 = sphi 0, %s98
      %s113 = sphi 0, %s99
      %s119 = sphi 0, %s121
      %s122 = sphi 0, %s119
      %s123 = sphi 0, %s122
      %s139 = sphi 0, %s123
    $region4: #{tpu_custom_call.1} parent=1 // loop_header_branch
      %16 = sbr.rel (%p14) target = $region8
    $region5: #{tpu_custom_call.1} parent=1 // loop_body
      %s18 = ssub.s32 %s13, 1
      %s19 = ssub.s32 %s13, 2
      %s20 = sadd.s32 %s13, 1
      %s21 = ssub.s32 %s13, %s20
      %p22 = scmp.eq.s32.totalorder %s21, 0
      %s24 = sadd.s32 %s23, 1
      %s25 = scalar_select %p22, %s23, %s24
      %p28 = pneg %p22
      %p29 = scmp.eq.s32.totalorder %s13, 1
      %p30 = por %p28, %p29
      %p31 = scmp.ne.s32.totalorder %s23, %s26
      %p32 = scmp.eq.s32.totalorder %s13, 0
      %p33 = por %p31, %p32
      %p34 = scmp.ne.s32.totalorder %s23, %s26
      %p35 = scmp.eq.s32.totalorder %s18, 1
      %p36 = por %p34, %p35
      %p37 = scmp.ne.s32.totalorder %s26, %s27
      %p38 = scmp.eq.s32.totalorder %s18, 0
      %p39 = por %p37, %p38
      %p40 = scmp.ne.s32.totalorder %s26, %s27
      %p41 = scmp.eq.s32.totalorder %s19, 1
      %p42 = por %p40, %p41
      %p44 = scmp.ne.s32.totalorder %s27, %s43
      %p45 = scmp.eq.s32.totalorder %s19, 0
      %p46 = por %p44, %p45
      %s47 = sadd.s32 %s13, 1
      %s48 = sadd.s32 %s20, 1
      %s49 = ssub.s32 %s47, %s48
      %p50 = scmp.eq.s32.totalorder %s49, 0
      %s52 = sadd.s32 %s51, 1
      %s53 = scalar_select %p50, %s51, %s52
      %p56 = pneg %p50
      %p57 = scmp.eq.s32.totalorder %s13, 1
      %p58 = por %p56, %p57
      %p59 = scmp.ne.s32.totalorder %s51, %s54
      %p60 = scmp.eq.s32.totalorder %s13, 0
      %p61 = por %p59, %p60
      %p62 = scmp.ne.s32.totalorder %s51, %s54
      %p63 = scmp.eq.s32.totalorder %s18, 1
      %p64 = por %p62, %p63
      %p65 = scmp.ne.s32.totalorder %s54, %s55
      %p66 = scmp.eq.s32.totalorder %s18, 0
      %p67 = por %p65, %p66
      %p68 = scmp.ne.s32.totalorder %s54, %s55
      %p69 = scmp.eq.s32.totalorder %s19, 1
      %p70 = por %p68, %p69
      %p72 = scmp.ne.s32.totalorder %s55, %s71
      %p73 = scmp.eq.s32.totalorder %s19, 0
      %p74 = por %p72, %p73
      %s76 = sadd.s32 %s75, 1
      %p79 = scmp.eq.s32.totalorder %s13, 1
      %p80 = scmp.ne.s32.totalorder %s75, %s77
      %p81 = scmp.eq.s32.totalorder %s13, 0
      %p82 = por %p80, %p81
      %p83 = scmp.ne.s32.totalorder %s75, %s77
      %p84 = scmp.eq.s32.totalorder %s18, 1
      %p85 = por %p83, %p84
      %p86 = scmp.ne.s32.totalorder %s77, %s78
      %p87 = scmp.eq.s32.totalorder %s18, 0
      %p88 = por %p86, %p87
      %p89 = scmp.ne.s32.totalorder %s77, %s78
      %p90 = scmp.eq.s32.totalorder %s19, 1
      %p91 = por %p89, %p90
      %p93 = scmp.ne.s32.totalorder %s78, %s92
      %p94 = scmp.eq.s32.totalorder %s19, 0
      %p95 = por %p93, %p94
      %s97 = sadd.s32 %s96, 1
      %p100 = scmp.eq.s32.totalorder %s13, 1
      %p101 = scmp.ne.s32.totalorder %s96, %s98
      %p102 = scmp.eq.s32.totalorder %s13, 0
      %p103 = por %p101, %p102
      %p104 = scmp.ne.s32.totalorder %s96, %s98
      %p105 = scmp.eq.s32.totalorder %s18, 1
      %p106 = por %p104, %p105
      %p107 = scmp.ne.s32.totalorder %s98, %s99
      %p108 = scmp.eq.s32.totalorder %s18, 0
      %p109 = por %p107, %p108
      %p110 = scmp.ne.s32.totalorder %s98, %s99
      %p111 = scmp.eq.s32.totalorder %s19, 1
      %p112 = por %p110, %p111
      %p114 = scmp.ne.s32.totalorder %s99, %s113
      %p115 = scmp.eq.s32.totalorder %s19, 0
      %p116 = por %p114, %p115
      %s117 = ssub.s32 %s13, %s20
      %p118 = scmp.eq.s32.totalorder %s117, 0
      %s120 = sadd.s32 %s119, 1
      %s121 = scalar_select %p118, %s119, %s120
      %p124 = pneg %p118
      %p125 = scmp.eq.s32.totalorder %s13, 1
      %p126 = por %p124, %p125
      %p127 = scmp.ne.s32.totalorder %s119, %s122
      %p128 = scmp.eq.s32.totalorder %s13, 0
      %p129 = por %p127, %p128
      %p130 = scmp.ne.s32.totalorder %s119, %s122
      %p131 = scmp.eq.s32.totalorder %s18, 1
      %p132 = por %p130, %p131
      %p133 = scmp.ne.s32.totalorder %s122, %s123
      %p134 = scmp.eq.s32.totalorder %s18, 0
      %p135 = por %p133, %p134
      %p136 = scmp.ne.s32.totalorder %s122, %s123
      %p137 = scmp.eq.s32.totalorder %s19, 1
      %p138 = por %p136, %p137
      %p140 = scmp.ne.s32.totalorder %s123, %s139
      %p141 = scmp.eq.s32.totalorder %s19, 0
      %p142 = por %p140, %p141
      %p143 = scmp.le.s32.totalorder 1, %s13
      %p144 = scmp.lt.s32.totalorder %s13, 3
      %p145 = pnand %p143, %p144
      %p146 = pneg %p145
      // Predicated region
      $region9: #{tpu_custom_call.1} parent=5 // pred_check
        _
      $region10: #{tpu_custom_call.1} parent=5 // pred_check_branch
        %148 = sbr.rel (%p145) target = $region12
      $region11: #{tpu_custom_call.1} parent=5 // pred_region
        %s149 = ssub.s32 %s13, 1
        // Predicated region
        $region13: #{tpu_custom_call.1} parent=11 // pred_check
          %p150 = pneg %p88
        $region14: #{tpu_custom_call.1} parent=11 // pred_check_branch
          %152 = sbr.rel (%p150) target = $region16
        $region15: #{tpu_custom_call.1} parent=11 // pred_region
          _
        $region16: #{tpu_custom_call.1} parent=11 // pred_fallthru
          _
        // Predicated region
        $region17: #{tpu_custom_call.1} parent=11 // pred_check
          %p153 = pneg %p109
        $region18: #{tpu_custom_call.1} parent=11 // pred_check_branch
          %155 = sbr.rel (%p153) target = $region20
        $region19: #{tpu_custom_call.1} parent=11 // pred_region
          _
        $region20: #{tpu_custom_call.1} parent=11 // pred_fallthru
          _
      $region12: #{tpu_custom_call.1} parent=5 // pred_fallthru
        _
      %p156 = scmp.lt.s32.totalorder %s13, 2
      // Predicated region
      $region21: #{tpu_custom_call.1} parent=5 // pred_check
        %p157 = pneg %p156
      $region22: #{tpu_custom_call.1} parent=5 // pred_check_branch
        %159 = sbr.rel (%p157) target = $region24
      $region23: #{tpu_custom_call.1} parent=5 // pred_region
        // Predicated region
        $region25: #{tpu_custom_call.1} parent=23 // pred_check
          %p160 = pneg %p33
        $region26: #{tpu_custom_call.1} parent=23 // pred_check_branch
          %162 = sbr.rel (%p160) target = $region28
        $region27: #{tpu_custom_call.1} parent=23 // pred_region
          %s163 = smul.u32 64, %s13
          %p164 = scmp.lt.s32.totalorder %s163, 191
          %s165 = scalar_select %p164, %s163, 191
          %s166 = smul.addr %s165, 4
          %s167 = scalar_lea.vmem %s0, %s166
          %s168 = smul.u32 64, %s13
        $region28: #{tpu_custom_call.1} parent=23 // pred_fallthru
          _
        // Predicated region
        $region29: #{tpu_custom_call.1} parent=23 // pred_check
          %p169 = pneg %p61
        $region30: #{tpu_custom_call.1} parent=23 // pred_check_branch
          %171 = sbr.rel (%p169) target = $region32
        $region31: #{tpu_custom_call.1} parent=23 // pred_region
          %s172 = sadd.s32 %s13, 1
          %s173 = smul.u32 64, %s172
          %p174 = scmp.lt.s32.totalorder %s173, 191
          %s175 = scalar_select %p174, %s173, 191
          %s176 = smul.addr %s175, 4
          %s177 = scalar_lea.vmem %s1, %s176
          %s178 = sadd.s32 %s13, 1
          %s179 = smul.u32 64, %s178
        $region32: #{tpu_custom_call.1} parent=23 // pred_fallthru
          _
      $region24: #{tpu_custom_call.1} parent=5 // pred_fallthru
        _
      %p180 = scmp.le.s32.totalorder 1, %s13
      %p181 = scmp.lt.s32.totalorder %s13, 3
      %p182 = pnand %p180, %p181
      %p183 = pneg %p182
      // Predicated region
      $region33: #{tpu_custom_call.1} parent=5 // pred_check
        _
      $region34: #{tpu_custom_call.1} parent=5 // pred_check_branch
        %185 = sbr.rel (%p182) target = $region36
      $region35: #{tpu_custom_call.1} parent=5 // pred_region
        %s186 = ssub.s32 %s13, 1
        %s187 = smul.u32 64, %s18
        %p188 = scmp.lt.s32.totalorder %s187, 191
        %s189 = scalar_select %p188, %s187, 191
        %s190 = smul.addr %s189, 4
        %s191 = scalar_lea.vmem %s0, %s190
        %p192 = pneg %p39
        %p193 = pneg %p36
        %s194 = sadd.s32 %s18, 1
        %s195 = smul.u32 64, %s194
        %p196 = scmp.lt.s32.totalorder %s195, 191
        %s197 = scalar_select %p196, %s195, 191
        %s198 = smul.addr %s197, 4
        %s199 = scalar_lea.vmem %s1, %s198
        %p200 = pneg %p67
        %p201 = pneg %p64
        %p202 = pneg %p88
        %p203 = pneg %p85
        %p204 = pneg %p109
        %p205 = pneg %p106
        %p206 = pneg %p135
        %p207 = pneg %p132
        %s208 = sand.u32 %s122, 1
        %s209 = scalar_lea.sflag [#allocation3], %s208
        %s210 = sand.u32 %s122, 1
        %s211 = smul.addr %s210, 256
        %s212 = scalar_lea.vmem [#allocation2], %s211
        %s213 = smul.u32 64, %s18
        %p214 = scmp.lt.s32.totalorder %s213, 191
        %s215 = scalar_select %p214, %s213, 191
        %s216 = smul.addr %s215, 4
        %s217 = scalar_lea.vmem %s0, %s216
        %s218 = smul.u32 64, %s18
        %s219 = sadd.s32 %s18, 1
        %s220 = smul.u32 64, %s219
        %p221 = scmp.lt.s32.totalorder %s220, 191
        %s222 = scalar_select %p221, %s220, 191
        %s223 = smul.addr %s222, 4
        %s224 = scalar_lea.vmem %s1, %s223
        %s225 = sadd.s32 %s18, 1
        %s226 = smul.u32 64, %s225
        %s227 = smul.u32 64, %s18
        %v229 = vld [vmem:[%s217] sm:$0xf]
        %v230 = vld [vmem:[%s217 + $0x4] sm:$0xf]
        %v231 = vld [vmem:[%s217 + $0x8] sm:$0xf]
        %v232 = vld [vmem:[%s217 + $0xc] sm:$0xf]
        %v233 = vld [vmem:[%s217 + $0x10] sm:$0xf]
        %v234 = vld [vmem:[%s217 + $0x14] sm:$0xf]
        %v235 = vld [vmem:[%s217 + $0x18] sm:$0xf]
        %v236 = vld [vmem:[%s217 + $0x1c] sm:$0xf]
        %v237 = vld [vmem:[%s217 + $0x20] sm:$0xf]
        %v238 = vld [vmem:[%s217 + $0x24] sm:$0xf]
        %v239 = vld [vmem:[%s217 + $0x28] sm:$0xf]
        %v240 = vld [vmem:[%s217 + $0x2c] sm:$0xf]
        %v241 = vld [vmem:[%s217 + $0x30] sm:$0xf]
        %v242 = vld [vmem:[%s217 + $0x34] sm:$0xf]
        %v243 = vld [vmem:[%s217 + $0x38] sm:$0xf]
        %v244 = vld [vmem:[%s217 + $0x3c] sm:$0xf]
        %v245 = vld [vmem:[%s217 + $0x40] sm:$0xf]
        %v246 = vld [vmem:[%s217 + $0x44] sm:$0xf]
        %v247 = vld [vmem:[%s217 + $0x48] sm:$0xf]
        %v248 = vld [vmem:[%s217 + $0x4c] sm:$0xf]
        %v249 = vld [vmem:[%s217 + $0x50] sm:$0xf]
        %v250 = vld [vmem:[%s217 + $0x54] sm:$0xf]
        %v251 = vld [vmem:[%s217 + $0x58] sm:$0xf]
        %v252 = vld [vmem:[%s217 + $0x5c] sm:$0xf]
        %v253 = vld [vmem:[%s217 + $0x60] sm:$0xf]
        %v254 = vld [vmem:[%s217 + $0x64] sm:$0xf]
        %v255 = vld [vmem:[%s217 + $0x68] sm:$0xf]
        %v256 = vld [vmem:[%s217 + $0x6c] sm:$0xf]
        %v257 = vld [vmem:[%s217 + $0x70] sm:$0xf]
        %v258 = vld [vmem:[%s217 + $0x74] sm:$0xf]
        %v259 = vld [vmem:[%s217 + $0x78] sm:$0xf]
        %v260 = vld [vmem:[%s217 + $0x7c] sm:$0xf]
        %v261 = vld [vmem:[%s217 + $0x80] sm:$0xf]
        %v262 = vld [vmem:[%s217 + $0x84] sm:$0xf]
        %v263 = vld [vmem:[%s217 + $0x88] sm:$0xf]
        %v264 = vld [vmem:[%s217 + $0x8c] sm:$0xf]
        %v265 = vld [vmem:[%s217 + $0x90] sm:$0xf]
        %v266 = vld [vmem:[%s217 + $0x94] sm:$0xf]
        %v267 = vld [vmem:[%s217 + $0x98] sm:$0xf]
        %v268 = vld [vmem:[%s217 + $0x9c] sm:$0xf]
        %v269 = vld [vmem:[%s217 + $0xa0] sm:$0xf]
        %v270 = vld [vmem:[%s217 + $0xa4] sm:$0xf]
        %v271 = vld [vmem:[%s217 + $0xa8] sm:$0xf]
        %v272 = vld [vmem:[%s217 + $0xac] sm:$0xf]
        %v273 = vld [vmem:[%s217 + $0xb0] sm:$0xf]
        %v274 = vld [vmem:[%s217 + $0xb4] sm:$0xf]
        %v275 = vld [vmem:[%s217 + $0xb8] sm:$0xf]
        %v276 = vld [vmem:[%s217 + $0xbc] sm:$0xf]
        %v277 = vld [vmem:[%s217 + $0xc0] sm:$0xf]
        %v278 = vld [vmem:[%s217 + $0xc4] sm:$0xf]
        %v279 = vld [vmem:[%s217 + $0xc8] sm:$0xf]
        %v280 = vld [vmem:[%s217 + $0xcc] sm:$0xf]
        %v281 = vld [vmem:[%s217 + $0xd0] sm:$0xf]
        %v282 = vld [vmem:[%s217 + $0xd4] sm:$0xf]
        %v283 = vld [vmem:[%s217 + $0xd8] sm:$0xf]
        %v284 = vld [vmem:[%s217 + $0xdc] sm:$0xf]
        %v285 = vld [vmem:[%s217 + $0xe0] sm:$0xf]
        %v286 = vld [vmem:[%s217 + $0xe4] sm:$0xf]
        %v287 = vld [vmem:[%s217 + $0xe8] sm:$0xf]
        %v288 = vld [vmem:[%s217 + $0xec] sm:$0xf]
        %v289 = vld [vmem:[%s217 + $0xf0] sm:$0xf]
        %v290 = vld [vmem:[%s217 + $0xf4] sm:$0xf]
        %v291 = vld [vmem:[%s217 + $0xf8] sm:$0xf]
        %v292 = vld [vmem:[%s217 + $0xfc] sm:$0xf]
        %v293 = vld [vmem:[%s224] sm:$0xf]
        %v294 = vld [vmem:[%s224 + $0x4] sm:$0xf]
        %v295 = vld [vmem:[%s224 + $0x8] sm:$0xf]
        %v296 = vld [vmem:[%s224 + $0xc] sm:$0xf]
        %v297 = vld [vmem:[%s224 + $0x10] sm:$0xf]
        %v298 = vld [vmem:[%s224 + $0x14] sm:$0xf]
        %v363 = vunpack.c.l.b16 %v229
        %v364 = vunpack.c.l.b16 %v230
        %v365 = vunpack.c.l.b16 %v231
        %v366 = vunpack.c.l.b16 %v232
        %v367 = vunpack.c.l.b16 %v233
        %v368 = vunpack.c.l.b16 %v234
        %v369 = vunpack.c.l.b16 %v235
        %v370 = vunpack.c.l.b16 %v236
        %v371 = vunpack.c.l.b16 %v237
        %v372 = vunpack.c.l.b16 %v238
        %v373 = vunpack.c.l.b16 %v239
        %v374 = vunpack.c.l.b16 %v240
        %v375 = vunpack.c.l.b16 %v241
        %v376 = vunpack.c.l.b16 %v242
        %v377 = vunpack.c.l.b16 %v243
        %v378 = vunpack.c.l.b16 %v244
        %v379 = vunpack.c.l.b16 %v245
        %v380 = vunpack.c.l.b16 %v246
        %v381 = vunpack.c.l.b16 %v247
        %v382 = vunpack.c.l.b16 %v248
        %v383 = vunpack.c.l.b16 %v249
        %v384 = vunpack.c.l.b16 %v250
        %v385 = vunpack.c.l.b16 %v251
        %v386 = vunpack.c.l.b16 %v252
        %v387 = vunpack.c.l.b16 %v253
        %v388 = vunpack.c.l.b16 %v254
        %v389 = vunpack.c.l.b16 %v255
        %v390 = vunpack.c.l.b16 %v256
        %v391 = vunpack.c.l.b16 %v257
        %v392 = vunpack.c.l.b16 %v258
        %v393 = vunpack.c.l.b16 %v259
        %v394 = vunpack.c.l.b16 %v260
        %v395 = vunpack.c.l.b16 %v261
        %v396 = vunpack.c.l.b16 %v262
        %v397 = vunpack.c.l.b16 %v263
        %v398 = vunpack.c.l.b16 %v264
        %v399 = vunpack.c.l.b16 %v265
        %v400 = vunpack.c.l.b16 %v266
        %v401 = vunpack.c.l.b16 %v267
        %v402 = vunpack.c.l.b16 %v268
        %v403 = vunpack.c.l.b16 %v269
        %v404 = vunpack.c.l.b16 %v270
        %v405 = vunpack.c.l.b16 %v271
        %v406 = vunpack.c.l.b16 %v272
        %v407 = vunpack.c.l.b16 %v273
        %v408 = vunpack.c.l.b16 %v274
        %v409 = vunpack.c.l.b16 %v275
        %v410 = vunpack.c.l.b16 %v276
        %v411 = vunpack.c.l.b16 %v277
        %v412 = vunpack.c.l.b16 %v278
        %v413 = vunpack.c.l.b16 %v279
        %v414 = vunpack.c.l.b16 %v280
        %v415 = vunpack.c.l.b16 %v281
        %v416 = vunpack.c.l.b16 %v282
        %v417 = vunpack.c.l.b16 %v283
        %v418 = vunpack.c.l.b16 %v284
        %v419 = vunpack.c.l.b16 %v285
        %v420 = vunpack.c.l.b16 %v286
        %v421 = vunpack.c.l.b16 %v287
        %v422 = vunpack.c.l.b16 %v288
        %v423 = vunpack.c.l.b16 %v289
        %v424 = vunpack.c.l.b16 %v290
        %v425 = vunpack.c.l.b16 %v291
        %v426 = vunpack.c.l.b16 %v292
        %v427 = vpack.c.b16 %v364, %v363
        %v428 = vpack.c.b16 %v366, %v365
        %v429 = vpack.c.b16 %v368, %v367
        %v430 = vpack.c.b16 %v370, %v369
        %v431 = vpack.c.b16 %v372, %v371
        %v432 = vpack.c.b16 %v374, %v373
        %v433 = vpack.c.b16 %v376, %v375
        %v434 = vpack.c.b16 %v378, %v377
        %v435 = vpack.c.b16 %v380, %v379
        %v436 = vpack.c.b16 %v382, %v381
        %v437 = vpack.c.b16 %v384, %v383
        %v438 = vpack.c.b16 %v386, %v385
        %v439 = vpack.c.b16 %v388, %v387
        %v440 = vpack.c.b16 %v390, %v389
        %v441 = vpack.c.b16 %v392, %v391
        %v442 = vpack.c.b16 %v394, %v393
        %v443 = vpack.c.b16 %v396, %v395
        %v444 = vpack.c.b16 %v398, %v397
        %v445 = vpack.c.b16 %v400, %v399
        %v446 = vpack.c.b16 %v402, %v401
        %v447 = vpack.c.b16 %v404, %v403
        %v448 = vpack.c.b16 %v406, %v405
        %v449 = vpack.c.b16 %v408, %v407
        %v450 = vpack.c.b16 %v410, %v409
        %v451 = vpack.c.b16 %v412, %v411
        %v452 = vpack.c.b16 %v414, %v413
        %v453 = vpack.c.b16 %v416, %v415
        %v454 = vpack.c.b16 %v418, %v417
        %v455 = vpack.c.b16 %v420, %v419
        %v456 = vpack.c.b16 %v422, %v421
        %v457 = vpack.c.b16 %v424, %v423
        %v458 = vpack.c.b16 %v426, %v425
        %v497 = vunpack.c.l.b16 %v293
        %v498 = vunpack.c.l.b16 %v294
        %v499 = vunpack.c.l.b16 %v295
        %v500 = vunpack.c.l.b16 %v296
        %v501 = vunpack.c.l.b16 %v297
        %v502 = vunpack.c.l.b16 %v298
        %v503 = vpack.c.b16 %v498, %v497
        %v504 = vpack.c.b16 %v500, %v499
        %v505 = vpack.c.b16 %v502, %v501
        %v509 = vunpack.c.l.bf16 %v427
        %v510 = vunpack.c.h.bf16 %v427
        %v511 = vunpack.c.l.bf16 %v428
        %v512 = vunpack.c.h.bf16 %v428
        %v513 = vunpack.c.l.bf16 %v429
        %v514 = vunpack.c.h.bf16 %v429
        %v515 = vunpack.c.l.bf16 %v430
        %v516 = vunpack.c.h.bf16 %v430
        %v517 = vunpack.c.l.bf16 %v431
        %v518 = vunpack.c.h.bf16 %v431
        %v519 = vunpack.c.l.bf16 %v432
        %v520 = vunpack.c.h.bf16 %v432
        %v521 = vunpack.c.l.bf16 %v433
        %v522 = vunpack.c.h.bf16 %v433
        %v523 = vunpack.c.l.bf16 %v434
        %v524 = vunpack.c.h.bf16 %v434
        %v525 = vunpack.c.l.bf16 %v435
        %v526 = vunpack.c.h.bf16 %v435
        %v527 = vunpack.c.l.bf16 %v436
        %v528 = vunpack.c.h.bf16 %v436
        %v529 = vunpack.c.l.bf16 %v437
        %v530 = vunpack.c.h.bf16 %v437
        %v531 = vunpack.c.l.bf16 %v438
        %v532 = vunpack.c.h.bf16 %v438
        %v533 = vunpack.c.l.bf16 %v439
        %v534 = vunpack.c.h.bf16 %v439
        %v535 = vunpack.c.l.bf16 %v440
        %v536 = vunpack.c.h.bf16 %v440
        %v537 = vunpack.c.l.bf16 %v441
        %v538 = vunpack.c.h.bf16 %v441
        %v539 = vunpack.c.l.bf16 %v442
        %v540 = vunpack.c.h.bf16 %v442
        %v541 = vunpack.c.l.bf16 %v443
        %v542 = vunpack.c.h.bf16 %v443
        %v543 = vunpack.c.l.bf16 %v444
        %v544 = vunpack.c.h.bf16 %v444
        %v545 = vunpack.c.l.bf16 %v445
        %v546 = vunpack.c.h.bf16 %v445
        %v547 = vunpack.c.l.bf16 %v446
        %v548 = vunpack.c.h.bf16 %v446
        %v549 = vunpack.c.l.bf16 %v447
        %v550 = vunpack.c.h.bf16 %v447
        %v551 = vunpack.c.l.bf16 %v448
        %v552 = vunpack.c.h.bf16 %v448
        %v553 = vunpack.c.l.bf16 %v449
        %v554 = vunpack.c.h.bf16 %v449
        %v555 = vunpack.c.l.bf16 %v450
        %v556 = vunpack.c.h.bf16 %v450
        %v557 = vunpack.c.l.bf16 %v451
        %v558 = vunpack.c.h.bf16 %v451
        %v559 = vunpack.c.l.bf16 %v452
        %v560 = vunpack.c.h.bf16 %v452
        %v561 = vunpack.c.l.bf16 %v453
        %v562 = vunpack.c.h.bf16 %v453
        %v563 = vunpack.c.l.bf16 %v454
        %v564 = vunpack.c.h.bf16 %v454
        %v565 = vunpack.c.l.bf16 %v455
        %v566 = vunpack.c.h.bf16 %v455
        %v567 = vunpack.c.l.bf16 %v456
        %v568 = vunpack.c.h.bf16 %v456
        %v569 = vunpack.c.l.bf16 %v457
        %v570 = vunpack.c.h.bf16 %v457
        %v571 = vunpack.c.l.bf16 %v458
        %v572 = vunpack.c.h.bf16 %v458
        %v573 = vunpack.c.l.bf16 %v503
        %v574 = vunpack.c.h.bf16 %v503
        %v575 = vunpack.c.l.bf16 %v504
        %v576 = vunpack.c.h.bf16 %v504
        %v577 = vunpack.c.l.bf16 %v505
        %v578 = vpack.c.bf16 %v510, %v509
        %v579 = vpack.c.bf16 %v512, %v511
        %v580 = vpack.c.bf16 %v514, %v513
        %v581 = vpack.c.bf16 %v516, %v515
        %v582 = vpack.c.bf16 %v518, %v517
        %v583 = vpack.c.bf16 %v520, %v519
        %v584 = vpack.c.bf16 %v522, %v521
        %v585 = vpack.c.bf16 %v524, %v523
        %v586 = vpack.c.bf16 %v526, %v525
        %v587 = vpack.c.bf16 %v528, %v527
        %v588 = vpack.c.bf16 %v530, %v529
        %v589 = vpack.c.bf16 %v532, %v531
        %v590 = vpack.c.bf16 %v534, %v533
        %v591 = vpack.c.bf16 %v536, %v535
        %v592 = vpack.c.bf16 %v538, %v537
        %v593 = vpack.c.bf16 %v540, %v539
        %v594 = vpack.c.bf16 %v542, %v541
        %v595 = vpack.c.bf16 %v544, %v543
        %v596 = vpack.c.bf16 %v546, %v545
        %v597 = vpack.c.bf16 %v548, %v547
        %v598 = vpack.c.bf16 %v550, %v549
        %v599 = vpack.c.bf16 %v552, %v551
        %v600 = vpack.c.bf16 %v554, %v553
        %v601 = vpack.c.bf16 %v556, %v555
        %v602 = vpack.c.bf16 %v558, %v557
        %v603 = vpack.c.bf16 %v560, %v559
        %v604 = vpack.c.bf16 %v562, %v561
        %v605 = vpack.c.bf16 %v564, %v563
        %v606 = vpack.c.bf16 %v566, %v565
        %v607 = vpack.c.bf16 %v568, %v567
        %v608 = vpack.c.bf16 %v570, %v569
        %v609 = vpack.c.bf16 %v572, %v571
        %v610 = vld [vmem:[%s2] sm:$0xf]
        %v611 = vld [vmem:[%s2 + $0x4] sm:$0xf]
        %v612 = vpack.c.bf16 %v573, %v573
        %s613 = scalar_lea.vmem %s2, 8
        %v614 = vld [vmem:[%s613] sm:$0xf]
        %v615 = vld [vmem:[%s613 + $0x4] sm:$0xf]
        %vm616 = vsmask.f32 7424
        %v618 = vshrl.u32 %v578, 16
        %v620 = vshll.u32 %v578, 16
        %v622 = vrot.slane %v620, 1
        %v623 = vor.u32 %v618, %v622
        %v625 = vshll.u32 %v579, 16
        %v627 = vrot.slane %v625, 1
        %v628 = vsel %vm616, %v623, %v627
        %v629 = vshrl.u32 %v579, 16
        %v631 = vor.u32 %v629, %v627
        %v633 = vshll.u32 %v580, 16
        %v635 = vrot.slane %v633, 1
        %v636 = vsel %vm616, %v631, %v635
        %v637 = vshrl.u32 %v580, 16
        %v639 = vor.u32 %v637, %v635
        %v641 = vshll.u32 %v581, 16
        %v643 = vrot.slane %v641, 1
        %v644 = vsel %vm616, %v639, %v643
        %v645 = vshrl.u32 %v581, 16
        %v647 = vor.u32 %v645, %v643
        %v649 = vshll.u32 %v582, 16
        %v651 = vrot.slane %v649, 1
        %v652 = vsel %vm616, %v647, %v651
        %v653 = vshrl.u32 %v582, 16
        %v655 = vor.u32 %v653, %v651
        %v657 = vshll.u32 %v583, 16
        %v659 = vrot.slane %v657, 1
        %v660 = vsel %vm616, %v655, %v659
        %v661 = vshrl.u32 %v583, 16
        %v663 = vor.u32 %v661, %v659
        %v665 = vshll.u32 %v584, 16
        %v667 = vrot.slane %v665, 1
        %v668 = vsel %vm616, %v663, %v667
        %v669 = vshrl.u32 %v584, 16
        %v671 = vor.u32 %v669, %v667
        %v673 = vshll.u32 %v585, 16
        %v675 = vrot.slane %v673, 1
        %v676 = vsel %vm616, %v671, %v675
        %v677 = vshrl.u32 %v585, 16
        %v679 = vor.u32 %v677, %v675
        %v681 = vshll.u32 %v586, 16
        %v683 = vrot.slane %v681, 1
        %v684 = vsel %vm616, %v679, %v683
        %v685 = vshrl.u32 %v586, 16
        %v687 = vor.u32 %v685, %v683
        %v689 = vshll.u32 %v587, 16
        %v691 = vrot.slane %v689, 1
        %v692 = vsel %vm616, %v687, %v691
        %v693 = vshrl.u32 %v587, 16
        %v695 = vor.u32 %v693, %v691
        %v697 = vshll.u32 %v588, 16
        %v699 = vrot.slane %v697, 1
        %v700 = vsel %vm616, %v695, %v699
        %v701 = vshrl.u32 %v588, 16
        %v703 = vor.u32 %v701, %v699
        %v705 = vshll.u32 %v589, 16
        %v707 = vrot.slane %v705, 1
        %v708 = vsel %vm616, %v703, %v707
        %v709 = vshrl.u32 %v589, 16
        %v711 = vor.u32 %v709, %v707
        %v713 = vshll.u32 %v590, 16
        %v715 = vrot.slane %v713, 1
        %v716 = vsel %vm616, %v711, %v715
        %v717 = vshrl.u32 %v590, 16
        %v719 = vor.u32 %v717, %v715
        %v721 = vshll.u32 %v591, 16
        %v723 = vrot.slane %v721, 1
        %v724 = vsel %vm616, %v719, %v723
        %v725 = vshrl.u32 %v591, 16
        %v727 = vor.u32 %v725, %v723
        %v729 = vshll.u32 %v592, 16
        %v731 = vrot.slane %v729, 1
        %v732 = vsel %vm616, %v727, %v731
        %v733 = vshrl.u32 %v592, 16
        %v735 = vor.u32 %v733, %v731
        %v737 = vshll.u32 %v593, 16
        %v739 = vrot.slane %v737, 1
        %v740 = vsel %vm616, %v735, %v739
        %v741 = vshrl.u32 %v593, 16
        %v743 = vor.u32 %v741, %v739
        %v745 = vshll.u32 %v594, 16
        %v747 = vrot.slane %v745, 1
        %v748 = vsel %vm616, %v743, %v747
        %v749 = vshrl.u32 %v594, 16
        %v751 = vor.u32 %v749, %v747
        %v753 = vshll.u32 %v595, 16
        %v755 = vrot.slane %v753, 1
        %v756 = vsel %vm616, %v751, %v755
        %v757 = vshrl.u32 %v595, 16
        %v759 = vor.u32 %v757, %v755
        %v761 = vshll.u32 %v596, 16
        %v763 = vrot.slane %v761, 1
        %v764 = vsel %vm616, %v759, %v763
        %v765 = vshrl.u32 %v596, 16
        %v767 = vor.u32 %v765, %v763
        %v769 = vshll.u32 %v597, 16
        %v771 = vrot.slane %v769, 1
        %v772 = vsel %vm616, %v767, %v771
        %v773 = vshrl.u32 %v597, 16
        %v775 = vor.u32 %v773, %v771
        %v777 = vshll.u32 %v598, 16
        %v779 = vrot.slane %v777, 1
        %v780 = vsel %vm616, %v775, %v779
        %v781 = vshrl.u32 %v598, 16
        %v783 = vor.u32 %v781, %v779
        %v785 = vshll.u32 %v599, 16
        %v787 = vrot.slane %v785, 1
        %v788 = vsel %vm616, %v783, %v787
        %v789 = vshrl.u32 %v599, 16
        %v791 = vor.u32 %v789, %v787
        %v793 = vshll.u32 %v600, 16
        %v795 = vrot.slane %v793, 1
        %v796 = vsel %vm616, %v791, %v795
        %v797 = vshrl.u32 %v600, 16
        %v799 = vor.u32 %v797, %v795
        %v801 = vshll.u32 %v601, 16
        %v803 = vrot.slane %v801, 1
        %v804 = vsel %vm616, %v799, %v803
        %v805 = vshrl.u32 %v601, 16
        %v807 = vor.u32 %v805, %v803
        %v809 = vshll.u32 %v602, 16
        %v811 = vrot.slane %v809, 1
        %v812 = vsel %vm616, %v807, %v811
        %v813 = vshrl.u32 %v602, 16
        %v815 = vor.u32 %v813, %v811
        %v817 = vshll.u32 %v603, 16
        %v819 = vrot.slane %v817, 1
        %v820 = vsel %vm616, %v815, %v819
        %v821 = vshrl.u32 %v603, 16
        %v823 = vor.u32 %v821, %v819
        %v825 = vshll.u32 %v604, 16
        %v827 = vrot.slane %v825, 1
        %v828 = vsel %vm616, %v823, %v827
        %v829 = vshrl.u32 %v604, 16
        %v831 = vor.u32 %v829, %v827
        %v833 = vshll.u32 %v605, 16
        %v835 = vrot.slane %v833, 1
        %v836 = vsel %vm616, %v831, %v835
        %v837 = vshrl.u32 %v605, 16
        %v839 = vor.u32 %v837, %v835
        %v841 = vshll.u32 %v606, 16
        %v843 = vrot.slane %v841, 1
        %v844 = vsel %vm616, %v839, %v843
        %v845 = vshrl.u32 %v606, 16
        %v847 = vor.u32 %v845, %v843
        %v849 = vshll.u32 %v607, 16
        %v851 = vrot.slane %v849, 1
        %v852 = vsel %vm616, %v847, %v851
        %v853 = vshrl.u32 %v607, 16
        %v855 = vor.u32 %v853, %v851
        %v857 = vshll.u32 %v608, 16
        %v859 = vrot.slane %v857, 1
        %v860 = vsel %vm616, %v855, %v859
        %v861 = vshrl.u32 %v608, 16
        %v863 = vor.u32 %v861, %v859
        %v865 = vshll.u32 %v609, 16
        %v867 = vrot.slane %v865, 1
        %v868 = vsel %vm616, %v863, %v867
        %v869 = vshrl.u32 %v609, 16
        %v871 = vor.u32 %v869, %v867
        %v873 = vshll.u32 %v612, 16
        %v875 = vrot.slane %v873, 1
        %v876 = vsel %vm616, %v871, %v875
        %v879 = vunpack.c.l.b16 %v614
        %v880 = vunpack.c.l.b16 %v615
        %v881 = vpack.c.b16 %v880, %v879
        %vm883 = vcmask 130048
        %v885 = vsel %vm883, %v628, 0
        %v888 = vsel %vm883, %v636, 0
        %v891 = vsel %vm883, %v644, 0
        %v894 = vsel %vm883, %v652, 0
        %v897 = vsel %vm883, %v660, 0
        %v900 = vsel %vm883, %v668, 0
        %v903 = vsel %vm883, %v676, 0
        %v906 = vsel %vm883, %v684, 0
        %v909 = vsel %vm883, %v692, 0
        %v912 = vsel %vm883, %v700, 0
        %v915 = vsel %vm883, %v708, 0
        %v918 = vsel %vm883, %v716, 0
        %v921 = vsel %vm883, %v724, 0
        %v924 = vsel %vm883, %v732, 0
        %v927 = vsel %vm883, %v740, 0
        %v930 = vsel %vm883, %v748, 0
        %v933 = vsel %vm883, %v756, 0
        %v936 = vsel %vm883, %v764, 0
        %v939 = vsel %vm883, %v772, 0
        %v942 = vsel %vm883, %v780, 0
        %v945 = vsel %vm883, %v788, 0
        %v948 = vsel %vm883, %v796, 0
        %v951 = vsel %vm883, %v804, 0
        %v954 = vsel %vm883, %v812, 0
        %v957 = vsel %vm883, %v820, 0
        %v960 = vsel %vm883, %v828, 0
        %v963 = vsel %vm883, %v836, 0
        %v966 = vsel %vm883, %v844, 0
        %v969 = vsel %vm883, %v852, 0
        %v972 = vsel %vm883, %v860, 0
        %v975 = vsel %vm883, %v868, 0
        %v978 = vsel %vm883, %v876, 0
        %980 = vmatprep.subr.bf16.mxu0 0
        %981 = vmatpush1.bf16.msra.mxu0 0
        %982 = vmatprep.subr.bf16.mxu0 0
        %983 = vmatpush1.bf16.msra.mxu0 0
        %984 = vmatprep.subr.bf16.mxu0 0
        %985 = vmatpush1.bf16.msra.mxu0 0
        %986 = vmatprep.subr.bf16.mxu0 0
        %987 = vmatpush1.bf16.msra.mxu0 0
        %988 = vmatprep.subr.bf16.mxu0 0
        %989 = vmatpush1.bf16.msra.mxu0 0
        %990 = vmatprep.subr.bf16.mxu0 0
        %991 = vmatpush1.bf16.msra.mxu0 0
        %992 = vmatprep.subr.bf16.mxu0 0
        %993 = vmatpush1.bf16.msra.mxu0 0
        %994 = vmatprep.subr.bf16.mxu0 0
        %995 = vmatpush1.bf16.msra.mxu0 %v881
        %996 = vmatprep.subr.bf16.mxu0 0
        %997 = vmatpush2.bf16.msra.mxu0 0
        %998 = vmatprep.subr.bf16.mxu0 0
        %999 = vmatpush2.bf16.msra.mxu0 0
        %1000 = vmatprep.subr.bf16.mxu0 0
        %1001 = vmatpush2.bf16.msra.mxu0 0
        %1002 = vmatprep.subr.bf16.mxu0 0
        %1003 = vmatpush2.bf16.msra.mxu0 0
        %1004 = vmatprep.subr.bf16.mxu0 0
        %1005 = vmatpush2.bf16.msra.mxu0 0
        %1006 = vmatprep.subr.bf16.mxu0 0
        %1007 = vmatpush2.bf16.msra.mxu0 0
        %1008 = vmatprep.subr.bf16.mxu0 0
        %1009 = vmatpush2.bf16.msra.mxu0 0
        %1010 = vmatprep.subr.bf16.mxu0 0
        %1011 = vmatpush2.bf16.msra.mxu0 0
        %1012 = vmatprep.mubr.bf16.mxu0 0
        %1013 = vmatmul.mubr.bf16.gmra.mxu0 %v885
        %v1014 = vpop.f32.mrf.mxu0
        %v1015 = vadd.f32 0.0, %v1014
        %v1016 = vpop.f32.mrf.mxu0
        %v1017 = vpop.f32.mrf.mxu0
        %v1018 = vadd.f32 0.0, %v1017
        %v1019 = vpop.f32.mrf.mxu0
        %1020 = vmatprep.mubr.bf16.mxu0 0
        %1021 = vmatmul.mubr.bf16.gmra.mxu0 %v888
        %v1022 = vpop.f32.mrf.mxu0
        %v1023 = vadd.f32 0.0, %v1022
        %v1024 = vpop.f32.mrf.mxu0
        %v1025 = vpop.f32.mrf.mxu0
        %v1026 = vadd.f32 0.0, %v1025
        %v1027 = vpop.f32.mrf.mxu0
        %1028 = vmatprep.mubr.bf16.mxu0 0
        %1029 = vmatmul.mubr.bf16.gmra.mxu0 %v891
        %v1030 = vpop.f32.mrf.mxu0
        %v1031 = vadd.f32 0.0, %v1030
        %v1032 = vpop.f32.mrf.mxu0
        %v1033 = vpop.f32.mrf.mxu0
        %v1034 = vadd.f32 0.0, %v1033
        %v1035 = vpop.f32.mrf.mxu0
        %1036 = vmatprep.mubr.bf16.mxu0 0
        %1037 = vmatmul.mubr.bf16.gmra.mxu0 %v894
        %v1038 = vpop.f32.mrf.mxu0
        %v1039 = vadd.f32 0.0, %v1038
        %v1040 = vpop.f32.mrf.mxu0
        %v1041 = vpop.f32.mrf.mxu0
        %v1042 = vadd.f32 0.0, %v1041
        %v1043 = vpop.f32.mrf.mxu0
        %1044 = vmatprep.mubr.bf16.mxu0 0
        %1045 = vmatmul.mubr.bf16.gmra.mxu0 %v897
        %v1046 = vpop.f32.mrf.mxu0
        %v1047 = vadd.f32 0.0, %v1046
        %v1048 = vpop.f32.mrf.mxu0
        %v1049 = vpop.f32.mrf.mxu0
        %v1050 = vadd.f32 0.0, %v1049
        %v1051 = vpop.f32.mrf.mxu0
        %1052 = vmatprep.mubr.bf16.mxu0 0
        %1053 = vmatmul.mubr.bf16.gmra.mxu0 %v900
        %v1054 = vpop.f32.mrf.mxu0
        %v1055 = vadd.f32 0.0, %v1054
        %v1056 = vpop.f32.mrf.mxu0
        %v1057 = vpop.f32.mrf.mxu0
        %v1058 = vadd.f32 0.0, %v1057
        %v1059 = vpop.f32.mrf.mxu0
        %1060 = vmatprep.mubr.bf16.mxu0 0
        %1061 = vmatmul.mubr.bf16.gmra.mxu0 %v903
        %v1062 = vpop.f32.mrf.mxu0
        %v1063 = vadd.f32 0.0, %v1062
        %v1064 = vpop.f32.mrf.mxu0
        %v1065 = vpop.f32.mrf.mxu0
        %v1066 = vadd.f32 0.0, %v1065
        %v1067 = vpop.f32.mrf.mxu0
        %1068 = vmatprep.mubr.bf16.mxu0 0
        %1069 = vmatmul.mubr.bf16.gmra.mxu0 %v906
        %v1070 = vpop.f32.mrf.mxu0
        %v1071 = vadd.f32 0.0, %v1070
        %v1072 = vpop.f32.mrf.mxu0
        %v1073 = vpop.f32.mrf.mxu0
        %v1074 = vadd.f32 0.0, %v1073
        %v1075 = vpop.f32.mrf.mxu0
        %1076 = vmatprep.mubr.bf16.mxu0 0
        %1077 = vmatmul.mubr.bf16.gmra.mxu0 %v909
        %v1078 = vpop.f32.mrf.mxu0
        %v1079 = vadd.f32 0.0, %v1078
        %v1080 = vpop.f32.mrf.mxu0
        %v1081 = vpop.f32.mrf.mxu0
        %v1082 = vadd.f32 0.0, %v1081
        %v1083 = vpop.f32.mrf.mxu0
        %1084 = vmatprep.mubr.bf16.mxu0 0
        %1085 = vmatmul.mubr.bf16.gmra.mxu0 %v912
        %v1086 = vpop.f32.mrf.mxu0
        %v1087 = vadd.f32 0.0, %v1086
        %v1088 = vpop.f32.mrf.mxu0
        %v1089 = vpop.f32.mrf.mxu0
        %v1090 = vadd.f32 0.0, %v1089
        %v1091 = vpop.f32.mrf.mxu0
        %1092 = vmatprep.mubr.bf16.mxu0 0
        %1093 = vmatmul.mubr.bf16.gmra.mxu0 %v915
        %v1094 = vpop.f32.mrf.mxu0
        %v1095 = vadd.f32 0.0, %v1094
        %v1096 = vpop.f32.mrf.mxu0
        %v1097 = vpop.f32.mrf.mxu0
        %v1098 = vadd.f32 0.0, %v1097
        %v1099 = vpop.f32.mrf.mxu0
        %1100 = vmatprep.mubr.bf16.mxu0 0
        %1101 = vmatmul.mubr.bf16.gmra.mxu0 %v918
        %v1102 = vpop.f32.mrf.mxu0
        %v1103 = vadd.f32 0.0, %v1102
        %v1104 = vpop.f32.mrf.mxu0
        %v1105 = vpop.f32.mrf.mxu0
        %v1106 = vadd.f32 0.0, %v1105
        %v1107 = vpop.f32.mrf.mxu0
        %1108 = vmatprep.mubr.bf16.mxu0 0
        %1109 = vmatmul.mubr.bf16.gmra.mxu0 %v921
        %v1110 = vpop.f32.mrf.mxu0
        %v1111 = vadd.f32 0.0, %v1110
        %v1112 = vpop.f32.mrf.mxu0
        %v1113 = vpop.f32.mrf.mxu0
        %v1114 = vadd.f32 0.0, %v1113
        %v1115 = vpop.f32.mrf.mxu0
        %1116 = vmatprep.mubr.bf16.mxu0 0
        %1117 = vmatmul.mubr.bf16.gmra.mxu0 %v924
        %v1118 = vpop.f32.mrf.mxu0
        %v1119 = vadd.f32 0.0, %v1118
        %v1120 = vpop.f32.mrf.mxu0
        %v1121 = vpop.f32.mrf.mxu0
        %v1122 = vadd.f32 0.0, %v1121
        %v1123 = vpop.f32.mrf.mxu0
        %1124 = vmatprep.mubr.bf16.mxu0 0
        %1125 = vmatmul.mubr.bf16.gmra.mxu0 %v927
        %v1126 = vpop.f32.mrf.mxu0
        %v1127 = vadd.f32 0.0, %v1126
        %v1128 = vpop.f32.mrf.mxu0
        %v1129 = vpop.f32.mrf.mxu0
        %v1130 = vadd.f32 0.0, %v1129
        %v1131 = vpop.f32.mrf.mxu0
        %1132 = vmatprep.mubr.bf16.mxu0 0
        %1133 = vmatmul.mubr.bf16.gmra.mxu0 %v930
        %v1134 = vpop.f32.mrf.mxu0
        %v1135 = vadd.f32 0.0, %v1134
        %v1136 = vpop.f32.mrf.mxu0
        %v1137 = vpop.f32.mrf.mxu0
        %v1138 = vadd.f32 0.0, %v1137
        %v1139 = vpop.f32.mrf.mxu0
        %1140 = vmatprep.mubr.bf16.mxu0 0
        %1141 = vmatmul.mubr.bf16.gmra.mxu0 %v933
        %v1142 = vpop.f32.mrf.mxu0
        %v1143 = vadd.f32 0.0, %v1142
        %v1144 = vpop.f32.mrf.mxu0
        %v1145 = vpop.f32.mrf.mxu0
        %v1146 = vadd.f32 0.0, %v1145
        %v1147 = vpop.f32.mrf.mxu0
        %1148 = vmatprep.mubr.bf16.mxu0 0
        %1149 = vmatmul.mubr.bf16.gmra.mxu0 %v936
        %v1150 = vpop.f32.mrf.mxu0
        %v1151 = vadd.f32 0.0, %v1150
        %v1152 = vpop.f32.mrf.mxu0
        %v1153 = vpop.f32.mrf.mxu0
        %v1154 = vadd.f32 0.0, %v1153
        %v1155 = vpop.f32.mrf.mxu0
        %1156 = vmatprep.mubr.bf16.mxu0 0
        %1157 = vmatmul.mubr.bf16.gmra.mxu0 %v939
        %v1158 = vpop.f32.mrf.mxu0
        %v1159 = vadd.f32 0.0, %v1158
        %v1160 = vpop.f32.mrf.mxu0
        %v1161 = vpop.f32.mrf.mxu0
        %v1162 = vadd.f32 0.0, %v1161
        %v1163 = vpop.f32.mrf.mxu0
        %1164 = vmatprep.mubr.bf16.mxu0 0
        %1165 = vmatmul.mubr.bf16.gmra.mxu0 %v942
        %v1166 = vpop.f32.mrf.mxu0
        %v1167 = vadd.f32 0.0, %v1166
        %v1168 = vpop.f32.mrf.mxu0
        %v1169 = vpop.f32.mrf.mxu0
        %v1170 = vadd.f32 0.0, %v1169
        %v1171 = vpop.f32.mrf.mxu0
        %1172 = vmatprep.mubr.bf16.mxu0 0
        %1173 = vmatmul.mubr.bf16.gmra.mxu0 %v945
        %v1174 = vpop.f32.mrf.mxu0
        %v1175 = vadd.f32 0.0, %v1174
        %v1176 = vpop.f32.mrf.mxu0
        %v1177 = vpop.f32.mrf.mxu0
        %v1178 = vadd.f32 0.0, %v1177
        %v1179 = vpop.f32.mrf.mxu0
        %1180 = vmatprep.mubr.bf16.mxu0 0
        %1181 = vmatmul.mubr.bf16.gmra.mxu0 %v948
        %v1182 = vpop.f32.mrf.mxu0
        %v1183 = vadd.f32 0.0, %v1182
        %v1184 = vpop.f32.mrf.mxu0
        %v1185 = vpop.f32.mrf.mxu0
        %v1186 = vadd.f32 0.0, %v1185
        %v1187 = vpop.f32.mrf.mxu0
        %1188 = vmatprep.mubr.bf16.mxu0 0
        %1189 = vmatmul.mubr.bf16.gmra.mxu0 %v951
        %v1190 = vpop.f32.mrf.mxu0
        %v1191 = vadd.f32 0.0, %v1190
        %v1192 = vpop.f32.mrf.mxu0
        %v1193 = vpop.f32.mrf.mxu0
        %v1194 = vadd.f32 0.0, %v1193
        %v1195 = vpop.f32.mrf.mxu0
        %1196 = vmatprep.mubr.bf16.mxu0 0
        %1197 = vmatmul.mubr.bf16.gmra.mxu0 %v954
        %v1198 = vpop.f32.mrf.mxu0
        %v1199 = vadd.f32 0.0, %v1198
        %v1200 = vpop.f32.mrf.mxu0
        %v1201 = vpop.f32.mrf.mxu0
        %v1202 = vadd.f32 0.0, %v1201
        %v1203 = vpop.f32.mrf.mxu0
        %1204 = vmatprep.mubr.bf16.mxu0 0
        %1205 = vmatmul.mubr.bf16.gmra.mxu0 %v957
        %v1206 = vpop.f32.mrf.mxu0
        %v1207 = vadd.f32 0.0, %v1206
        %v1208 = vpop.f32.mrf.mxu0
        %v1209 = vpop.f32.mrf.mxu0
        %v1210 = vadd.f32 0.0, %v1209
        %v1211 = vpop.f32.mrf.mxu0
        %1212 = vmatprep.mubr.bf16.mxu0 0
        %1213 = vmatmul.mubr.bf16.gmra.mxu0 %v960
        %v1214 = vpop.f32.mrf.mxu0
        %v1215 = vadd.f32 0.0, %v1214
        %v1216 = vpop.f32.mrf.mxu0
        %v1217 = vpop.f32.mrf.mxu0
        %v1218 = vadd.f32 0.0, %v1217
        %v1219 = vpop.f32.mrf.mxu0
        %1220 = vmatprep.mubr.bf16.mxu0 0
        %1221 = vmatmul.mubr.bf16.gmra.mxu0 %v963
        %v1222 = vpop.f32.mrf.mxu0
        %v1223 = vadd.f32 0.0, %v1222
        %v1224 = vpop.f32.mrf.mxu0
        %v1225 = vpop.f32.mrf.mxu0
        %v1226 = vadd.f32 0.0, %v1225
        %v1227 = vpop.f32.mrf.mxu0
        %1228 = vmatprep.mubr.bf16.mxu0 0
        %1229 = vmatmul.mubr.bf16.gmra.mxu0 %v966
        %v1230 = vpop.f32.mrf.mxu0
        %v1231 = vadd.f32 0.0, %v1230
        %v1232 = vpop.f32.mrf.mxu0
        %v1233 = vpop.f32.mrf.mxu0
        %v1234 = vadd.f32 0.0, %v1233
        %v1235 = vpop.f32.mrf.mxu0
        %1236 = vmatprep.mubr.bf16.mxu0 0
        %1237 = vmatmul.mubr.bf16.gmra.mxu0 %v969
        %v1238 = vpop.f32.mrf.mxu0
        %v1239 = vadd.f32 0.0, %v1238
        %v1240 = vpop.f32.mrf.mxu0
        %v1241 = vpop.f32.mrf.mxu0
        %v1242 = vadd.f32 0.0, %v1241
        %v1243 = vpop.f32.mrf.mxu0
        %1244 = vmatprep.mubr.bf16.mxu0 0
        %1245 = vmatmul.mubr.bf16.gmra.mxu0 %v972
        %v1246 = vpop.f32.mrf.mxu0
        %v1247 = vadd.f32 0.0, %v1246
        %v1248 = vpop.f32.mrf.mxu0
        %v1249 = vpop.f32.mrf.mxu0
        %v1250 = vadd.f32 0.0, %v1249
        %v1251 = vpop.f32.mrf.mxu0
        %1252 = vmatprep.mubr.bf16.mxu0 0
        %1253 = vmatmul.mubr.bf16.gmra.mxu0 %v975
        %v1254 = vpop.f32.mrf.mxu0
        %v1255 = vadd.f32 0.0, %v1254
        %v1256 = vpop.f32.mrf.mxu0
        %v1257 = vpop.f32.mrf.mxu0
        %v1258 = vadd.f32 0.0, %v1257
        %v1259 = vpop.f32.mrf.mxu0
        %1260 = vmatprep.mubr.bf16.mxu0 0
        %1261 = vmatmul.mubr.bf16.gmra.mxu0 %v978
        %v1262 = vpop.f32.mrf.mxu0
        %v1263 = vadd.f32 0.0, %v1262
        %v1264 = vpop.f32.mrf.mxu0
        %v1265 = vpop.f32.mrf.mxu0
        %v1266 = vadd.f32 0.0, %v1265
        %v1267 = vpop.f32.mrf.mxu0
        %1268 = vdwg.mxu0
        %v1271 = vunpack.c.l.b16 %v610
        %v1272 = vunpack.c.l.b16 %v611
        %v1273 = vpack.c.b16 %v1272, %v1271
        %v1275 = vsel %vm883, %v578, 0
        %v1277 = vsel %vm883, %v579, 0
        %v1279 = vsel %vm883, %v580, 0
        %v1281 = vsel %vm883, %v581, 0
        %v1283 = vsel %vm883, %v582, 0
        %v1285 = vsel %vm883, %v583, 0
        %v1287 = vsel %vm883, %v584, 0
        %v1289 = vsel %vm883, %v585, 0
        %v1291 = vsel %vm883, %v586, 0
        %v1293 = vsel %vm883, %v587, 0
        %v1295 = vsel %vm883, %v588, 0
        %v1297 = vsel %vm883, %v589, 0
        %v1299 = vsel %vm883, %v590, 0
        %v1301 = vsel %vm883, %v591, 0
        %v1303 = vsel %vm883, %v592, 0
        %v1305 = vsel %vm883, %v593, 0
        %v1307 = vsel %vm883, %v594, 0
        %v1309 = vsel %vm883, %v595, 0
        %v1311 = vsel %vm883, %v596, 0
        %v1313 = vsel %vm883, %v597, 0
        %v1315 = vsel %vm883, %v598, 0
        %v1317 = vsel %vm883, %v599, 0
        %v1319 = vsel %vm883, %v600, 0
        %v1321 = vsel %vm883, %v601, 0
        %v1323 = vsel %vm883, %v602, 0
        %v1325 = vsel %vm883, %v603, 0
        %v1327 = vsel %vm883, %v604, 0
        %v1329 = vsel %vm883, %v605, 0
        %v1331 = vsel %vm883, %v606, 0
        %v1333 = vsel %vm883, %v607, 0
        %v1335 = vsel %vm883, %v608, 0
        %v1337 = vsel %vm883, %v609, 0
        %1339 = vmatprep.subr.bf16.mxu0 0
        %1340 = vmatpush1.bf16.msra.mxu0 0
        %1341 = vmatprep.subr.bf16.mxu0 0
        %1342 = vmatpush1.bf16.msra.mxu0 0
        %1343 = vmatprep.subr.bf16.mxu0 0
        %1344 = vmatpush1.bf16.msra.mxu0 0
        %1345 = vmatprep.subr.bf16.mxu0 0
        %1346 = vmatpush1.bf16.msra.mxu0 0
        %1347 = vmatprep.subr.bf16.mxu0 0
        %1348 = vmatpush1.bf16.msra.mxu0 0
        %1349 = vmatprep.subr.bf16.mxu0 0
        %1350 = vmatpush1.bf16.msra.mxu0 0
        %1351 = vmatprep.subr.bf16.mxu0 0
        %1352 = vmatpush1.bf16.msra.mxu0 0
        %1353 = vmatprep.subr.bf16.mxu0 0
        %1354 = vmatpush1.bf16.msra.mxu0 %v1273
        %1355 = vmatprep.subr.bf16.mxu0 0
        %1356 = vmatpush2.bf16.msra.mxu0 0
        %1357 = vmatprep.subr.bf16.mxu0 0
        %1358 = vmatpush2.bf16.msra.mxu0 0
        %1359 = vmatprep.subr.bf16.mxu0 0
        %1360 = vmatpush2.bf16.msra.mxu0 0
        %1361 = vmatprep.subr.bf16.mxu0 0
        %1362 = vmatpush2.bf16.msra.mxu0 0
        %1363 = vmatprep.subr.bf16.mxu0 0
        %1364 = vmatpush2.bf16.msra.mxu0 0
        %1365 = vmatprep.subr.bf16.mxu0 0
        %1366 = vmatpush2.bf16.msra.mxu0 0
        %1367 = vmatprep.subr.bf16.mxu0 0
        %1368 = vmatpush2.bf16.msra.mxu0 0
        %1369 = vmatprep.subr.bf16.mxu0 0
        %1370 = vmatpush2.bf16.msra.mxu0 0
        %1371 = vmatprep.mubr.bf16.mxu0 0
        %1372 = vmatmul.mubr.bf16.gmra.mxu0 %v1275
        %v1373 = vpop.f32.mrf.mxu0
        %v1374 = vadd.f32 %v1015, %v1373
        %v1375 = vpop.f32.mrf.mxu0
        %v1376 = vpop.f32.mrf.mxu0
        %v1377 = vadd.f32 %v1018, %v1376
        %v1378 = vpop.f32.mrf.mxu0
        %1379 = vmatprep.mubr.bf16.mxu0 0
        %1380 = vmatmul.mubr.bf16.gmra.mxu0 %v1277
        %v1381 = vpop.f32.mrf.mxu0
        %v1382 = vadd.f32 %v1023, %v1381
        %v1383 = vpop.f32.mrf.mxu0
        %v1384 = vpop.f32.mrf.mxu0
        %v1385 = vadd.f32 %v1026, %v1384
        %v1386 = vpop.f32.mrf.mxu0
        %1387 = vmatprep.mubr.bf16.mxu0 0
        %1388 = vmatmul.mubr.bf16.gmra.mxu0 %v1279
        %v1389 = vpop.f32.mrf.mxu0
        %v1390 = vadd.f32 %v1031, %v1389
        %v1391 = vpop.f32.mrf.mxu0
        %v1392 = vpop.f32.mrf.mxu0
        %v1393 = vadd.f32 %v1034, %v1392
        %v1394 = vpop.f32.mrf.mxu0
        %1395 = vmatprep.mubr.bf16.mxu0 0
        %1396 = vmatmul.mubr.bf16.gmra.mxu0 %v1281
        %v1397 = vpop.f32.mrf.mxu0
        %v1398 = vadd.f32 %v1039, %v1397
        %v1399 = vpop.f32.mrf.mxu0
        %v1400 = vpop.f32.mrf.mxu0
        %v1401 = vadd.f32 %v1042, %v1400
        %v1402 = vpop.f32.mrf.mxu0
        %1403 = vmatprep.mubr.bf16.mxu0 0
        %1404 = vmatmul.mubr.bf16.gmra.mxu0 %v1283
        %v1405 = vpop.f32.mrf.mxu0
        %v1406 = vadd.f32 %v1047, %v1405
        %v1407 = vpop.f32.mrf.mxu0
        %v1408 = vpop.f32.mrf.mxu0
        %v1409 = vadd.f32 %v1050, %v1408
        %v1410 = vpop.f32.mrf.mxu0
        %1411 = vmatprep.mubr.bf16.mxu0 0
        %1412 = vmatmul.mubr.bf16.gmra.mxu0 %v1285
        %v1413 = vpop.f32.mrf.mxu0
        %v1414 = vadd.f32 %v1055, %v1413
        %v1415 = vpop.f32.mrf.mxu0
        %v1416 = vpop.f32.mrf.mxu0
        %v1417 = vadd.f32 %v1058, %v1416
        %v1418 = vpop.f32.mrf.mxu0
        %1419 = vmatprep.mubr.bf16.mxu0 0
        %1420 = vmatmul.mubr.bf16.gmra.mxu0 %v1287
        %v1421 = vpop.f32.mrf.mxu0
        %v1422 = vadd.f32 %v1063, %v1421
        %v1423 = vpop.f32.mrf.mxu0
        %v1424 = vpop.f32.mrf.mxu0
        %v1425 = vadd.f32 %v1066, %v1424
        %v1426 = vpop.f32.mrf.mxu0
        %1427 = vmatprep.mubr.bf16.mxu0 0
        %1428 = vmatmul.mubr.bf16.gmra.mxu0 %v1289
        %v1429 = vpop.f32.mrf.mxu0
        %v1430 = vadd.f32 %v1071, %v1429
        %v1431 = vpop.f32.mrf.mxu0
        %v1432 = vpop.f32.mrf.mxu0
        %v1433 = vadd.f32 %v1074, %v1432
        %v1434 = vpop.f32.mrf.mxu0
        %1435 = vmatprep.mubr.bf16.mxu0 0
        %1436 = vmatmul.mubr.bf16.gmra.mxu0 %v1291
        %v1437 = vpop.f32.mrf.mxu0
        %v1438 = vadd.f32 %v1079, %v1437
        %v1439 = vpop.f32.mrf.mxu0
        %v1440 = vpop.f32.mrf.mxu0
        %v1441 = vadd.f32 %v1082, %v1440
        %v1442 = vpop.f32.mrf.mxu0
        %1443 = vmatprep.mubr.bf16.mxu0 0
        %1444 = vmatmul.mubr.bf16.gmra.mxu0 %v1293
        %v1445 = vpop.f32.mrf.mxu0
        %v1446 = vadd.f32 %v1087, %v1445
        %v1447 = vpop.f32.mrf.mxu0
        %v1448 = vpop.f32.mrf.mxu0
        %v1449 = vadd.f32 %v1090, %v1448
        %v1450 = vpop.f32.mrf.mxu0
        %1451 = vmatprep.mubr.bf16.mxu0 0
        %1452 = vmatmul.mubr.bf16.gmra.mxu0 %v1295
        %v1453 = vpop.f32.mrf.mxu0
        %v1454 = vadd.f32 %v1095, %v1453
        %v1455 = vpop.f32.mrf.mxu0
        %v1456 = vpop.f32.mrf.mxu0
        %v1457 = vadd.f32 %v1098, %v1456
        %v1458 = vpop.f32.mrf.mxu0
        %1459 = vmatprep.mubr.bf16.mxu0 0
        %1460 = vmatmul.mubr.bf16.gmra.mxu0 %v1297
        %v1461 = vpop.f32.mrf.mxu0
        %v1462 = vadd.f32 %v1103, %v1461
        %v1463 = vpop.f32.mrf.mxu0
        %v1464 = vpop.f32.mrf.mxu0
        %v1465 = vadd.f32 %v1106, %v1464
        %v1466 = vpop.f32.mrf.mxu0
        %1467 = vmatprep.mubr.bf16.mxu0 0
        %1468 = vmatmul.mubr.bf16.gmra.mxu0 %v1299
        %v1469 = vpop.f32.mrf.mxu0
        %v1470 = vadd.f32 %v1111, %v1469
        %v1471 = vpop.f32.mrf.mxu0
        %v1472 = vpop.f32.mrf.mxu0
        %v1473 = vadd.f32 %v1114, %v1472
        %v1474 = vpop.f32.mrf.mxu0
        %1475 = vmatprep.mubr.bf16.mxu0 0
        %1476 = vmatmul.mubr.bf16.gmra.mxu0 %v1301
        %v1477 = vpop.f32.mrf.mxu0
        %v1478 = vadd.f32 %v1119, %v1477
        %v1479 = vpop.f32.mrf.mxu0
        %v1480 = vpop.f32.mrf.mxu0
        %v1481 = vadd.f32 %v1122, %v1480
        %v1482 = vpop.f32.mrf.mxu0
        %1483 = vmatprep.mubr.bf16.mxu0 0
        %1484 = vmatmul.mubr.bf16.gmra.mxu0 %v1303
        %v1485 = vpop.f32.mrf.mxu0
        %v1486 = vadd.f32 %v1127, %v1485
        %v1487 = vpop.f32.mrf.mxu0
        %v1488 = vpop.f32.mrf.mxu0
        %v1489 = vadd.f32 %v1130, %v1488
        %v1490 = vpop.f32.mrf.mxu0
        %1491 = vmatprep.mubr.bf16.mxu0 0
        %1492 = vmatmul.mubr.bf16.gmra.mxu0 %v1305
        %v1493 = vpop.f32.mrf.mxu0
        %v1494 = vadd.f32 %v1135, %v1493
        %v1495 = vpop.f32.mrf.mxu0
        %v1496 = vpop.f32.mrf.mxu0
        %v1497 = vadd.f32 %v1138, %v1496
        %v1498 = vpop.f32.mrf.mxu0
        %1499 = vmatprep.mubr.bf16.mxu0 0
        %1500 = vmatmul.mubr.bf16.gmra.mxu0 %v1307
        %v1501 = vpop.f32.mrf.mxu0
        %v1502 = vadd.f32 %v1143, %v1501
        %v1503 = vpop.f32.mrf.mxu0
        %v1504 = vpop.f32.mrf.mxu0
        %v1505 = vadd.f32 %v1146, %v1504
        %v1506 = vpop.f32.mrf.mxu0
        %1507 = vmatprep.mubr.bf16.mxu0 0
        %1508 = vmatmul.mubr.bf16.gmra.mxu0 %v1309
        %v1509 = vpop.f32.mrf.mxu0
        %v1510 = vadd.f32 %v1151, %v1509
        %v1511 = vpop.f32.mrf.mxu0
        %v1512 = vpop.f32.mrf.mxu0
        %v1513 = vadd.f32 %v1154, %v1512
        %v1514 = vpop.f32.mrf.mxu0
        %1515 = vmatprep.mubr.bf16.mxu0 0
        %1516 = vmatmul.mubr.bf16.gmra.mxu0 %v1311
        %v1517 = vpop.f32.mrf.mxu0
        %v1518 = vadd.f32 %v1159, %v1517
        %v1519 = vpop.f32.mrf.mxu0
        %v1520 = vpop.f32.mrf.mxu0
        %v1521 = vadd.f32 %v1162, %v1520
        %v1522 = vpop.f32.mrf.mxu0
        %1523 = vmatprep.mubr.bf16.mxu0 0
        %1524 = vmatmul.mubr.bf16.gmra.mxu0 %v1313
        %v1525 = vpop.f32.mrf.mxu0
        %v1526 = vadd.f32 %v1167, %v1525
        %v1527 = vpop.f32.mrf.mxu0
        %v1528 = vpop.f32.mrf.mxu0
        %v1529 = vadd.f32 %v1170, %v1528
        %v1530 = vpop.f32.mrf.mxu0
        %1531 = vmatprep.mubr.bf16.mxu0 0
        %1532 = vmatmul.mubr.bf16.gmra.mxu0 %v1315
        %v1533 = vpop.f32.mrf.mxu0
        %v1534 = vadd.f32 %v1175, %v1533
        %v1535 = vpop.f32.mrf.mxu0
        %v1536 = vpop.f32.mrf.mxu0
        %v1537 = vadd.f32 %v1178, %v1536
        %v1538 = vpop.f32.mrf.mxu0
        %1539 = vmatprep.mubr.bf16.mxu0 0
        %1540 = vmatmul.mubr.bf16.gmra.mxu0 %v1317
        %v1541 = vpop.f32.mrf.mxu0
        %v1542 = vadd.f32 %v1183, %v1541
        %v1543 = vpop.f32.mrf.mxu0
        %v1544 = vpop.f32.mrf.mxu0
        %v1545 = vadd.f32 %v1186, %v1544
        %v1546 = vpop.f32.mrf.mxu0
        %1547 = vmatprep.mubr.bf16.mxu0 0
        %1548 = vmatmul.mubr.bf16.gmra.mxu0 %v1319
        %v1549 = vpop.f32.mrf.mxu0
        %v1550 = vadd.f32 %v1191, %v1549
        %v1551 = vpop.f32.mrf.mxu0
        %v1552 = vpop.f32.mrf.mxu0
        %v1553 = vadd.f32 %v1194, %v1552
        %v1554 = vpop.f32.mrf.mxu0
        %1555 = vmatprep.mubr.bf16.mxu0 0
        %1556 = vmatmul.mubr.bf16.gmra.mxu0 %v1321
        %v1557 = vpop.f32.mrf.mxu0
        %v1558 = vadd.f32 %v1199, %v1557
        %v1559 = vpop.f32.mrf.mxu0
        %v1560 = vpop.f32.mrf.mxu0
        %v1561 = vadd.f32 %v1202, %v1560
        %v1562 = vpop.f32.mrf.mxu0
        %1563 = vmatprep.mubr.bf16.mxu0 0
        %1564 = vmatmul.mubr.bf16.gmra.mxu0 %v1323
        %v1565 = vpop.f32.mrf.mxu0
        %v1566 = vadd.f32 %v1207, %v1565
        %v1567 = vpop.f32.mrf.mxu0
        %v1568 = vpop.f32.mrf.mxu0
        %v1569 = vadd.f32 %v1210, %v1568
        %v1570 = vpop.f32.mrf.mxu0
        %1571 = vmatprep.mubr.bf16.mxu0 0
        %1572 = vmatmul.mubr.bf16.gmra.mxu0 %v1325
        %v1573 = vpop.f32.mrf.mxu0
        %v1574 = vadd.f32 %v1215, %v1573
        %v1575 = vpop.f32.mrf.mxu0
        %v1576 = vpop.f32.mrf.mxu0
        %v1577 = vadd.f32 %v1218, %v1576
        %v1578 = vpop.f32.mrf.mxu0
        %1579 = vmatprep.mubr.bf16.mxu0 0
        %1580 = vmatmul.mubr.bf16.gmra.mxu0 %v1327
        %v1581 = vpop.f32.mrf.mxu0
        %v1582 = vadd.f32 %v1223, %v1581
        %v1583 = vpop.f32.mrf.mxu0
        %v1584 = vpop.f32.mrf.mxu0
        %v1585 = vadd.f32 %v1226, %v1584
        %v1586 = vpop.f32.mrf.mxu0
        %1587 = vmatprep.mubr.bf16.mxu0 0
        %1588 = vmatmul.mubr.bf16.gmra.mxu0 %v1329
        %v1589 = vpop.f32.mrf.mxu0
        %v1590 = vadd.f32 %v1231, %v1589
        %v1591 = vpop.f32.mrf.mxu0
        %v1592 = vpop.f32.mrf.mxu0
        %v1593 = vadd.f32 %v1234, %v1592
        %v1594 = vpop.f32.mrf.mxu0
        %1595 = vmatprep.mubr.bf16.mxu0 0
        %1596 = vmatmul.mubr.bf16.gmra.mxu0 %v1331
        %v1597 = vpop.f32.mrf.mxu0
        %v1598 = vadd.f32 %v1239, %v1597
        %v1599 = vpop.f32.mrf.mxu0
        %v1600 = vpop.f32.mrf.mxu0
        %v1601 = vadd.f32 %v1242, %v1600
        %v1602 = vpop.f32.mrf.mxu0
        %1603 = vmatprep.mubr.bf16.mxu0 0
        %1604 = vmatmul.mubr.bf16.gmra.mxu0 %v1333
        %v1605 = vpop.f32.mrf.mxu0
        %v1606 = vadd.f32 %v1247, %v1605
        %v1607 = vpop.f32.mrf.mxu0
        %v1608 = vpop.f32.mrf.mxu0
        %v1609 = vadd.f32 %v1250, %v1608
        %v1610 = vpop.f32.mrf.mxu0
        %1611 = vmatprep.mubr.bf16.mxu0 0
        %1612 = vmatmul.mubr.bf16.gmra.mxu0 %v1335
        %v1613 = vpop.f32.mrf.mxu0
        %v1614 = vadd.f32 %v1255, %v1613
        %v1615 = vpop.f32.mrf.mxu0
        %v1616 = vpop.f32.mrf.mxu0
        %v1617 = vadd.f32 %v1258, %v1616
        %v1618 = vpop.f32.mrf.mxu0
        %1619 = vmatprep.mubr.bf16.mxu0 0
        %1620 = vmatmul.mubr.bf16.gmra.mxu0 %v1337
        %v1621 = vpop.f32.mrf.mxu0
        %v1622 = vadd.f32 %v1263, %v1621
        %v1623 = vpop.f32.mrf.mxu0
        %v1624 = vpop.f32.mrf.mxu0
        %v1625 = vadd.f32 %v1266, %v1624
        %v1626 = vpop.f32.mrf.mxu0
        %1627 = vdwg.mxu0
        %s1628 = scalar_lea.vmem %s2, 16
        %v1629 = vld [vmem:[%s1628] sm:$0xf]
        %v1630 = vld [vmem:[%s1628 + $0x4] sm:$0xf]
        %vm1664 = vcmask 1046528
        %v1665 = vrot.slane %v578, 1
        %v1666 = vrot.slane %v579, 1
        %v1667 = vsel %vm1664, %v1665, %v1666
        %v1668 = vrot.slane %v580, 1
        %v1669 = vsel %vm1664, %v1666, %v1668
        %v1670 = vrot.slane %v581, 1
        %v1671 = vsel %vm1664, %v1668, %v1670
        %v1672 = vrot.slane %v582, 1
        %v1673 = vsel %vm1664, %v1670, %v1672
        %v1674 = vrot.slane %v583, 1
        %v1675 = vsel %vm1664, %v1672, %v1674
        %v1676 = vrot.slane %v584, 1
        %v1677 = vsel %vm1664, %v1674, %v1676
        %v1678 = vrot.slane %v585, 1
        %v1679 = vsel %vm1664, %v1676, %v1678
        %v1680 = vrot.slane %v586, 1
        %v1681 = vsel %vm1664, %v1678, %v1680
        %v1682 = vrot.slane %v587, 1
        %v1683 = vsel %vm1664, %v1680, %v1682
        %v1684 = vrot.slane %v588, 1
        %v1685 = vsel %vm1664, %v1682, %v1684
        %v1686 = vrot.slane %v589, 1
        %v1687 = vsel %vm1664, %v1684, %v1686
        %v1688 = vrot.slane %v590, 1
        %v1689 = vsel %vm1664, %v1686, %v1688
        %v1690 = vrot.slane %v591, 1
        %v1691 = vsel %vm1664, %v1688, %v1690
        %v1692 = vrot.slane %v592, 1
        %v1693 = vsel %vm1664, %v1690, %v1692
        %v1694 = vrot.slane %v593, 1
        %v1695 = vsel %vm1664, %v1692, %v1694
        %v1696 = vrot.slane %v594, 1
        %v1697 = vsel %vm1664, %v1694, %v1696
        %v1698 = vrot.slane %v595, 1
        %v1699 = vsel %vm1664, %v1696, %v1698
        %v1700 = vrot.slane %v596, 1
        %v1701 = vsel %vm1664, %v1698, %v1700
        %v1702 = vrot.slane %v597, 1
        %v1703 = vsel %vm1664, %v1700, %v1702
        %v1704 = vrot.slane %v598, 1
        %v1705 = vsel %vm1664, %v1702, %v1704
        %v1706 = vrot.slane %v599, 1
        %v1707 = vsel %vm1664, %v1704, %v1706
        %v1708 = vrot.slane %v600, 1
        %v1709 = vsel %vm1664, %v1706, %v1708
        %v1710 = vrot.slane %v601, 1
        %v1711 = vsel %vm1664, %v1708, %v1710
        %v1712 = vrot.slane %v602, 1
        %v1713 = vsel %vm1664, %v1710, %v1712
        %v1714 = vrot.slane %v603, 1
        %v1715 = vsel %vm1664, %v1712, %v1714
        %v1716 = vrot.slane %v604, 1
        %v1717 = vsel %vm1664, %v1714, %v1716
        %v1718 = vrot.slane %v605, 1
        %v1719 = vsel %vm1664, %v1716, %v1718
        %v1720 = vrot.slane %v606, 1
        %v1721 = vsel %vm1664, %v1718, %v1720
        %v1722 = vrot.slane %v607, 1
        %v1723 = vsel %vm1664, %v1720, %v1722
        %v1724 = vrot.slane %v608, 1
        %v1725 = vsel %vm1664, %v1722, %v1724
        %v1726 = vrot.slane %v609, 1
        %v1727 = vsel %vm1664, %v1724, %v1726
        %v1728 = vrot.slane %v612, 1
        %v1729 = vsel %vm1664, %v1726, %v1728
        %v1732 = vunpack.c.l.b16 %v1629
        %v1733 = vunpack.c.l.b16 %v1630
        %v1734 = vpack.c.b16 %v1733, %v1732
        %v1737 = vsel %vm883, %v1667, 0
        %v1740 = vsel %vm883, %v1669, 0
        %v1743 = vsel %vm883, %v1671, 0
        %v1746 = vsel %vm883, %v1673, 0
        %v1749 = vsel %vm883, %v1675, 0
        %v1752 = vsel %vm883, %v1677, 0
        %v1755 = vsel %vm883, %v1679, 0
        %v1758 = vsel %vm883, %v1681, 0
        %v1761 = vsel %vm883, %v1683, 0
        %v1764 = vsel %vm883, %v1685, 0
        %v1767 = vsel %vm883, %v1687, 0
        %v1770 = vsel %vm883, %v1689, 0
        %v1773 = vsel %vm883, %v1691, 0
        %v1776 = vsel %vm883, %v1693, 0
        %v1779 = vsel %vm883, %v1695, 0
        %v1782 = vsel %vm883, %v1697, 0
        %v1785 = vsel %vm883, %v1699, 0
        %v1788 = vsel %vm883, %v1701, 0
        %v1791 = vsel %vm883, %v1703, 0
        %v1794 = vsel %vm883, %v1705, 0
        %v1797 = vsel %vm883, %v1707, 0
        %v1800 = vsel %vm883, %v1709, 0
        %v1803 = vsel %vm883, %v1711, 0
        %v1806 = vsel %vm883, %v1713, 0
        %v1809 = vsel %vm883, %v1715, 0
        %v1812 = vsel %vm883, %v1717, 0
        %v1815 = vsel %vm883, %v1719, 0
        %v1818 = vsel %vm883, %v1721, 0
        %v1821 = vsel %vm883, %v1723, 0
        %v1824 = vsel %vm883, %v1725, 0
        %v1827 = vsel %vm883, %v1727, 0
        %v1830 = vsel %vm883, %v1729, 0
        %1832 = vmatprep.subr.bf16.mxu0 0
        %1833 = vmatpush1.bf16.msra.mxu0 0
        %1834 = vmatprep.subr.bf16.mxu0 0
        %1835 = vmatpush1.bf16.msra.mxu0 0
        %1836 = vmatprep.subr.bf16.mxu0 0
        %1837 = vmatpush1.bf16.msra.mxu0 0
        %1838 = vmatprep.subr.bf16.mxu0 0
        %1839 = vmatpush1.bf16.msra.mxu0 0
        %1840 = vmatprep.subr.bf16.mxu0 0
        %1841 = vmatpush1.bf16.msra.mxu0 0
        %1842 = vmatprep.subr.bf16.mxu0 0
        %1843 = vmatpush1.bf16.msra.mxu0 0
        %1844 = vmatprep.subr.bf16.mxu0 0
        %1845 = vmatpush1.bf16.msra.mxu0 0
        %1846 = vmatprep.subr.bf16.mxu0 0
        %1847 = vmatpush1.bf16.msra.mxu0 %v1734
        %1848 = vmatprep.subr.bf16.mxu0 0
        %1849 = vmatpush2.bf16.msra.mxu0 0
        %1850 = vmatprep.subr.bf16.mxu0 0
        %1851 = vmatpush2.bf16.msra.mxu0 0
        %1852 = vmatprep.subr.bf16.mxu0 0
        %1853 = vmatpush2.bf16.msra.mxu0 0
        %1854 = vmatprep.subr.bf16.mxu0 0
        %1855 = vmatpush2.bf16.msra.mxu0 0
        %1856 = vmatprep.subr.bf16.mxu0 0
        %1857 = vmatpush2.bf16.msra.mxu0 0
        %1858 = vmatprep.subr.bf16.mxu0 0
        %1859 = vmatpush2.bf16.msra.mxu0 0
        %1860 = vmatprep.subr.bf16.mxu0 0
        %1861 = vmatpush2.bf16.msra.mxu0 0
        %1862 = vmatprep.subr.bf16.mxu0 0
        %1863 = vmatpush2.bf16.msra.mxu0 0
        %1864 = vmatprep.mubr.bf16.mxu0 0
        %1865 = vmatmul.mubr.bf16.gmra.mxu0 %v1737
        %v1866 = vpop.f32.mrf.mxu0
        %v1867 = vadd.f32 0.0, %v1866
        %v1868 = vpop.f32.mrf.mxu0
        %v1869 = vpop.f32.mrf.mxu0
        %v1870 = vadd.f32 0.0, %v1869
        %v1871 = vpop.f32.mrf.mxu0
        %1872 = vmatprep.mubr.bf16.mxu0 0
        %1873 = vmatmul.mubr.bf16.gmra.mxu0 %v1740
        %v1874 = vpop.f32.mrf.mxu0
        %v1875 = vadd.f32 0.0, %v1874
        %v1876 = vpop.f32.mrf.mxu0
        %v1877 = vpop.f32.mrf.mxu0
        %v1878 = vadd.f32 0.0, %v1877
        %v1879 = vpop.f32.mrf.mxu0
        %1880 = vmatprep.mubr.bf16.mxu0 0
        %1881 = vmatmul.mubr.bf16.gmra.mxu0 %v1743
        %v1882 = vpop.f32.mrf.mxu0
        %v1883 = vadd.f32 0.0, %v1882
        %v1884 = vpop.f32.mrf.mxu0
        %v1885 = vpop.f32.mrf.mxu0
        %v1886 = vadd.f32 0.0, %v1885
        %v1887 = vpop.f32.mrf.mxu0
        %1888 = vmatprep.mubr.bf16.mxu0 0
        %1889 = vmatmul.mubr.bf16.gmra.mxu0 %v1746
        %v1890 = vpop.f32.mrf.mxu0
        %v1891 = vadd.f32 0.0, %v1890
        %v1892 = vpop.f32.mrf.mxu0
        %v1893 = vpop.f32.mrf.mxu0
        %v1894 = vadd.f32 0.0, %v1893
        %v1895 = vpop.f32.mrf.mxu0
        %1896 = vmatprep.mubr.bf16.mxu0 0
        %1897 = vmatmul.mubr.bf16.gmra.mxu0 %v1749
        %v1898 = vpop.f32.mrf.mxu0
        %v1899 = vadd.f32 0.0, %v1898
        %v1900 = vpop.f32.mrf.mxu0
        %v1901 = vpop.f32.mrf.mxu0
        %v1902 = vadd.f32 0.0, %v1901
        %v1903 = vpop.f32.mrf.mxu0
        %1904 = vmatprep.mubr.bf16.mxu0 0
        %1905 = vmatmul.mubr.bf16.gmra.mxu0 %v1752
        %v1906 = vpop.f32.mrf.mxu0
        %v1907 = vadd.f32 0.0, %v1906
        %v1908 = vpop.f32.mrf.mxu0
        %v1909 = vpop.f32.mrf.mxu0
        %v1910 = vadd.f32 0.0, %v1909
        %v1911 = vpop.f32.mrf.mxu0
        %1912 = vmatprep.mubr.bf16.mxu0 0
        %1913 = vmatmul.mubr.bf16.gmra.mxu0 %v1755
        %v1914 = vpop.f32.mrf.mxu0
        %v1915 = vadd.f32 0.0, %v1914
        %v1916 = vpop.f32.mrf.mxu0
        %v1917 = vpop.f32.mrf.mxu0
        %v1918 = vadd.f32 0.0, %v1917
        %v1919 = vpop.f32.mrf.mxu0
        %1920 = vmatprep.mubr.bf16.mxu0 0
        %1921 = vmatmul.mubr.bf16.gmra.mxu0 %v1758
        %v1922 = vpop.f32.mrf.mxu0
        %v1923 = vadd.f32 0.0, %v1922
        %v1924 = vpop.f32.mrf.mxu0
        %v1925 = vpop.f32.mrf.mxu0
        %v1926 = vadd.f32 0.0, %v1925
        %v1927 = vpop.f32.mrf.mxu0
        %1928 = vmatprep.mubr.bf16.mxu0 0
        %1929 = vmatmul.mubr.bf16.gmra.mxu0 %v1761
        %v1930 = vpop.f32.mrf.mxu0
        %v1931 = vadd.f32 0.0, %v1930
        %v1932 = vpop.f32.mrf.mxu0
        %v1933 = vpop.f32.mrf.mxu0
        %v1934 = vadd.f32 0.0, %v1933
        %v1935 = vpop.f32.mrf.mxu0
        %1936 = vmatprep.mubr.bf16.mxu0 0
        %1937 = vmatmul.mubr.bf16.gmra.mxu0 %v1764
        %v1938 = vpop.f32.mrf.mxu0
        %v1939 = vadd.f32 0.0, %v1938
        %v1940 = vpop.f32.mrf.mxu0
        %v1941 = vpop.f32.mrf.mxu0
        %v1942 = vadd.f32 0.0, %v1941
        %v1943 = vpop.f32.mrf.mxu0
        %1944 = vmatprep.mubr.bf16.mxu0 0
        %1945 = vmatmul.mubr.bf16.gmra.mxu0 %v1767
        %v1946 = vpop.f32.mrf.mxu0
        %v1947 = vadd.f32 0.0, %v1946
        %v1948 = vpop.f32.mrf.mxu0
        %v1949 = vpop.f32.mrf.mxu0
        %v1950 = vadd.f32 0.0, %v1949
        %v1951 = vpop.f32.mrf.mxu0
        %1952 = vmatprep.mubr.bf16.mxu0 0
        %1953 = vmatmul.mubr.bf16.gmra.mxu0 %v1770
        %v1954 = vpop.f32.mrf.mxu0
        %v1955 = vadd.f32 0.0, %v1954
        %v1956 = vpop.f32.mrf.mxu0
        %v1957 = vpop.f32.mrf.mxu0
        %v1958 = vadd.f32 0.0, %v1957
        %v1959 = vpop.f32.mrf.mxu0
        %1960 = vmatprep.mubr.bf16.mxu0 0
        %1961 = vmatmul.mubr.bf16.gmra.mxu0 %v1773
        %v1962 = vpop.f32.mrf.mxu0
        %v1963 = vadd.f32 0.0, %v1962
        %v1964 = vpop.f32.mrf.mxu0
        %v1965 = vpop.f32.mrf.mxu0
        %v1966 = vadd.f32 0.0, %v1965
        %v1967 = vpop.f32.mrf.mxu0
        %1968 = vmatprep.mubr.bf16.mxu0 0
        %1969 = vmatmul.mubr.bf16.gmra.mxu0 %v1776
        %v1970 = vpop.f32.mrf.mxu0
        %v1971 = vadd.f32 0.0, %v1970
        %v1972 = vpop.f32.mrf.mxu0
        %v1973 = vpop.f32.mrf.mxu0
        %v1974 = vadd.f32 0.0, %v1973
        %v1975 = vpop.f32.mrf.mxu0
        %1976 = vmatprep.mubr.bf16.mxu0 0
        %1977 = vmatmul.mubr.bf16.gmra.mxu0 %v1779
        %v1978 = vpop.f32.mrf.mxu0
        %v1979 = vadd.f32 0.0, %v1978
        %v1980 = vpop.f32.mrf.mxu0
        %v1981 = vpop.f32.mrf.mxu0
        %v1982 = vadd.f32 0.0, %v1981
        %v1983 = vpop.f32.mrf.mxu0
        %1984 = vmatprep.mubr.bf16.mxu0 0
        %1985 = vmatmul.mubr.bf16.gmra.mxu0 %v1782
        %v1986 = vpop.f32.mrf.mxu0
        %v1987 = vadd.f32 0.0, %v1986
        %v1988 = vpop.f32.mrf.mxu0
        %v1989 = vpop.f32.mrf.mxu0
        %v1990 = vadd.f32 0.0, %v1989
        %v1991 = vpop.f32.mrf.mxu0
        %1992 = vmatprep.mubr.bf16.mxu0 0
        %1993 = vmatmul.mubr.bf16.gmra.mxu0 %v1785
        %v1994 = vpop.f32.mrf.mxu0
        %v1995 = vadd.f32 0.0, %v1994
        %v1996 = vpop.f32.mrf.mxu0
        %v1997 = vpop.f32.mrf.mxu0
        %v1998 = vadd.f32 0.0, %v1997
        %v1999 = vpop.f32.mrf.mxu0
        %2000 = vmatprep.mubr.bf16.mxu0 0
        %2001 = vmatmul.mubr.bf16.gmra.mxu0 %v1788
        %v2002 = vpop.f32.mrf.mxu0
        %v2003 = vadd.f32 0.0, %v2002
        %v2004 = vpop.f32.mrf.mxu0
        %v2005 = vpop.f32.mrf.mxu0
        %v2006 = vadd.f32 0.0, %v2005
        %v2007 = vpop.f32.mrf.mxu0
        %2008 = vmatprep.mubr.bf16.mxu0 0
        %2009 = vmatmul.mubr.bf16.gmra.mxu0 %v1791
        %v2010 = vpop.f32.mrf.mxu0
        %v2011 = vadd.f32 0.0, %v2010
        %v2012 = vpop.f32.mrf.mxu0
        %v2013 = vpop.f32.mrf.mxu0
        %v2014 = vadd.f32 0.0, %v2013
        %v2015 = vpop.f32.mrf.mxu0
        %2016 = vmatprep.mubr.bf16.mxu0 0
        %2017 = vmatmul.mubr.bf16.gmra.mxu0 %v1794
        %v2018 = vpop.f32.mrf.mxu0
        %v2019 = vadd.f32 0.0, %v2018
        %v2020 = vpop.f32.mrf.mxu0
        %v2021 = vpop.f32.mrf.mxu0
        %v2022 = vadd.f32 0.0, %v2021
        %v2023 = vpop.f32.mrf.mxu0
        %2024 = vmatprep.mubr.bf16.mxu0 0
        %2025 = vmatmul.mubr.bf16.gmra.mxu0 %v1797
        %v2026 = vpop.f32.mrf.mxu0
        %v2027 = vadd.f32 0.0, %v2026
        %v2028 = vpop.f32.mrf.mxu0
        %v2029 = vpop.f32.mrf.mxu0
        %v2030 = vadd.f32 0.0, %v2029
        %v2031 = vpop.f32.mrf.mxu0
        %2032 = vmatprep.mubr.bf16.mxu0 0
        %2033 = vmatmul.mubr.bf16.gmra.mxu0 %v1800
        %v2034 = vpop.f32.mrf.mxu0
        %v2035 = vadd.f32 0.0, %v2034
        %v2036 = vpop.f32.mrf.mxu0
        %v2037 = vpop.f32.mrf.mxu0
        %v2038 = vadd.f32 0.0, %v2037
        %v2039 = vpop.f32.mrf.mxu0
        %2040 = vmatprep.mubr.bf16.mxu0 0
        %2041 = vmatmul.mubr.bf16.gmra.mxu0 %v1803
        %v2042 = vpop.f32.mrf.mxu0
        %v2043 = vadd.f32 0.0, %v2042
        %v2044 = vpop.f32.mrf.mxu0
        %v2045 = vpop.f32.mrf.mxu0
        %v2046 = vadd.f32 0.0, %v2045
        %v2047 = vpop.f32.mrf.mxu0
        %2048 = vmatprep.mubr.bf16.mxu0 0
        %2049 = vmatmul.mubr.bf16.gmra.mxu0 %v1806
        %v2050 = vpop.f32.mrf.mxu0
        %v2051 = vadd.f32 0.0, %v2050
        %v2052 = vpop.f32.mrf.mxu0
        %v2053 = vpop.f32.mrf.mxu0
        %v2054 = vadd.f32 0.0, %v2053
        %v2055 = vpop.f32.mrf.mxu0
        %2056 = vmatprep.mubr.bf16.mxu0 0
        %2057 = vmatmul.mubr.bf16.gmra.mxu0 %v1809
        %v2058 = vpop.f32.mrf.mxu0
        %v2059 = vadd.f32 0.0, %v2058
        %v2060 = vpop.f32.mrf.mxu0
        %v2061 = vpop.f32.mrf.mxu0
        %v2062 = vadd.f32 0.0, %v2061
        %v2063 = vpop.f32.mrf.mxu0
        %2064 = vmatprep.mubr.bf16.mxu0 0
        %2065 = vmatmul.mubr.bf16.gmra.mxu0 %v1812
        %v2066 = vpop.f32.mrf.mxu0
        %v2067 = vadd.f32 0.0, %v2066
        %v2068 = vpop.f32.mrf.mxu0
        %v2069 = vpop.f32.mrf.mxu0
        %v2070 = vadd.f32 0.0, %v2069
        %v2071 = vpop.f32.mrf.mxu0
        %2072 = vmatprep.mubr.bf16.mxu0 0
        %2073 = vmatmul.mubr.bf16.gmra.mxu0 %v1815
        %v2074 = vpop.f32.mrf.mxu0
        %v2075 = vadd.f32 0.0, %v2074
        %v2076 = vpop.f32.mrf.mxu0
        %v2077 = vpop.f32.mrf.mxu0
        %v2078 = vadd.f32 0.0, %v2077
        %v2079 = vpop.f32.mrf.mxu0
        %2080 = vmatprep.mubr.bf16.mxu0 0
        %2081 = vmatmul.mubr.bf16.gmra.mxu0 %v1818
        %v2082 = vpop.f32.mrf.mxu0
        %v2083 = vadd.f32 0.0, %v2082
        %v2084 = vpop.f32.mrf.mxu0
        %v2085 = vpop.f32.mrf.mxu0
        %v2086 = vadd.f32 0.0, %v2085
        %v2087 = vpop.f32.mrf.mxu0
        %2088 = vmatprep.mubr.bf16.mxu0 0
        %2089 = vmatmul.mubr.bf16.gmra.mxu0 %v1821
        %v2090 = vpop.f32.mrf.mxu0
        %v2091 = vadd.f32 0.0, %v2090
        %v2092 = vpop.f32.mrf.mxu0
        %v2093 = vpop.f32.mrf.mxu0
        %v2094 = vadd.f32 0.0, %v2093
        %v2095 = vpop.f32.mrf.mxu0
        %2096 = vmatprep.mubr.bf16.mxu0 0
        %2097 = vmatmul.mubr.bf16.gmra.mxu0 %v1824
        %v2098 = vpop.f32.mrf.mxu0
        %v2099 = vadd.f32 0.0, %v2098
        %v2100 = vpop.f32.mrf.mxu0
        %v2101 = vpop.f32.mrf.mxu0
        %v2102 = vadd.f32 0.0, %v2101
        %v2103 = vpop.f32.mrf.mxu0
        %2104 = vmatprep.mubr.bf16.mxu0 0
        %2105 = vmatmul.mubr.bf16.gmra.mxu0 %v1827
        %v2106 = vpop.f32.mrf.mxu0
        %v2107 = vadd.f32 0.0, %v2106
        %v2108 = vpop.f32.mrf.mxu0
        %v2109 = vpop.f32.mrf.mxu0
        %v2110 = vadd.f32 0.0, %v2109
        %v2111 = vpop.f32.mrf.mxu0
        %2112 = vmatprep.mubr.bf16.mxu0 0
        %2113 = vmatmul.mubr.bf16.gmra.mxu0 %v1830
        %v2114 = vpop.f32.mrf.mxu0
        %v2115 = vadd.f32 0.0, %v2114
        %v2116 = vpop.f32.mrf.mxu0
        %v2117 = vpop.f32.mrf.mxu0
        %v2118 = vadd.f32 0.0, %v2117
        %v2119 = vpop.f32.mrf.mxu0
        %2120 = vdwg.mxu0
        %v2121 = vadd.f32 %v1374, %v1867
        %v2122 = vadd.f32 %v1377, %v1870
        %v2123 = vadd.f32 %v1382, %v1875
        %v2124 = vadd.f32 %v1385, %v1878
        %v2125 = vadd.f32 %v1390, %v1883
        %v2126 = vadd.f32 %v1393, %v1886
        %v2127 = vadd.f32 %v1398, %v1891
        %v2128 = vadd.f32 %v1401, %v1894
        %v2129 = vadd.f32 %v1406, %v1899
        %v2130 = vadd.f32 %v1409, %v1902
        %v2131 = vadd.f32 %v1414, %v1907
        %v2132 = vadd.f32 %v1417, %v1910
        %v2133 = vadd.f32 %v1422, %v1915
        %v2134 = vadd.f32 %v1425, %v1918
        %v2135 = vadd.f32 %v1430, %v1923
        %v2136 = vadd.f32 %v1433, %v1926
        %v2137 = vadd.f32 %v1438, %v1931
        %v2138 = vadd.f32 %v1441, %v1934
        %v2139 = vadd.f32 %v1446, %v1939
        %v2140 = vadd.f32 %v1449, %v1942
        %v2141 = vadd.f32 %v1454, %v1947
        %v2142 = vadd.f32 %v1457, %v1950
        %v2143 = vadd.f32 %v1462, %v1955
        %v2144 = vadd.f32 %v1465, %v1958
        %v2145 = vadd.f32 %v1470, %v1963
        %v2146 = vadd.f32 %v1473, %v1966
        %v2147 = vadd.f32 %v1478, %v1971
        %v2148 = vadd.f32 %v1481, %v1974
        %v2149 = vadd.f32 %v1486, %v1979
        %v2150 = vadd.f32 %v1489, %v1982
        %v2151 = vadd.f32 %v1494, %v1987
        %v2152 = vadd.f32 %v1497, %v1990
        %v2153 = vadd.f32 %v1502, %v1995
        %v2154 = vadd.f32 %v1505, %v1998
        %v2155 = vadd.f32 %v1510, %v2003
        %v2156 = vadd.f32 %v1513, %v2006
        %v2157 = vadd.f32 %v1518, %v2011
        %v2158 = vadd.f32 %v1521, %v2014
        %v2159 = vadd.f32 %v1526, %v2019
        %v2160 = vadd.f32 %v1529, %v2022
        %v2161 = vadd.f32 %v1534, %v2027
        %v2162 = vadd.f32 %v1537, %v2030
        %v2163 = vadd.f32 %v1542, %v2035
        %v2164 = vadd.f32 %v1545, %v2038
        %v2165 = vadd.f32 %v1550, %v2043
        %v2166 = vadd.f32 %v1553, %v2046
        %v2167 = vadd.f32 %v1558, %v2051
        %v2168 = vadd.f32 %v1561, %v2054
        %v2169 = vadd.f32 %v1566, %v2059
        %v2170 = vadd.f32 %v1569, %v2062
        %v2171 = vadd.f32 %v1574, %v2067
        %v2172 = vadd.f32 %v1577, %v2070
        %v2173 = vadd.f32 %v1582, %v2075
        %v2174 = vadd.f32 %v1585, %v2078
        %v2175 = vadd.f32 %v1590, %v2083
        %v2176 = vadd.f32 %v1593, %v2086
        %v2177 = vadd.f32 %v1598, %v2091
        %v2178 = vadd.f32 %v1601, %v2094
        %v2179 = vadd.f32 %v1606, %v2099
        %v2180 = vadd.f32 %v1609, %v2102
        %v2181 = vadd.f32 %v1614, %v2107
        %v2182 = vadd.f32 %v1617, %v2110
        %v2183 = vadd.f32 %v1622, %v2115
        %v2184 = vadd.f32 %v1625, %v2118
        %v2185 = vpack.c.bf16 %v574, %v573
        %v2186 = vpack.c.bf16 %v575, %v575
        %s2187 = scalar_lea.vmem %s2, 24
        %v2188 = vld [vmem:[%s2187] sm:$0xf]
        %v2189 = vld [vmem:[%s2187 + $0x4] sm:$0xf]
        %v2192 = vrot.slane %v2185, 1
        %v2193 = vsel %vm1664, %v1726, %v2192
        %v2194 = vrot.slane %v2186, 1
        %v2195 = vsel %vm1664, %v2192, %v2194
        %v2198 = vunpack.c.l.b16 %v2188
        %v2199 = vunpack.c.l.b16 %v2189
        %v2200 = vpack.c.b16 %v2199, %v2198
        %v2203 = vsel %vm883, %v2193, 0
        %v2206 = vsel %vm883, %v2195, 0
        %2208 = vmatprep.subr.bf16.mxu0 0
        %2209 = vmatpush1.bf16.msra.mxu0 0
        %2210 = vmatprep.subr.bf16.mxu0 0
        %2211 = vmatpush1.bf16.msra.mxu0 0
        %2212 = vmatprep.subr.bf16.mxu0 0
        %2213 = vmatpush1.bf16.msra.mxu0 0
        %2214 = vmatprep.subr.bf16.mxu0 0
        %2215 = vmatpush1.bf16.msra.mxu0 0
        %2216 = vmatprep.subr.bf16.mxu0 0
        %2217 = vmatpush1.bf16.msra.mxu0 0
        %2218 = vmatprep.subr.bf16.mxu0 0
        %2219 = vmatpush1.bf16.msra.mxu0 0
        %2220 = vmatprep.subr.bf16.mxu0 0
        %2221 = vmatpush1.bf16.msra.mxu0 0
        %2222 = vmatprep.subr.bf16.mxu0 0
        %2223 = vmatpush1.bf16.msra.mxu0 %v2200
        %2224 = vmatprep.subr.bf16.mxu0 0
        %2225 = vmatpush2.bf16.msra.mxu0 0
        %2226 = vmatprep.subr.bf16.mxu0 0
        %2227 = vmatpush2.bf16.msra.mxu0 0
        %2228 = vmatprep.subr.bf16.mxu0 0
        %2229 = vmatpush2.bf16.msra.mxu0 0
        %2230 = vmatprep.subr.bf16.mxu0 0
        %2231 = vmatpush2.bf16.msra.mxu0 0
        %2232 = vmatprep.subr.bf16.mxu0 0
        %2233 = vmatpush2.bf16.msra.mxu0 0
        %2234 = vmatprep.subr.bf16.mxu0 0
        %2235 = vmatpush2.bf16.msra.mxu0 0
        %2236 = vmatprep.subr.bf16.mxu0 0
        %2237 = vmatpush2.bf16.msra.mxu0 0
        %2238 = vmatprep.subr.bf16.mxu0 0
        %2239 = vmatpush2.bf16.msra.mxu0 0
        %2240 = vmatprep.mubr.bf16.mxu0 0
        %2241 = vmatmul.mubr.bf16.gmra.mxu0 %v1740
        %v2242 = vpop.f32.mrf.mxu0
        %v2243 = vadd.f32 0.0, %v2242
        %v2244 = vpop.f32.mrf.mxu0
        %v2245 = vpop.f32.mrf.mxu0
        %v2246 = vadd.f32 0.0, %v2245
        %v2247 = vpop.f32.mrf.mxu0
        %2248 = vmatprep.mubr.bf16.mxu0 0
        %2249 = vmatmul.mubr.bf16.gmra.mxu0 %v1743
        %v2250 = vpop.f32.mrf.mxu0
        %v2251 = vadd.f32 0.0, %v2250
        %v2252 = vpop.f32.mrf.mxu0
        %v2253 = vpop.f32.mrf.mxu0
        %v2254 = vadd.f32 0.0, %v2253
        %v2255 = vpop.f32.mrf.mxu0
        %2256 = vmatprep.mubr.bf16.mxu0 0
        %2257 = vmatmul.mubr.bf16.gmra.mxu0 %v1746
        %v2258 = vpop.f32.mrf.mxu0
        %v2259 = vadd.f32 0.0, %v2258
        %v2260 = vpop.f32.mrf.mxu0
        %v2261 = vpop.f32.mrf.mxu0
        %v2262 = vadd.f32 0.0, %v2261
        %v2263 = vpop.f32.mrf.mxu0
        %2264 = vmatprep.mubr.bf16.mxu0 0
        %2265 = vmatmul.mubr.bf16.gmra.mxu0 %v1749
        %v2266 = vpop.f32.mrf.mxu0
        %v2267 = vadd.f32 0.0, %v2266
        %v2268 = vpop.f32.mrf.mxu0
        %v2269 = vpop.f32.mrf.mxu0
        %v2270 = vadd.f32 0.0, %v2269
        %v2271 = vpop.f32.mrf.mxu0
        %2272 = vmatprep.mubr.bf16.mxu0 0
        %2273 = vmatmul.mubr.bf16.gmra.mxu0 %v1752
        %v2274 = vpop.f32.mrf.mxu0
        %v2275 = vadd.f32 0.0, %v2274
        %v2276 = vpop.f32.mrf.mxu0
        %v2277 = vpop.f32.mrf.mxu0
        %v2278 = vadd.f32 0.0, %v2277
        %v2279 = vpop.f32.mrf.mxu0
        %2280 = vmatprep.mubr.bf16.mxu0 0
        %2281 = vmatmul.mubr.bf16.gmra.mxu0 %v1755
        %v2282 = vpop.f32.mrf.mxu0
        %v2283 = vadd.f32 0.0, %v2282
        %v2284 = vpop.f32.mrf.mxu0
        %v2285 = vpop.f32.mrf.mxu0
        %v2286 = vadd.f32 0.0, %v2285
        %v2287 = vpop.f32.mrf.mxu0
        %2288 = vmatprep.mubr.bf16.mxu0 0
        %2289 = vmatmul.mubr.bf16.gmra.mxu0 %v1758
        %v2290 = vpop.f32.mrf.mxu0
        %v2291 = vadd.f32 0.0, %v2290
        %v2292 = vpop.f32.mrf.mxu0
        %v2293 = vpop.f32.mrf.mxu0
        %v2294 = vadd.f32 0.0, %v2293
        %v2295 = vpop.f32.mrf.mxu0
        %2296 = vmatprep.mubr.bf16.mxu0 0
        %2297 = vmatmul.mubr.bf16.gmra.mxu0 %v1761
        %v2298 = vpop.f32.mrf.mxu0
        %v2299 = vadd.f32 0.0, %v2298
        %v2300 = vpop.f32.mrf.mxu0
        %v2301 = vpop.f32.mrf.mxu0
        %v2302 = vadd.f32 0.0, %v2301
        %v2303 = vpop.f32.mrf.mxu0
        %2304 = vmatprep.mubr.bf16.mxu0 0
        %2305 = vmatmul.mubr.bf16.gmra.mxu0 %v1764
        %v2306 = vpop.f32.mrf.mxu0
        %v2307 = vadd.f32 0.0, %v2306
        %v2308 = vpop.f32.mrf.mxu0
        %v2309 = vpop.f32.mrf.mxu0
        %v2310 = vadd.f32 0.0, %v2309
        %v2311 = vpop.f32.mrf.mxu0
        %2312 = vmatprep.mubr.bf16.mxu0 0
        %2313 = vmatmul.mubr.bf16.gmra.mxu0 %v1767
        %v2314 = vpop.f32.mrf.mxu0
        %v2315 = vadd.f32 0.0, %v2314
        %v2316 = vpop.f32.mrf.mxu0
        %v2317 = vpop.f32.mrf.mxu0
        %v2318 = vadd.f32 0.0, %v2317
        %v2319 = vpop.f32.mrf.mxu0
        %2320 = vmatprep.mubr.bf16.mxu0 0
        %2321 = vmatmul.mubr.bf16.gmra.mxu0 %v1770
        %v2322 = vpop.f32.mrf.mxu0
        %v2323 = vadd.f32 0.0, %v2322
        %v2324 = vpop.f32.mrf.mxu0
        %v2325 = vpop.f32.mrf.mxu0
        %v2326 = vadd.f32 0.0, %v2325
        %v2327 = vpop.f32.mrf.mxu0
        %2328 = vmatprep.mubr.bf16.mxu0 0
        %2329 = vmatmul.mubr.bf16.gmra.mxu0 %v1773
        %v2330 = vpop.f32.mrf.mxu0
        %v2331 = vadd.f32 0.0, %v2330
        %v2332 = vpop.f32.mrf.mxu0
        %v2333 = vpop.f32.mrf.mxu0
        %v2334 = vadd.f32 0.0, %v2333
        %v2335 = vpop.f32.mrf.mxu0
        %2336 = vmatprep.mubr.bf16.mxu0 0
        %2337 = vmatmul.mubr.bf16.gmra.mxu0 %v1776
        %v2338 = vpop.f32.mrf.mxu0
        %v2339 = vadd.f32 0.0, %v2338
        %v2340 = vpop.f32.mrf.mxu0
        %v2341 = vpop.f32.mrf.mxu0
        %v2342 = vadd.f32 0.0, %v2341
        %v2343 = vpop.f32.mrf.mxu0
        %2344 = vmatprep.mubr.bf16.mxu0 0
        %2345 = vmatmul.mubr.bf16.gmra.mxu0 %v1779
        %v2346 = vpop.f32.mrf.mxu0
        %v2347 = vadd.f32 0.0, %v2346
        %v2348 = vpop.f32.mrf.mxu0
        %v2349 = vpop.f32.mrf.mxu0
        %v2350 = vadd.f32 0.0, %v2349
        %v2351 = vpop.f32.mrf.mxu0
        %2352 = vmatprep.mubr.bf16.mxu0 0
        %2353 = vmatmul.mubr.bf16.gmra.mxu0 %v1782
        %v2354 = vpop.f32.mrf.mxu0
        %v2355 = vadd.f32 0.0, %v2354
        %v2356 = vpop.f32.mrf.mxu0
        %v2357 = vpop.f32.mrf.mxu0
        %v2358 = vadd.f32 0.0, %v2357
        %v2359 = vpop.f32.mrf.mxu0
        %2360 = vmatprep.mubr.bf16.mxu0 0
        %2361 = vmatmul.mubr.bf16.gmra.mxu0 %v1785
        %v2362 = vpop.f32.mrf.mxu0
        %v2363 = vadd.f32 0.0, %v2362
        %v2364 = vpop.f32.mrf.mxu0
        %v2365 = vpop.f32.mrf.mxu0
        %v2366 = vadd.f32 0.0, %v2365
        %v2367 = vpop.f32.mrf.mxu0
        %2368 = vmatprep.mubr.bf16.mxu0 0
        %2369 = vmatmul.mubr.bf16.gmra.mxu0 %v1788
        %v2370 = vpop.f32.mrf.mxu0
        %v2371 = vadd.f32 0.0, %v2370
        %v2372 = vpop.f32.mrf.mxu0
        %v2373 = vpop.f32.mrf.mxu0
        %v2374 = vadd.f32 0.0, %v2373
        %v2375 = vpop.f32.mrf.mxu0
        %2376 = vmatprep.mubr.bf16.mxu0 0
        %2377 = vmatmul.mubr.bf16.gmra.mxu0 %v1791
        %v2378 = vpop.f32.mrf.mxu0
        %v2379 = vadd.f32 0.0, %v2378
        %v2380 = vpop.f32.mrf.mxu0
        %v2381 = vpop.f32.mrf.mxu0
        %v2382 = vadd.f32 0.0, %v2381
        %v2383 = vpop.f32.mrf.mxu0
        %2384 = vmatprep.mubr.bf16.mxu0 0
        %2385 = vmatmul.mubr.bf16.gmra.mxu0 %v1794
        %v2386 = vpop.f32.mrf.mxu0
        %v2387 = vadd.f32 0.0, %v2386
        %v2388 = vpop.f32.mrf.mxu0
        %v2389 = vpop.f32.mrf.mxu0
        %v2390 = vadd.f32 0.0, %v2389
        %v2391 = vpop.f32.mrf.mxu0
        %2392 = vmatprep.mubr.bf16.mxu0 0
        %2393 = vmatmul.mubr.bf16.gmra.mxu0 %v1797
        %v2394 = vpop.f32.mrf.mxu0
        %v2395 = vadd.f32 0.0, %v2394
        %v2396 = vpop.f32.mrf.mxu0
        %v2397 = vpop.f32.mrf.mxu0
        %v2398 = vadd.f32 0.0, %v2397
        %v2399 = vpop.f32.mrf.mxu0
        %2400 = vmatprep.mubr.bf16.mxu0 0
        %2401 = vmatmul.mubr.bf16.gmra.mxu0 %v1800
        %v2402 = vpop.f32.mrf.mxu0
        %v2403 = vadd.f32 0.0, %v2402
        %v2404 = vpop.f32.mrf.mxu0
        %v2405 = vpop.f32.mrf.mxu0
        %v2406 = vadd.f32 0.0, %v2405
        %v2407 = vpop.f32.mrf.mxu0
        %2408 = vmatprep.mubr.bf16.mxu0 0
        %2409 = vmatmul.mubr.bf16.gmra.mxu0 %v1803
        %v2410 = vpop.f32.mrf.mxu0
        %v2411 = vadd.f32 0.0, %v2410
        %v2412 = vpop.f32.mrf.mxu0
        %v2413 = vpop.f32.mrf.mxu0
        %v2414 = vadd.f32 0.0, %v2413
        %v2415 = vpop.f32.mrf.mxu0
        %2416 = vmatprep.mubr.bf16.mxu0 0
        %2417 = vmatmul.mubr.bf16.gmra.mxu0 %v1806
        %v2418 = vpop.f32.mrf.mxu0
        %v2419 = vadd.f32 0.0, %v2418
        %v2420 = vpop.f32.mrf.mxu0
        %v2421 = vpop.f32.mrf.mxu0
        %v2422 = vadd.f32 0.0, %v2421
        %v2423 = vpop.f32.mrf.mxu0
        %2424 = vmatprep.mubr.bf16.mxu0 0
        %2425 = vmatmul.mubr.bf16.gmra.mxu0 %v1809
        %v2426 = vpop.f32.mrf.mxu0
        %v2427 = vadd.f32 0.0, %v2426
        %v2428 = vpop.f32.mrf.mxu0
        %v2429 = vpop.f32.mrf.mxu0
        %v2430 = vadd.f32 0.0, %v2429
        %v2431 = vpop.f32.mrf.mxu0
        %2432 = vmatprep.mubr.bf16.mxu0 0
        %2433 = vmatmul.mubr.bf16.gmra.mxu0 %v1812
        %v2434 = vpop.f32.mrf.mxu0
        %v2435 = vadd.f32 0.0, %v2434
        %v2436 = vpop.f32.mrf.mxu0
        %v2437 = vpop.f32.mrf.mxu0
        %v2438 = vadd.f32 0.0, %v2437
        %v2439 = vpop.f32.mrf.mxu0
        %2440 = vmatprep.mubr.bf16.mxu0 0
        %2441 = vmatmul.mubr.bf16.gmra.mxu0 %v1815
        %v2442 = vpop.f32.mrf.mxu0
        %v2443 = vadd.f32 0.0, %v2442
        %v2444 = vpop.f32.mrf.mxu0
        %v2445 = vpop.f32.mrf.mxu0
        %v2446 = vadd.f32 0.0, %v2445
        %v2447 = vpop.f32.mrf.mxu0
        %2448 = vmatprep.mubr.bf16.mxu0 0
        %2449 = vmatmul.mubr.bf16.gmra.mxu0 %v1818
        %v2450 = vpop.f32.mrf.mxu0
        %v2451 = vadd.f32 0.0, %v2450
        %v2452 = vpop.f32.mrf.mxu0
        %v2453 = vpop.f32.mrf.mxu0
        %v2454 = vadd.f32 0.0, %v2453
        %v2455 = vpop.f32.mrf.mxu0
        %2456 = vmatprep.mubr.bf16.mxu0 0
        %2457 = vmatmul.mubr.bf16.gmra.mxu0 %v1821
        %v2458 = vpop.f32.mrf.mxu0
        %v2459 = vadd.f32 0.0, %v2458
        %v2460 = vpop.f32.mrf.mxu0
        %v2461 = vpop.f32.mrf.mxu0
        %v2462 = vadd.f32 0.0, %v2461
        %v2463 = vpop.f32.mrf.mxu0
        %2464 = vmatprep.mubr.bf16.mxu0 0
        %2465 = vmatmul.mubr.bf16.gmra.mxu0 %v1824
        %v2466 = vpop.f32.mrf.mxu0
        %v2467 = vadd.f32 0.0, %v2466
        %v2468 = vpop.f32.mrf.mxu0
        %v2469 = vpop.f32.mrf.mxu0
        %v2470 = vadd.f32 0.0, %v2469
        %v2471 = vpop.f32.mrf.mxu0
        %2472 = vmatprep.mubr.bf16.mxu0 0
        %2473 = vmatmul.mubr.bf16.gmra.mxu0 %v1827
        %v2474 = vpop.f32.mrf.mxu0
        %v2475 = vadd.f32 0.0, %v2474
        %v2476 = vpop.f32.mrf.mxu0
        %v2477 = vpop.f32.mrf.mxu0
        %v2478 = vadd.f32 0.0, %v2477
        %v2479 = vpop.f32.mrf.mxu0
        %2480 = vmatprep.mubr.bf16.mxu0 0
        %2481 = vmatmul.mubr.bf16.gmra.mxu0 %v2203
        %v2482 = vpop.f32.mrf.mxu0
        %v2483 = vadd.f32 0.0, %v2482
        %v2484 = vpop.f32.mrf.mxu0
        %v2485 = vpop.f32.mrf.mxu0
        %v2486 = vadd.f32 0.0, %v2485
        %v2487 = vpop.f32.mrf.mxu0
        %2488 = vmatprep.mubr.bf16.mxu0 0
        %2489 = vmatmul.mubr.bf16.gmra.mxu0 %v2206
        %v2490 = vpop.f32.mrf.mxu0
        %v2491 = vadd.f32 0.0, %v2490
        %v2492 = vpop.f32.mrf.mxu0
        %v2493 = vpop.f32.mrf.mxu0
        %v2494 = vadd.f32 0.0, %v2493
        %v2495 = vpop.f32.mrf.mxu0
        %2496 = vdwg.mxu0
        %v2497 = vadd.f32 %v2121, %v2243
        %v2498 = vadd.f32 %v2122, %v2246
        %v2499 = vadd.f32 %v2123, %v2251
        %v2500 = vadd.f32 %v2124, %v2254
        %v2501 = vadd.f32 %v2125, %v2259
        %v2502 = vadd.f32 %v2126, %v2262
        %v2503 = vadd.f32 %v2127, %v2267
        %v2504 = vadd.f32 %v2128, %v2270
        %v2505 = vadd.f32 %v2129, %v2275
        %v2506 = vadd.f32 %v2130, %v2278
        %v2507 = vadd.f32 %v2131, %v2283
        %v2508 = vadd.f32 %v2132, %v2286
        %v2509 = vadd.f32 %v2133, %v2291
        %v2510 = vadd.f32 %v2134, %v2294
        %v2511 = vadd.f32 %v2135, %v2299
        %v2512 = vadd.f32 %v2136, %v2302
        %v2513 = vadd.f32 %v2137, %v2307
        %v2514 = vadd.f32 %v2138, %v2310
        %v2515 = vadd.f32 %v2139, %v2315
        %v2516 = vadd.f32 %v2140, %v2318
        %v2517 = vadd.f32 %v2141, %v2323
        %v2518 = vadd.f32 %v2142, %v2326
        %v2519 = vadd.f32 %v2143, %v2331
        %v2520 = vadd.f32 %v2144, %v2334
        %v2521 = vadd.f32 %v2145, %v2339
        %v2522 = vadd.f32 %v2146, %v2342
        %v2523 = vadd.f32 %v2147, %v2347
        %v2524 = vadd.f32 %v2148, %v2350
        %v2525 = vadd.f32 %v2149, %v2355
        %v2526 = vadd.f32 %v2150, %v2358
        %v2527 = vadd.f32 %v2151, %v2363
        %v2528 = vadd.f32 %v2152, %v2366
        %v2529 = vadd.f32 %v2153, %v2371
        %v2530 = vadd.f32 %v2154, %v2374
        %v2531 = vadd.f32 %v2155, %v2379
        %v2532 = vadd.f32 %v2156, %v2382
        %v2533 = vadd.f32 %v2157, %v2387
        %v2534 = vadd.f32 %v2158, %v2390
        %v2535 = vadd.f32 %v2159, %v2395
        %v2536 = vadd.f32 %v2160, %v2398
        %v2537 = vadd.f32 %v2161, %v2403
        %v2538 = vadd.f32 %v2162, %v2406
        %v2539 = vadd.f32 %v2163, %v2411
        %v2540 = vadd.f32 %v2164, %v2414
        %v2541 = vadd.f32 %v2165, %v2419
        %v2542 = vadd.f32 %v2166, %v2422
        %v2543 = vadd.f32 %v2167, %v2427
        %v2544 = vadd.f32 %v2168, %v2430
        %v2545 = vadd.f32 %v2169, %v2435
        %v2546 = vadd.f32 %v2170, %v2438
        %v2547 = vadd.f32 %v2171, %v2443
        %v2548 = vadd.f32 %v2172, %v2446
        %v2549 = vadd.f32 %v2173, %v2451
        %v2550 = vadd.f32 %v2174, %v2454
        %v2551 = vadd.f32 %v2175, %v2459
        %v2552 = vadd.f32 %v2176, %v2462
        %v2553 = vadd.f32 %v2177, %v2467
        %v2554 = vadd.f32 %v2178, %v2470
        %v2555 = vadd.f32 %v2179, %v2475
        %v2556 = vadd.f32 %v2180, %v2478
        %v2557 = vadd.f32 %v2181, %v2483
        %v2558 = vadd.f32 %v2182, %v2486
        %v2559 = vadd.f32 %v2183, %v2491
        %v2560 = vadd.f32 %v2184, %v2494
        %s2561 = scalar_lea.vmem %s2, 32
        %v2562 = vld [vmem:[%s2561] sm:$0xf]
        %v2563 = vld [vmem:[%s2561 + $0x4] sm:$0xf]
        %vm2564 = vsmask.f32 6400
        %v2565 = vrot.slane %v629, 1
        %v2566 = vrot.slane %v625, 2
        %v2567 = vor.u32 %v2565, %v2566
        %v2568 = vrot.slane %v637, 1
        %v2569 = vrot.slane %v633, 2
        %v2570 = vor.u32 %v2568, %v2569
        %v2571 = vsel %vm2564, %v2567, %v2570
        %v2572 = vrot.slane %v645, 1
        %v2573 = vrot.slane %v641, 2
        %v2574 = vor.u32 %v2572, %v2573
        %v2575 = vsel %vm2564, %v2570, %v2574
        %v2576 = vrot.slane %v653, 1
        %v2577 = vrot.slane %v649, 2
        %v2578 = vor.u32 %v2576, %v2577
        %v2579 = vsel %vm2564, %v2574, %v2578
        %v2580 = vrot.slane %v661, 1
        %v2581 = vrot.slane %v657, 2
        %v2582 = vor.u32 %v2580, %v2581
        %v2583 = vsel %vm2564, %v2578, %v2582
        %v2584 = vrot.slane %v669, 1
        %v2585 = vrot.slane %v665, 2
        %v2586 = vor.u32 %v2584, %v2585
        %v2587 = vsel %vm2564, %v2582, %v2586
        %v2588 = vrot.slane %v677, 1
        %v2589 = vrot.slane %v673, 2
        %v2590 = vor.u32 %v2588, %v2589
        %v2591 = vsel %vm2564, %v2586, %v2590
        %v2592 = vrot.slane %v685, 1
        %v2593 = vrot.slane %v681, 2
        %v2594 = vor.u32 %v2592, %v2593
        %v2595 = vsel %vm2564, %v2590, %v2594
        %v2596 = vrot.slane %v693, 1
        %v2597 = vrot.slane %v689, 2
        %v2598 = vor.u32 %v2596, %v2597
        %v2599 = vsel %vm2564, %v2594, %v2598
        %v2600 = vrot.slane %v701, 1
        %v2601 = vrot.slane %v697, 2
        %v2602 = vor.u32 %v2600, %v2601
        %v2603 = vsel %vm2564, %v2598, %v2602
        %v2604 = vrot.slane %v709, 1
        %v2605 = vrot.slane %v705, 2
        %v2606 = vor.u32 %v2604, %v2605
        %v2607 = vsel %vm2564, %v2602, %v2606
        %v2608 = vrot.slane %v717, 1
        %v2609 = vrot.slane %v713, 2
        %v2610 = vor.u32 %v2608, %v2609
        %v2611 = vsel %vm2564, %v2606, %v2610
        %v2612 = vrot.slane %v725, 1
        %v2613 = vrot.slane %v721, 2
        %v2614 = vor.u32 %v2612, %v2613
        %v2615 = vsel %vm2564, %v2610, %v2614
        %v2616 = vrot.slane %v733, 1
        %v2617 = vrot.slane %v729, 2
        %v2618 = vor.u32 %v2616, %v2617
        %v2619 = vsel %vm2564, %v2614, %v2618
        %v2620 = vrot.slane %v741, 1
        %v2621 = vrot.slane %v737, 2
        %v2622 = vor.u32 %v2620, %v2621
        %v2623 = vsel %vm2564, %v2618, %v2622
        %v2624 = vrot.slane %v749, 1
        %v2625 = vrot.slane %v745, 2
        %v2626 = vor.u32 %v2624, %v2625
        %v2627 = vsel %vm2564, %v2622, %v2626
        %v2628 = vrot.slane %v757, 1
        %v2629 = vrot.slane %v753, 2
        %v2630 = vor.u32 %v2628, %v2629
        %v2631 = vsel %vm2564, %v2626, %v2630
        %v2632 = vrot.slane %v765, 1
        %v2633 = vrot.slane %v761, 2
        %v2634 = vor.u32 %v2632, %v2633
        %v2635 = vsel %vm2564, %v2630, %v2634
        %v2636 = vrot.slane %v773, 1
        %v2637 = vrot.slane %v769, 2
        %v2638 = vor.u32 %v2636, %v2637
        %v2639 = vsel %vm2564, %v2634, %v2638
        %v2640 = vrot.slane %v781, 1
        %v2641 = vrot.slane %v777, 2
        %v2642 = vor.u32 %v2640, %v2641
        %v2643 = vsel %vm2564, %v2638, %v2642
        %v2644 = vrot.slane %v789, 1
        %v2645 = vrot.slane %v785, 2
        %v2646 = vor.u32 %v2644, %v2645
        %v2647 = vsel %vm2564, %v2642, %v2646
        %v2648 = vrot.slane %v797, 1
        %v2649 = vrot.slane %v793, 2
        %v2650 = vor.u32 %v2648, %v2649
        %v2651 = vsel %vm2564, %v2646, %v2650
        %v2652 = vrot.slane %v805, 1
        %v2653 = vrot.slane %v801, 2
        %v2654 = vor.u32 %v2652, %v2653
        %v2655 = vsel %vm2564, %v2650, %v2654
        %v2656 = vrot.slane %v813, 1
        %v2657 = vrot.slane %v809, 2
        %v2658 = vor.u32 %v2656, %v2657
        %v2659 = vsel %vm2564, %v2654, %v2658
        %v2660 = vrot.slane %v821, 1
        %v2661 = vrot.slane %v817, 2
        %v2662 = vor.u32 %v2660, %v2661
        %v2663 = vsel %vm2564, %v2658, %v2662
        %v2664 = vrot.slane %v829, 1
        %v2665 = vrot.slane %v825, 2
        %v2666 = vor.u32 %v2664, %v2665
        %v2667 = vsel %vm2564, %v2662, %v2666
        %v2668 = vrot.slane %v837, 1
        %v2669 = vrot.slane %v833, 2
        %v2670 = vor.u32 %v2668, %v2669
        %v2671 = vsel %vm2564, %v2666, %v2670
        %v2672 = vrot.slane %v845, 1
        %v2673 = vrot.slane %v841, 2
        %v2674 = vor.u32 %v2672, %v2673
        %v2675 = vsel %vm2564, %v2670, %v2674
        %v2676 = vrot.slane %v853, 1
        %v2677 = vrot.slane %v849, 2
        %v2678 = vor.u32 %v2676, %v2677
        %v2679 = vsel %vm2564, %v2674, %v2678
        %v2680 = vrot.slane %v861, 1
        %v2681 = vrot.slane %v857, 2
        %v2682 = vor.u32 %v2680, %v2681
        %v2683 = vsel %vm2564, %v2678, %v2682
        %v2684 = vrot.slane %v869, 1
        %v2685 = vrot.slane %v865, 2
        %v2686 = vor.u32 %v2684, %v2685
        %v2687 = vsel %vm2564, %v2682, %v2686
        %v2689 = vshrl.u32 %v2185, 16
        %v2691 = vrot.slane %v2689, 1
        %v2692 = vshll.u32 %v2185, 16
        %v2694 = vrot.slane %v2692, 2
        %v2695 = vor.u32 %v2691, %v2694
        %v2696 = vsel %vm2564, %v2686, %v2695
        %v2698 = vshrl.u32 %v2186, 16
        %v2700 = vrot.slane %v2698, 1
        %v2701 = vshll.u32 %v2186, 16
        %v2703 = vrot.slane %v2701, 2
        %v2704 = vor.u32 %v2700, %v2703
        %v2705 = vsel %vm2564, %v2695, %v2704
        %v2708 = vunpack.c.l.b16 %v2562
        %v2709 = vunpack.c.l.b16 %v2563
        %v2710 = vpack.c.b16 %v2709, %v2708
        %v2713 = vsel %vm883, %v2571, 0
        %v2716 = vsel %vm883, %v2575, 0
        %v2719 = vsel %vm883, %v2579, 0
        %v2722 = vsel %vm883, %v2583, 0
        %v2725 = vsel %vm883, %v2587, 0
        %v2728 = vsel %vm883, %v2591, 0
        %v2731 = vsel %vm883, %v2595, 0
        %v2734 = vsel %vm883, %v2599, 0
        %v2737 = vsel %vm883, %v2603, 0
        %v2740 = vsel %vm883, %v2607, 0
        %v2743 = vsel %vm883, %v2611, 0
        %v2746 = vsel %vm883, %v2615, 0
        %v2749 = vsel %vm883, %v2619, 0
        %v2752 = vsel %vm883, %v2623, 0
        %v2755 = vsel %vm883, %v2627, 0
        %v2758 = vsel %vm883, %v2631, 0
        %v2761 = vsel %vm883, %v2635, 0
        %v2764 = vsel %vm883, %v2639, 0
        %v2767 = vsel %vm883, %v2643, 0
        %v2770 = vsel %vm883, %v2647, 0
        %v2773 = vsel %vm883, %v2651, 0
        %v2776 = vsel %vm883, %v2655, 0
        %v2779 = vsel %vm883, %v2659, 0
        %v2782 = vsel %vm883, %v2663, 0
        %v2785 = vsel %vm883, %v2667, 0
        %v2788 = vsel %vm883, %v2671, 0
        %v2791 = vsel %vm883, %v2675, 0
        %v2794 = vsel %vm883, %v2679, 0
        %v2797 = vsel %vm883, %v2683, 0
        %v2800 = vsel %vm883, %v2687, 0
        %v2803 = vsel %vm883, %v2696, 0
        %v2806 = vsel %vm883, %v2705, 0
        %2808 = vmatprep.subr.bf16.mxu0 0
        %2809 = vmatpush1.bf16.msra.mxu0 0
        %2810 = vmatprep.subr.bf16.mxu0 0
        %2811 = vmatpush1.bf16.msra.mxu0 0
        %2812 = vmatprep.subr.bf16.mxu0 0
        %2813 = vmatpush1.bf16.msra.mxu0 0
        %2814 = vmatprep.subr.bf16.mxu0 0
        %2815 = vmatpush1.bf16.msra.mxu0 0
        %2816 = vmatprep.subr.bf16.mxu0 0
        %2817 = vmatpush1.bf16.msra.mxu0 0
        %2818 = vmatprep.subr.bf16.mxu0 0
        %2819 = vmatpush1.bf16.msra.mxu0 0
        %2820 = vmatprep.subr.bf16.mxu0 0
        %2821 = vmatpush1.bf16.msra.mxu0 0
        %2822 = vmatprep.subr.bf16.mxu0 0
        %2823 = vmatpush1.bf16.msra.mxu0 %v2710
        %2824 = vmatprep.subr.bf16.mxu0 0
        %2825 = vmatpush2.bf16.msra.mxu0 0
        %2826 = vmatprep.subr.bf16.mxu0 0
        %2827 = vmatpush2.bf16.msra.mxu0 0
        %2828 = vmatprep.subr.bf16.mxu0 0
        %2829 = vmatpush2.bf16.msra.mxu0 0
        %2830 = vmatprep.subr.bf16.mxu0 0
        %2831 = vmatpush2.bf16.msra.mxu0 0
        %2832 = vmatprep.subr.bf16.mxu0 0
        %2833 = vmatpush2.bf16.msra.mxu0 0
        %2834 = vmatprep.subr.bf16.mxu0 0
        %2835 = vmatpush2.bf16.msra.mxu0 0
        %2836 = vmatprep.subr.bf16.mxu0 0
        %2837 = vmatpush2.bf16.msra.mxu0 0
        %2838 = vmatprep.subr.bf16.mxu0 0
        %2839 = vmatpush2.bf16.msra.mxu0 0
        %2840 = vmatprep.mubr.bf16.mxu0 0
        %2841 = vmatmul.mubr.bf16.gmra.mxu0 %v2713
        %v2842 = vpop.f32.mrf.mxu0
        %v2843 = vadd.f32 0.0, %v2842
        %v2844 = vpop.f32.mrf.mxu0
        %v2845 = vpop.f32.mrf.mxu0
        %v2846 = vadd.f32 0.0, %v2845
        %v2847 = vpop.f32.mrf.mxu0
        %2848 = vmatprep.mubr.bf16.mxu0 0
        %2849 = vmatmul.mubr.bf16.gmra.mxu0 %v2716
        %v2850 = vpop.f32.mrf.mxu0
        %v2851 = vadd.f32 0.0, %v2850
        %v2852 = vpop.f32.mrf.mxu0
        %v2853 = vpop.f32.mrf.mxu0
        %v2854 = vadd.f32 0.0, %v2853
        %v2855 = vpop.f32.mrf.mxu0
        %2856 = vmatprep.mubr.bf16.mxu0 0
        %2857 = vmatmul.mubr.bf16.gmra.mxu0 %v2719
        %v2858 = vpop.f32.mrf.mxu0
        %v2859 = vadd.f32 0.0, %v2858
        %v2860 = vpop.f32.mrf.mxu0
        %v2861 = vpop.f32.mrf.mxu0
        %v2862 = vadd.f32 0.0, %v2861
        %v2863 = vpop.f32.mrf.mxu0
        %2864 = vmatprep.mubr.bf16.mxu0 0
        %2865 = vmatmul.mubr.bf16.gmra.mxu0 %v2722
        %v2866 = vpop.f32.mrf.mxu0
        %v2867 = vadd.f32 0.0, %v2866
        %v2868 = vpop.f32.mrf.mxu0
        %v2869 = vpop.f32.mrf.mxu0
        %v2870 = vadd.f32 0.0, %v2869
        %v2871 = vpop.f32.mrf.mxu0
        %2872 = vmatprep.mubr.bf16.mxu0 0
        %2873 = vmatmul.mubr.bf16.gmra.mxu0 %v2725
        %v2874 = vpop.f32.mrf.mxu0
        %v2875 = vadd.f32 0.0, %v2874
        %v2876 = vpop.f32.mrf.mxu0
        %v2877 = vpop.f32.mrf.mxu0
        %v2878 = vadd.f32 0.0, %v2877
        %v2879 = vpop.f32.mrf.mxu0
        %2880 = vmatprep.mubr.bf16.mxu0 0
        %2881 = vmatmul.mubr.bf16.gmra.mxu0 %v2728
        %v2882 = vpop.f32.mrf.mxu0
        %v2883 = vadd.f32 0.0, %v2882
        %v2884 = vpop.f32.mrf.mxu0
        %v2885 = vpop.f32.mrf.mxu0
        %v2886 = vadd.f32 0.0, %v2885
        %v2887 = vpop.f32.mrf.mxu0
        %2888 = vmatprep.mubr.bf16.mxu0 0
        %2889 = vmatmul.mubr.bf16.gmra.mxu0 %v2731
        %v2890 = vpop.f32.mrf.mxu0
        %v2891 = vadd.f32 0.0, %v2890
        %v2892 = vpop.f32.mrf.mxu0
        %v2893 = vpop.f32.mrf.mxu0
        %v2894 = vadd.f32 0.0, %v2893
        %v2895 = vpop.f32.mrf.mxu0
        %2896 = vmatprep.mubr.bf16.mxu0 0
        %2897 = vmatmul.mubr.bf16.gmra.mxu0 %v2734
        %v2898 = vpop.f32.mrf.mxu0
        %v2899 = vadd.f32 0.0, %v2898
        %v2900 = vpop.f32.mrf.mxu0
        %v2901 = vpop.f32.mrf.mxu0
        %v2902 = vadd.f32 0.0, %v2901
        %v2903 = vpop.f32.mrf.mxu0
        %2904 = vmatprep.mubr.bf16.mxu0 0
        %2905 = vmatmul.mubr.bf16.gmra.mxu0 %v2737
        %v2906 = vpop.f32.mrf.mxu0
        %v2907 = vadd.f32 0.0, %v2906
        %v2908 = vpop.f32.mrf.mxu0
        %v2909 = vpop.f32.mrf.mxu0
        %v2910 = vadd.f32 0.0, %v2909
        %v2911 = vpop.f32.mrf.mxu0
        %2912 = vmatprep.mubr.bf16.mxu0 0
        %2913 = vmatmul.mubr.bf16.gmra.mxu0 %v2740
        %v2914 = vpop.f32.mrf.mxu0
        %v2915 = vadd.f32 0.0, %v2914
        %v2916 = vpop.f32.mrf.mxu0
        %v2917 = vpop.f32.mrf.mxu0
        %v2918 = vadd.f32 0.0, %v2917
        %v2919 = vpop.f32.mrf.mxu0
        %2920 = vmatprep.mubr.bf16.mxu0 0
        %2921 = vmatmul.mubr.bf16.gmra.mxu0 %v2743
        %v2922 = vpop.f32.mrf.mxu0
        %v2923 = vadd.f32 0.0, %v2922
        %v2924 = vpop.f32.mrf.mxu0
        %v2925 = vpop.f32.mrf.mxu0
        %v2926 = vadd.f32 0.0, %v2925
        %v2927 = vpop.f32.mrf.mxu0
        %2928 = vmatprep.mubr.bf16.mxu0 0
        %2929 = vmatmul.mubr.bf16.gmra.mxu0 %v2746
        %v2930 = vpop.f32.mrf.mxu0
        %v2931 = vadd.f32 0.0, %v2930
        %v2932 = vpop.f32.mrf.mxu0
        %v2933 = vpop.f32.mrf.mxu0
        %v2934 = vadd.f32 0.0, %v2933
        %v2935 = vpop.f32.mrf.mxu0
        %2936 = vmatprep.mubr.bf16.mxu0 0
        %2937 = vmatmul.mubr.bf16.gmra.mxu0 %v2749
        %v2938 = vpop.f32.mrf.mxu0
        %v2939 = vadd.f32 0.0, %v2938
        %v2940 = vpop.f32.mrf.mxu0
        %v2941 = vpop.f32.mrf.mxu0
        %v2942 = vadd.f32 0.0, %v2941
        %v2943 = vpop.f32.mrf.mxu0
        %2944 = vmatprep.mubr.bf16.mxu0 0
        %2945 = vmatmul.mubr.bf16.gmra.mxu0 %v2752
        %v2946 = vpop.f32.mrf.mxu0
        %v2947 = vadd.f32 0.0, %v2946
        %v2948 = vpop.f32.mrf.mxu0
        %v2949 = vpop.f32.mrf.mxu0
        %v2950 = vadd.f32 0.0, %v2949
        %v2951 = vpop.f32.mrf.mxu0
        %2952 = vmatprep.mubr.bf16.mxu0 0
        %2953 = vmatmul.mubr.bf16.gmra.mxu0 %v2755
        %v2954 = vpop.f32.mrf.mxu0
        %v2955 = vadd.f32 0.0, %v2954
        %v2956 = vpop.f32.mrf.mxu0
        %v2957 = vpop.f32.mrf.mxu0
        %v2958 = vadd.f32 0.0, %v2957
        %v2959 = vpop.f32.mrf.mxu0
        %2960 = vmatprep.mubr.bf16.mxu0 0
        %2961 = vmatmul.mubr.bf16.gmra.mxu0 %v2758
        %v2962 = vpop.f32.mrf.mxu0
        %v2963 = vadd.f32 0.0, %v2962
        %v2964 = vpop.f32.mrf.mxu0
        %v2965 = vpop.f32.mrf.mxu0
        %v2966 = vadd.f32 0.0, %v2965
        %v2967 = vpop.f32.mrf.mxu0
        %2968 = vmatprep.mubr.bf16.mxu0 0
        %2969 = vmatmul.mubr.bf16.gmra.mxu0 %v2761
        %v2970 = vpop.f32.mrf.mxu0
        %v2971 = vadd.f32 0.0, %v2970
        %v2972 = vpop.f32.mrf.mxu0
        %v2973 = vpop.f32.mrf.mxu0
        %v2974 = vadd.f32 0.0, %v2973
        %v2975 = vpop.f32.mrf.mxu0
        %2976 = vmatprep.mubr.bf16.mxu0 0
        %2977 = vmatmul.mubr.bf16.gmra.mxu0 %v2764
        %v2978 = vpop.f32.mrf.mxu0
        %v2979 = vadd.f32 0.0, %v2978
        %v2980 = vpop.f32.mrf.mxu0
        %v2981 = vpop.f32.mrf.mxu0
        %v2982 = vadd.f32 0.0, %v2981
        %v2983 = vpop.f32.mrf.mxu0
        %2984 = vmatprep.mubr.bf16.mxu0 0
        %2985 = vmatmul.mubr.bf16.gmra.mxu0 %v2767
        %v2986 = vpop.f32.mrf.mxu0
        %v2987 = vadd.f32 0.0, %v2986
        %v2988 = vpop.f32.mrf.mxu0
        %v2989 = vpop.f32.mrf.mxu0
        %v2990 = vadd.f32 0.0, %v2989
        %v2991 = vpop.f32.mrf.mxu0
        %2992 = vmatprep.mubr.bf16.mxu0 0
        %2993 = vmatmul.mubr.bf16.gmra.mxu0 %v2770
        %v2994 = vpop.f32.mrf.mxu0
        %v2995 = vadd.f32 0.0, %v2994
        %v2996 = vpop.f32.mrf.mxu0
        %v2997 = vpop.f32.mrf.mxu0
        %v2998 = vadd.f32 0.0, %v2997
        %v2999 = vpop.f32.mrf.mxu0
        %3000 = vmatprep.mubr.bf16.mxu0 0
        %3001 = vmatmul.mubr.bf16.gmra.mxu0 %v2773
        %v3002 = vpop.f32.mrf.mxu0
        %v3003 = vadd.f32 0.0, %v3002
        %v3004 = vpop.f32.mrf.mxu0
        %v3005 = vpop.f32.mrf.mxu0
        %v3006 = vadd.f32 0.0, %v3005
        %v3007 = vpop.f32.mrf.mxu0
        %3008 = vmatprep.mubr.bf16.mxu0 0
        %3009 = vmatmul.mubr.bf16.gmra.mxu0 %v2776
        %v3010 = vpop.f32.mrf.mxu0
        %v3011 = vadd.f32 0.0, %v3010
        %v3012 = vpop.f32.mrf.mxu0
        %v3013 = vpop.f32.mrf.mxu0
        %v3014 = vadd.f32 0.0, %v3013
        %v3015 = vpop.f32.mrf.mxu0
        %3016 = vmatprep.mubr.bf16.mxu0 0
        %3017 = vmatmul.mubr.bf16.gmra.mxu0 %v2779
        %v3018 = vpop.f32.mrf.mxu0
        %v3019 = vadd.f32 0.0, %v3018
        %v3020 = vpop.f32.mrf.mxu0
        %v3021 = vpop.f32.mrf.mxu0
        %v3022 = vadd.f32 0.0, %v3021
        %v3023 = vpop.f32.mrf.mxu0
        %3024 = vmatprep.mubr.bf16.mxu0 0
        %3025 = vmatmul.mubr.bf16.gmra.mxu0 %v2782
        %v3026 = vpop.f32.mrf.mxu0
        %v3027 = vadd.f32 0.0, %v3026
        %v3028 = vpop.f32.mrf.mxu0
        %v3029 = vpop.f32.mrf.mxu0
        %v3030 = vadd.f32 0.0, %v3029
        %v3031 = vpop.f32.mrf.mxu0
        %3032 = vmatprep.mubr.bf16.mxu0 0
        %3033 = vmatmul.mubr.bf16.gmra.mxu0 %v2785
        %v3034 = vpop.f32.mrf.mxu0
        %v3035 = vadd.f32 0.0, %v3034
        %v3036 = vpop.f32.mrf.mxu0
        %v3037 = vpop.f32.mrf.mxu0
        %v3038 = vadd.f32 0.0, %v3037
        %v3039 = vpop.f32.mrf.mxu0
        %3040 = vmatprep.mubr.bf16.mxu0 0
        %3041 = vmatmul.mubr.bf16.gmra.mxu0 %v2788
        %v3042 = vpop.f32.mrf.mxu0
        %v3043 = vadd.f32 0.0, %v3042
        %v3044 = vpop.f32.mrf.mxu0
        %v3045 = vpop.f32.mrf.mxu0
        %v3046 = vadd.f32 0.0, %v3045
        %v3047 = vpop.f32.mrf.mxu0
        %3048 = vmatprep.mubr.bf16.mxu0 0
        %3049 = vmatmul.mubr.bf16.gmra.mxu0 %v2791
        %v3050 = vpop.f32.mrf.mxu0
        %v3051 = vadd.f32 0.0, %v3050
        %v3052 = vpop.f32.mrf.mxu0
        %v3053 = vpop.f32.mrf.mxu0
        %v3054 = vadd.f32 0.0, %v3053
        %v3055 = vpop.f32.mrf.mxu0
        %3056 = vmatprep.mubr.bf16.mxu0 0
        %3057 = vmatmul.mubr.bf16.gmra.mxu0 %v2794
        %v3058 = vpop.f32.mrf.mxu0
        %v3059 = vadd.f32 0.0, %v3058
        %v3060 = vpop.f32.mrf.mxu0
        %v3061 = vpop.f32.mrf.mxu0
        %v3062 = vadd.f32 0.0, %v3061
        %v3063 = vpop.f32.mrf.mxu0
        %3064 = vmatprep.mubr.bf16.mxu0 0
        %3065 = vmatmul.mubr.bf16.gmra.mxu0 %v2797
        %v3066 = vpop.f32.mrf.mxu0
        %v3067 = vadd.f32 0.0, %v3066
        %v3068 = vpop.f32.mrf.mxu0
        %v3069 = vpop.f32.mrf.mxu0
        %v3070 = vadd.f32 0.0, %v3069
        %v3071 = vpop.f32.mrf.mxu0
        %3072 = vmatprep.mubr.bf16.mxu0 0
        %3073 = vmatmul.mubr.bf16.gmra.mxu0 %v2800
        %v3074 = vpop.f32.mrf.mxu0
        %v3075 = vadd.f32 0.0, %v3074
        %v3076 = vpop.f32.mrf.mxu0
        %v3077 = vpop.f32.mrf.mxu0
        %v3078 = vadd.f32 0.0, %v3077
        %v3079 = vpop.f32.mrf.mxu0
        %3080 = vmatprep.mubr.bf16.mxu0 0
        %3081 = vmatmul.mubr.bf16.gmra.mxu0 %v2803
        %v3082 = vpop.f32.mrf.mxu0
        %v3083 = vadd.f32 0.0, %v3082
        %v3084 = vpop.f32.mrf.mxu0
        %v3085 = vpop.f32.mrf.mxu0
        %v3086 = vadd.f32 0.0, %v3085
        %v3087 = vpop.f32.mrf.mxu0
        %3088 = vmatprep.mubr.bf16.mxu0 0
        %3089 = vmatmul.mubr.bf16.gmra.mxu0 %v2806
        %v3090 = vpop.f32.mrf.mxu0
        %v3091 = vadd.f32 0.0, %v3090
        %v3092 = vpop.f32.mrf.mxu0
        %v3093 = vpop.f32.mrf.mxu0
        %v3094 = vadd.f32 0.0, %v3093
        %v3095 = vpop.f32.mrf.mxu0
        %3096 = vdwg.mxu0
        %v3097 = vadd.f32 %v2497, %v2843
        %v3098 = vadd.f32 %v2498, %v2846
        %v3099 = vadd.f32 %v2499, %v2851
        %v3100 = vadd.f32 %v2500, %v2854
        %v3101 = vadd.f32 %v2501, %v2859
        %v3102 = vadd.f32 %v2502, %v2862
        %v3103 = vadd.f32 %v2503, %v2867
        %v3104 = vadd.f32 %v2504, %v2870
        %v3105 = vadd.f32 %v2505, %v2875
        %v3106 = vadd.f32 %v2506, %v2878
        %v3107 = vadd.f32 %v2507, %v2883
        %v3108 = vadd.f32 %v2508, %v2886
        %v3109 = vadd.f32 %v2509, %v2891
        %v3110 = vadd.f32 %v2510, %v2894
        %v3111 = vadd.f32 %v2511, %v2899
        %v3112 = vadd.f32 %v2512, %v2902
        %v3113 = vadd.f32 %v2513, %v2907
        %v3114 = vadd.f32 %v2514, %v2910
        %v3115 = vadd.f32 %v2515, %v2915
        %v3116 = vadd.f32 %v2516, %v2918
        %v3117 = vadd.f32 %v2517, %v2923
        %v3118 = vadd.f32 %v2518, %v2926
        %v3119 = vadd.f32 %v2519, %v2931
        %v3120 = vadd.f32 %v2520, %v2934
        %v3121 = vadd.f32 %v2521, %v2939
        %v3122 = vadd.f32 %v2522, %v2942
        %v3123 = vadd.f32 %v2523, %v2947
        %v3124 = vadd.f32 %v2524, %v2950
        %v3125 = vadd.f32 %v2525, %v2955
        %v3126 = vadd.f32 %v2526, %v2958
        %v3127 = vadd.f32 %v2527, %v2963
        %v3128 = vadd.f32 %v2528, %v2966
        %v3129 = vadd.f32 %v2529, %v2971
        %v3130 = vadd.f32 %v2530, %v2974
        %v3131 = vadd.f32 %v2531, %v2979
        %v3132 = vadd.f32 %v2532, %v2982
        %v3133 = vadd.f32 %v2533, %v2987
        %v3134 = vadd.f32 %v2534, %v2990
        %v3135 = vadd.f32 %v2535, %v2995
        %v3136 = vadd.f32 %v2536, %v2998
        %v3137 = vadd.f32 %v2537, %v3003
        %v3138 = vadd.f32 %v2538, %v3006
        %v3139 = vadd.f32 %v2539, %v3011
        %v3140 = vadd.f32 %v2540, %v3014
        %v3141 = vadd.f32 %v2541, %v3019
        %v3142 = vadd.f32 %v2542, %v3022
        %v3143 = vadd.f32 %v2543, %v3027
        %v3144 = vadd.f32 %v2544, %v3030
        %v3145 = vadd.f32 %v2545, %v3035
        %v3146 = vadd.f32 %v2546, %v3038
        %v3147 = vadd.f32 %v2547, %v3043
        %v3148 = vadd.f32 %v2548, %v3046
        %v3149 = vadd.f32 %v2549, %v3051
        %v3150 = vadd.f32 %v2550, %v3054
        %v3151 = vadd.f32 %v2551, %v3059
        %v3152 = vadd.f32 %v2552, %v3062
        %v3153 = vadd.f32 %v2553, %v3067
        %v3154 = vadd.f32 %v2554, %v3070
        %v3155 = vadd.f32 %v2555, %v3075
        %v3156 = vadd.f32 %v2556, %v3078
        %v3157 = vadd.f32 %v2557, %v3083
        %v3158 = vadd.f32 %v2558, %v3086
        %v3159 = vadd.f32 %v2559, %v3091
        %v3160 = vadd.f32 %v2560, %v3094
        %s3161 = scalar_lea.vmem %s2, 40
        %v3162 = vld [vmem:[%s3161] sm:$0xf]
        %v3163 = vld [vmem:[%s3161 + $0x4] sm:$0xf]
        %vm3164 = vcmask 1045504
        %v3165 = vrot.slane %v579, 2
        %v3166 = vrot.slane %v580, 2
        %v3167 = vsel %vm3164, %v3165, %v3166
        %v3168 = vrot.slane %v581, 2
        %v3169 = vsel %vm3164, %v3166, %v3168
        %v3170 = vrot.slane %v582, 2
        %v3171 = vsel %vm3164, %v3168, %v3170
        %v3172 = vrot.slane %v583, 2
        %v3173 = vsel %vm3164, %v3170, %v3172
        %v3174 = vrot.slane %v584, 2
        %v3175 = vsel %vm3164, %v3172, %v3174
        %v3176 = vrot.slane %v585, 2
        %v3177 = vsel %vm3164, %v3174, %v3176
        %v3178 = vrot.slane %v586, 2
        %v3179 = vsel %vm3164, %v3176, %v3178
        %v3180 = vrot.slane %v587, 2
        %v3181 = vsel %vm3164, %v3178, %v3180
        %v3182 = vrot.slane %v588, 2
        %v3183 = vsel %vm3164, %v3180, %v3182
        %v3184 = vrot.slane %v589, 2
        %v3185 = vsel %vm3164, %v3182, %v3184
        %v3186 = vrot.slane %v590, 2
        %v3187 = vsel %vm3164, %v3184, %v3186
        %v3188 = vrot.slane %v591, 2
        %v3189 = vsel %vm3164, %v3186, %v3188
        %v3190 = vrot.slane %v592, 2
        %v3191 = vsel %vm3164, %v3188, %v3190
        %v3192 = vrot.slane %v593, 2
        %v3193 = vsel %vm3164, %v3190, %v3192
        %v3194 = vrot.slane %v594, 2
        %v3195 = vsel %vm3164, %v3192, %v3194
        %v3196 = vrot.slane %v595, 2
        %v3197 = vsel %vm3164, %v3194, %v3196
        %v3198 = vrot.slane %v596, 2
        %v3199 = vsel %vm3164, %v3196, %v3198
        %v3200 = vrot.slane %v597, 2
        %v3201 = vsel %vm3164, %v3198, %v3200
        %v3202 = vrot.slane %v598, 2
        %v3203 = vsel %vm3164, %v3200, %v3202
        %v3204 = vrot.slane %v599, 2
        %v3205 = vsel %vm3164, %v3202, %v3204
        %v3206 = vrot.slane %v600, 2
        %v3207 = vsel %vm3164, %v3204, %v3206
        %v3208 = vrot.slane %v601, 2
        %v3209 = vsel %vm3164, %v3206, %v3208
        %v3210 = vrot.slane %v602, 2
        %v3211 = vsel %vm3164, %v3208, %v3210
        %v3212 = vrot.slane %v603, 2
        %v3213 = vsel %vm3164, %v3210, %v3212
        %v3214 = vrot.slane %v604, 2
        %v3215 = vsel %vm3164, %v3212, %v3214
        %v3216 = vrot.slane %v605, 2
        %v3217 = vsel %vm3164, %v3214, %v3216
        %v3218 = vrot.slane %v606, 2
        %v3219 = vsel %vm3164, %v3216, %v3218
        %v3220 = vrot.slane %v607, 2
        %v3221 = vsel %vm3164, %v3218, %v3220
        %v3222 = vrot.slane %v608, 2
        %v3223 = vsel %vm3164, %v3220, %v3222
        %v3224 = vrot.slane %v609, 2
        %v3225 = vsel %vm3164, %v3222, %v3224
        %v3226 = vrot.slane %v2185, 2
        %v3227 = vsel %vm3164, %v3224, %v3226
        %v3228 = vrot.slane %v2186, 2
        %v3229 = vsel %vm3164, %v3226, %v3228
        %v3232 = vunpack.c.l.b16 %v3162
        %v3233 = vunpack.c.l.b16 %v3163
        %v3234 = vpack.c.b16 %v3233, %v3232
        %v3237 = vsel %vm883, %v3167, 0
        %v3240 = vsel %vm883, %v3169, 0
        %v3243 = vsel %vm883, %v3171, 0
        %v3246 = vsel %vm883, %v3173, 0
        %v3249 = vsel %vm883, %v3175, 0
        %v3252 = vsel %vm883, %v3177, 0
        %v3255 = vsel %vm883, %v3179, 0
        %v3258 = vsel %vm883, %v3181, 0
        %v3261 = vsel %vm883, %v3183, 0
        %v3264 = vsel %vm883, %v3185, 0
        %v3267 = vsel %vm883, %v3187, 0
        %v3270 = vsel %vm883, %v3189, 0
        %v3273 = vsel %vm883, %v3191, 0
        %v3276 = vsel %vm883, %v3193, 0
        %v3279 = vsel %vm883, %v3195, 0
        %v3282 = vsel %vm883, %v3197, 0
        %v3285 = vsel %vm883, %v3199, 0
        %v3288 = vsel %vm883, %v3201, 0
        %v3291 = vsel %vm883, %v3203, 0
        %v3294 = vsel %vm883, %v3205, 0
        %v3297 = vsel %vm883, %v3207, 0
        %v3300 = vsel %vm883, %v3209, 0
        %v3303 = vsel %vm883, %v3211, 0
        %v3306 = vsel %vm883, %v3213, 0
        %v3309 = vsel %vm883, %v3215, 0
        %v3312 = vsel %vm883, %v3217, 0
        %v3315 = vsel %vm883, %v3219, 0
        %v3318 = vsel %vm883, %v3221, 0
        %v3321 = vsel %vm883, %v3223, 0
        %v3324 = vsel %vm883, %v3225, 0
        %v3327 = vsel %vm883, %v3227, 0
        %v3330 = vsel %vm883, %v3229, 0
        %3332 = vmatprep.subr.bf16.mxu0 0
        %3333 = vmatpush1.bf16.msra.mxu0 0
        %3334 = vmatprep.subr.bf16.mxu0 0
        %3335 = vmatpush1.bf16.msra.mxu0 0
        %3336 = vmatprep.subr.bf16.mxu0 0
        %3337 = vmatpush1.bf16.msra.mxu0 0
        %3338 = vmatprep.subr.bf16.mxu0 0
        %3339 = vmatpush1.bf16.msra.mxu0 0
        %3340 = vmatprep.subr.bf16.mxu0 0
        %3341 = vmatpush1.bf16.msra.mxu0 0
        %3342 = vmatprep.subr.bf16.mxu0 0
        %3343 = vmatpush1.bf16.msra.mxu0 0
        %3344 = vmatprep.subr.bf16.mxu0 0
        %3345 = vmatpush1.bf16.msra.mxu0 0
        %3346 = vmatprep.subr.bf16.mxu0 0
        %3347 = vmatpush1.bf16.msra.mxu0 %v3234
        %3348 = vmatprep.subr.bf16.mxu0 0
        %3349 = vmatpush2.bf16.msra.mxu0 0
        %3350 = vmatprep.subr.bf16.mxu0 0
        %3351 = vmatpush2.bf16.msra.mxu0 0
        %3352 = vmatprep.subr.bf16.mxu0 0
        %3353 = vmatpush2.bf16.msra.mxu0 0
        %3354 = vmatprep.subr.bf16.mxu0 0
        %3355 = vmatpush2.bf16.msra.mxu0 0
        %3356 = vmatprep.subr.bf16.mxu0 0
        %3357 = vmatpush2.bf16.msra.mxu0 0
        %3358 = vmatprep.subr.bf16.mxu0 0
        %3359 = vmatpush2.bf16.msra.mxu0 0
        %3360 = vmatprep.subr.bf16.mxu0 0
        %3361 = vmatpush2.bf16.msra.mxu0 0
        %3362 = vmatprep.subr.bf16.mxu0 0
        %3363 = vmatpush2.bf16.msra.mxu0 0
        %3364 = vmatprep.mubr.bf16.mxu0 0
        %3365 = vmatmul.mubr.bf16.gmra.mxu0 %v3237
        %v3366 = vpop.f32.mrf.mxu0
        %v3367 = vadd.f32 0.0, %v3366
        %v3368 = vpop.f32.mrf.mxu0
        %v3369 = vpop.f32.mrf.mxu0
        %v3370 = vadd.f32 0.0, %v3369
        %v3371 = vpop.f32.mrf.mxu0
        %3372 = vmatprep.mubr.bf16.mxu0 0
        %3373 = vmatmul.mubr.bf16.gmra.mxu0 %v3240
        %v3374 = vpop.f32.mrf.mxu0
        %v3375 = vadd.f32 0.0, %v3374
        %v3376 = vpop.f32.mrf.mxu0
        %v3377 = vpop.f32.mrf.mxu0
        %v3378 = vadd.f32 0.0, %v3377
        %v3379 = vpop.f32.mrf.mxu0
        %3380 = vmatprep.mubr.bf16.mxu0 0
        %3381 = vmatmul.mubr.bf16.gmra.mxu0 %v3243
        %v3382 = vpop.f32.mrf.mxu0
        %v3383 = vadd.f32 0.0, %v3382
        %v3384 = vpop.f32.mrf.mxu0
        %v3385 = vpop.f32.mrf.mxu0
        %v3386 = vadd.f32 0.0, %v3385
        %v3387 = vpop.f32.mrf.mxu0
        %3388 = vmatprep.mubr.bf16.mxu0 0
        %3389 = vmatmul.mubr.bf16.gmra.mxu0 %v3246
        %v3390 = vpop.f32.mrf.mxu0
        %v3391 = vadd.f32 0.0, %v3390
        %v3392 = vpop.f32.mrf.mxu0
        %v3393 = vpop.f32.mrf.mxu0
        %v3394 = vadd.f32 0.0, %v3393
        %v3395 = vpop.f32.mrf.mxu0
        %3396 = vmatprep.mubr.bf16.mxu0 0
        %3397 = vmatmul.mubr.bf16.gmra.mxu0 %v3249
        %v3398 = vpop.f32.mrf.mxu0
        %v3399 = vadd.f32 0.0, %v3398
        %v3400 = vpop.f32.mrf.mxu0
        %v3401 = vpop.f32.mrf.mxu0
        %v3402 = vadd.f32 0.0, %v3401
        %v3403 = vpop.f32.mrf.mxu0
        %3404 = vmatprep.mubr.bf16.mxu0 0
        %3405 = vmatmul.mubr.bf16.gmra.mxu0 %v3252
        %v3406 = vpop.f32.mrf.mxu0
        %v3407 = vadd.f32 0.0, %v3406
        %v3408 = vpop.f32.mrf.mxu0
        %v3409 = vpop.f32.mrf.mxu0
        %v3410 = vadd.f32 0.0, %v3409
        %v3411 = vpop.f32.mrf.mxu0
        %3412 = vmatprep.mubr.bf16.mxu0 0
        %3413 = vmatmul.mubr.bf16.gmra.mxu0 %v3255
        %v3414 = vpop.f32.mrf.mxu0
        %v3415 = vadd.f32 0.0, %v3414
        %v3416 = vpop.f32.mrf.mxu0
        %v3417 = vpop.f32.mrf.mxu0
        %v3418 = vadd.f32 0.0, %v3417
        %v3419 = vpop.f32.mrf.mxu0
        %3420 = vmatprep.mubr.bf16.mxu0 0
        %3421 = vmatmul.mubr.bf16.gmra.mxu0 %v3258
        %v3422 = vpop.f32.mrf.mxu0
        %v3423 = vadd.f32 0.0, %v3422
        %v3424 = vpop.f32.mrf.mxu0
        %v3425 = vpop.f32.mrf.mxu0
        %v3426 = vadd.f32 0.0, %v3425
        %v3427 = vpop.f32.mrf.mxu0
        %3428 = vmatprep.mubr.bf16.mxu0 0
        %3429 = vmatmul.mubr.bf16.gmra.mxu0 %v3261
        %v3430 = vpop.f32.mrf.mxu0
        %v3431 = vadd.f32 0.0, %v3430
        %v3432 = vpop.f32.mrf.mxu0
        %v3433 = vpop.f32.mrf.mxu0
        %v3434 = vadd.f32 0.0, %v3433
        %v3435 = vpop.f32.mrf.mxu0
        %3436 = vmatprep.mubr.bf16.mxu0 0
        %3437 = vmatmul.mubr.bf16.gmra.mxu0 %v3264
        %v3438 = vpop.f32.mrf.mxu0
        %v3439 = vadd.f32 0.0, %v3438
        %v3440 = vpop.f32.mrf.mxu0
        %v3441 = vpop.f32.mrf.mxu0
        %v3442 = vadd.f32 0.0, %v3441
        %v3443 = vpop.f32.mrf.mxu0
        %3444 = vmatprep.mubr.bf16.mxu0 0
        %3445 = vmatmul.mubr.bf16.gmra.mxu0 %v3267
        %v3446 = vpop.f32.mrf.mxu0
        %v3447 = vadd.f32 0.0, %v3446
        %v3448 = vpop.f32.mrf.mxu0
        %v3449 = vpop.f32.mrf.mxu0
        %v3450 = vadd.f32 0.0, %v3449
        %v3451 = vpop.f32.mrf.mxu0
        %3452 = vmatprep.mubr.bf16.mxu0 0
        %3453 = vmatmul.mubr.bf16.gmra.mxu0 %v3270
        %v3454 = vpop.f32.mrf.mxu0
        %v3455 = vadd.f32 0.0, %v3454
        %v3456 = vpop.f32.mrf.mxu0
        %v3457 = vpop.f32.mrf.mxu0
        %v3458 = vadd.f32 0.0, %v3457
        %v3459 = vpop.f32.mrf.mxu0
        %3460 = vmatprep.mubr.bf16.mxu0 0
        %3461 = vmatmul.mubr.bf16.gmra.mxu0 %v3273
        %v3462 = vpop.f32.mrf.mxu0
        %v3463 = vadd.f32 0.0, %v3462
        %v3464 = vpop.f32.mrf.mxu0
        %v3465 = vpop.f32.mrf.mxu0
        %v3466 = vadd.f32 0.0, %v3465
        %v3467 = vpop.f32.mrf.mxu0
        %3468 = vmatprep.mubr.bf16.mxu0 0
        %3469 = vmatmul.mubr.bf16.gmra.mxu0 %v3276
        %v3470 = vpop.f32.mrf.mxu0
        %v3471 = vadd.f32 0.0, %v3470
        %v3472 = vpop.f32.mrf.mxu0
        %v3473 = vpop.f32.mrf.mxu0
        %v3474 = vadd.f32 0.0, %v3473
        %v3475 = vpop.f32.mrf.mxu0
        %3476 = vmatprep.mubr.bf16.mxu0 0
        %3477 = vmatmul.mubr.bf16.gmra.mxu0 %v3279
        %v3478 = vpop.f32.mrf.mxu0
        %v3479 = vadd.f32 0.0, %v3478
        %v3480 = vpop.f32.mrf.mxu0
        %v3481 = vpop.f32.mrf.mxu0
        %v3482 = vadd.f32 0.0, %v3481
        %v3483 = vpop.f32.mrf.mxu0
        %3484 = vmatprep.mubr.bf16.mxu0 0
        %3485 = vmatmul.mubr.bf16.gmra.mxu0 %v3282
        %v3486 = vpop.f32.mrf.mxu0
        %v3487 = vadd.f32 0.0, %v3486
        %v3488 = vpop.f32.mrf.mxu0
        %v3489 = vpop.f32.mrf.mxu0
        %v3490 = vadd.f32 0.0, %v3489
        %v3491 = vpop.f32.mrf.mxu0
        %3492 = vmatprep.mubr.bf16.mxu0 0
        %3493 = vmatmul.mubr.bf16.gmra.mxu0 %v3285
        %v3494 = vpop.f32.mrf.mxu0
        %v3495 = vadd.f32 0.0, %v3494
        %v3496 = vpop.f32.mrf.mxu0
        %v3497 = vpop.f32.mrf.mxu0
        %v3498 = vadd.f32 0.0, %v3497
        %v3499 = vpop.f32.mrf.mxu0
        %3500 = vmatprep.mubr.bf16.mxu0 0
        %3501 = vmatmul.mubr.bf16.gmra.mxu0 %v3288
        %v3502 = vpop.f32.mrf.mxu0
        %v3503 = vadd.f32 0.0, %v3502
        %v3504 = vpop.f32.mrf.mxu0
        %v3505 = vpop.f32.mrf.mxu0
        %v3506 = vadd.f32 0.0, %v3505
        %v3507 = vpop.f32.mrf.mxu0
        %3508 = vmatprep.mubr.bf16.mxu0 0
        %3509 = vmatmul.mubr.bf16.gmra.mxu0 %v3291
        %v3510 = vpop.f32.mrf.mxu0
        %v3511 = vadd.f32 0.0, %v3510
        %v3512 = vpop.f32.mrf.mxu0
        %v3513 = vpop.f32.mrf.mxu0
        %v3514 = vadd.f32 0.0, %v3513
        %v3515 = vpop.f32.mrf.mxu0
        %3516 = vmatprep.mubr.bf16.mxu0 0
        %3517 = vmatmul.mubr.bf16.gmra.mxu0 %v3294
        %v3518 = vpop.f32.mrf.mxu0
        %v3519 = vadd.f32 0.0, %v3518
        %v3520 = vpop.f32.mrf.mxu0
        %v3521 = vpop.f32.mrf.mxu0
        %v3522 = vadd.f32 0.0, %v3521
        %v3523 = vpop.f32.mrf.mxu0
        %3524 = vmatprep.mubr.bf16.mxu0 0
        %3525 = vmatmul.mubr.bf16.gmra.mxu0 %v3297
        %v3526 = vpop.f32.mrf.mxu0
        %v3527 = vadd.f32 0.0, %v3526
        %v3528 = vpop.f32.mrf.mxu0
        %v3529 = vpop.f32.mrf.mxu0
        %v3530 = vadd.f32 0.0, %v3529
        %v3531 = vpop.f32.mrf.mxu0
        %3532 = vmatprep.mubr.bf16.mxu0 0
        %3533 = vmatmul.mubr.bf16.gmra.mxu0 %v3300
        %v3534 = vpop.f32.mrf.mxu0
        %v3535 = vadd.f32 0.0, %v3534
        %v3536 = vpop.f32.mrf.mxu0
        %v3537 = vpop.f32.mrf.mxu0
        %v3538 = vadd.f32 0.0, %v3537
        %v3539 = vpop.f32.mrf.mxu0
        %3540 = vmatprep.mubr.bf16.mxu0 0
        %3541 = vmatmul.mubr.bf16.gmra.mxu0 %v3303
        %v3542 = vpop.f32.mrf.mxu0
        %v3543 = vadd.f32 0.0, %v3542
        %v3544 = vpop.f32.mrf.mxu0
        %v3545 = vpop.f32.mrf.mxu0
        %v3546 = vadd.f32 0.0, %v3545
        %v3547 = vpop.f32.mrf.mxu0
        %3548 = vmatprep.mubr.bf16.mxu0 0
        %3549 = vmatmul.mubr.bf16.gmra.mxu0 %v3306
        %v3550 = vpop.f32.mrf.mxu0
        %v3551 = vadd.f32 0.0, %v3550
        %v3552 = vpop.f32.mrf.mxu0
        %v3553 = vpop.f32.mrf.mxu0
        %v3554 = vadd.f32 0.0, %v3553
        %v3555 = vpop.f32.mrf.mxu0
        %3556 = vmatprep.mubr.bf16.mxu0 0
        %3557 = vmatmul.mubr.bf16.gmra.mxu0 %v3309
        %v3558 = vpop.f32.mrf.mxu0
        %v3559 = vadd.f32 0.0, %v3558
        %v3560 = vpop.f32.mrf.mxu0
        %v3561 = vpop.f32.mrf.mxu0
        %v3562 = vadd.f32 0.0, %v3561
        %v3563 = vpop.f32.mrf.mxu0
        %3564 = vmatprep.mubr.bf16.mxu0 0
        %3565 = vmatmul.mubr.bf16.gmra.mxu0 %v3312
        %v3566 = vpop.f32.mrf.mxu0
        %v3567 = vadd.f32 0.0, %v3566
        %v3568 = vpop.f32.mrf.mxu0
        %v3569 = vpop.f32.mrf.mxu0
        %v3570 = vadd.f32 0.0, %v3569
        %v3571 = vpop.f32.mrf.mxu0
        %3572 = vmatprep.mubr.bf16.mxu0 0
        %3573 = vmatmul.mubr.bf16.gmra.mxu0 %v3315
        %v3574 = vpop.f32.mrf.mxu0
        %v3575 = vadd.f32 0.0, %v3574
        %v3576 = vpop.f32.mrf.mxu0
        %v3577 = vpop.f32.mrf.mxu0
        %v3578 = vadd.f32 0.0, %v3577
        %v3579 = vpop.f32.mrf.mxu0
        %3580 = vmatprep.mubr.bf16.mxu0 0
        %3581 = vmatmul.mubr.bf16.gmra.mxu0 %v3318
        %v3582 = vpop.f32.mrf.mxu0
        %v3583 = vadd.f32 0.0, %v3582
        %v3584 = vpop.f32.mrf.mxu0
        %v3585 = vpop.f32.mrf.mxu0
        %v3586 = vadd.f32 0.0, %v3585
        %v3587 = vpop.f32.mrf.mxu0
        %3588 = vmatprep.mubr.bf16.mxu0 0
        %3589 = vmatmul.mubr.bf16.gmra.mxu0 %v3321
        %v3590 = vpop.f32.mrf.mxu0
        %v3591 = vadd.f32 0.0, %v3590
        %v3592 = vpop.f32.mrf.mxu0
        %v3593 = vpop.f32.mrf.mxu0
        %v3594 = vadd.f32 0.0, %v3593
        %v3595 = vpop.f32.mrf.mxu0
        %3596 = vmatprep.mubr.bf16.mxu0 0
        %3597 = vmatmul.mubr.bf16.gmra.mxu0 %v3324
        %v3598 = vpop.f32.mrf.mxu0
        %v3599 = vadd.f32 0.0, %v3598
        %v3600 = vpop.f32.mrf.mxu0
        %v3601 = vpop.f32.mrf.mxu0
        %v3602 = vadd.f32 0.0, %v3601
        %v3603 = vpop.f32.mrf.mxu0
        %3604 = vmatprep.mubr.bf16.mxu0 0
        %3605 = vmatmul.mubr.bf16.gmra.mxu0 %v3327
        %v3606 = vpop.f32.mrf.mxu0
        %v3607 = vadd.f32 0.0, %v3606
        %v3608 = vpop.f32.mrf.mxu0
        %v3609 = vpop.f32.mrf.mxu0
        %v3610 = vadd.f32 0.0, %v3609
        %v3611 = vpop.f32.mrf.mxu0
        %3612 = vmatprep.mubr.bf16.mxu0 0
        %3613 = vmatmul.mubr.bf16.gmra.mxu0 %v3330
        %v3614 = vpop.f32.mrf.mxu0
        %v3615 = vadd.f32 0.0, %v3614
        %v3616 = vpop.f32.mrf.mxu0
        %v3617 = vpop.f32.mrf.mxu0
        %v3618 = vadd.f32 0.0, %v3617
        %v3619 = vpop.f32.mrf.mxu0
        %3620 = vdwg.mxu0
        %v3621 = vadd.f32 %v3097, %v3367
        %v3622 = vadd.f32 %v3098, %v3370
        %v3623 = vadd.f32 %v3099, %v3375
        %v3624 = vadd.f32 %v3100, %v3378
        %v3625 = vadd.f32 %v3101, %v3383
        %v3626 = vadd.f32 %v3102, %v3386
        %v3627 = vadd.f32 %v3103, %v3391
        %v3628 = vadd.f32 %v3104, %v3394
        %v3629 = vadd.f32 %v3105, %v3399
        %v3630 = vadd.f32 %v3106, %v3402
        %v3631 = vadd.f32 %v3107, %v3407
        %v3632 = vadd.f32 %v3108, %v3410
        %v3633 = vadd.f32 %v3109, %v3415
        %v3634 = vadd.f32 %v3110, %v3418
        %v3635 = vadd.f32 %v3111, %v3423
        %v3636 = vadd.f32 %v3112, %v3426
        %v3637 = vadd.f32 %v3113, %v3431
        %v3638 = vadd.f32 %v3114, %v3434
        %v3639 = vadd.f32 %v3115, %v3439
        %v3640 = vadd.f32 %v3116, %v3442
        %v3641 = vadd.f32 %v3117, %v3447
        %v3642 = vadd.f32 %v3118, %v3450
        %v3643 = vadd.f32 %v3119, %v3455
        %v3644 = vadd.f32 %v3120, %v3458
        %v3645 = vadd.f32 %v3121, %v3463
        %v3646 = vadd.f32 %v3122, %v3466
        %v3647 = vadd.f32 %v3123, %v3471
        %v3648 = vadd.f32 %v3124, %v3474
        %v3649 = vadd.f32 %v3125, %v3479
        %v3650 = vadd.f32 %v3126, %v3482
        %v3651 = vadd.f32 %v3127, %v3487
        %v3652 = vadd.f32 %v3128, %v3490
        %v3653 = vadd.f32 %v3129, %v3495
        %v3654 = vadd.f32 %v3130, %v3498
        %v3655 = vadd.f32 %v3131, %v3503
        %v3656 = vadd.f32 %v3132, %v3506
        %v3657 = vadd.f32 %v3133, %v3511
        %v3658 = vadd.f32 %v3134, %v3514
        %v3659 = vadd.f32 %v3135, %v3519
        %v3660 = vadd.f32 %v3136, %v3522
        %v3661 = vadd.f32 %v3137, %v3527
        %v3662 = vadd.f32 %v3138, %v3530
        %v3663 = vadd.f32 %v3139, %v3535
        %v3664 = vadd.f32 %v3140, %v3538
        %v3665 = vadd.f32 %v3141, %v3543
        %v3666 = vadd.f32 %v3142, %v3546
        %v3667 = vadd.f32 %v3143, %v3551
        %v3668 = vadd.f32 %v3144, %v3554
        %v3669 = vadd.f32 %v3145, %v3559
        %v3670 = vadd.f32 %v3146, %v3562
        %v3671 = vadd.f32 %v3147, %v3567
        %v3672 = vadd.f32 %v3148, %v3570
        %v3673 = vadd.f32 %v3149, %v3575
        %v3674 = vadd.f32 %v3150, %v3578
        %v3675 = vadd.f32 %v3151, %v3583
        %v3676 = vadd.f32 %v3152, %v3586
        %v3677 = vadd.f32 %v3153, %v3591
        %v3678 = vadd.f32 %v3154, %v3594
        %v3679 = vadd.f32 %v3155, %v3599
        %v3680 = vadd.f32 %v3156, %v3602
        %v3681 = vadd.f32 %v3157, %v3607
        %v3682 = vadd.f32 %v3158, %v3610
        %v3683 = vadd.f32 %v3159, %v3615
        %v3684 = vadd.f32 %v3160, %v3618
        %v3685 = vpack.c.bf16 %v576, %v575
        %v3686 = vpack.c.bf16 %v577, %v577
        %s3687 = scalar_lea.vmem %s2, 48
        %v3688 = vld [vmem:[%s3687] sm:$0xf]
        %v3689 = vld [vmem:[%s3687 + $0x4] sm:$0xf]
        %v3692 = vrot.slane %v3685, 2
        %v3693 = vsel %vm3164, %v3226, %v3692
        %v3694 = vrot.slane %v3686, 2
        %v3695 = vsel %vm3164, %v3692, %v3694
        %v3698 = vunpack.c.l.b16 %v3688
        %v3699 = vunpack.c.l.b16 %v3689
        %v3700 = vpack.c.b16 %v3699, %v3698
        %v3703 = vsel %vm883, %v3693, 0
        %v3706 = vsel %vm883, %v3695, 0
        %3708 = vmatprep.subr.bf16.mxu0 0
        %3709 = vmatpush1.bf16.msra.mxu0 0
        %3710 = vmatprep.subr.bf16.mxu0 0
        %3711 = vmatpush1.bf16.msra.mxu0 0
        %3712 = vmatprep.subr.bf16.mxu0 0
        %3713 = vmatpush1.bf16.msra.mxu0 0
        %3714 = vmatprep.subr.bf16.mxu0 0
        %3715 = vmatpush1.bf16.msra.mxu0 0
        %3716 = vmatprep.subr.bf16.mxu0 0
        %3717 = vmatpush1.bf16.msra.mxu0 0
        %3718 = vmatprep.subr.bf16.mxu0 0
        %3719 = vmatpush1.bf16.msra.mxu0 0
        %3720 = vmatprep.subr.bf16.mxu0 0
        %3721 = vmatpush1.bf16.msra.mxu0 0
        %3722 = vmatprep.subr.bf16.mxu0 0
        %3723 = vmatpush1.bf16.msra.mxu0 %v3700
        %3724 = vmatprep.subr.bf16.mxu0 0
        %3725 = vmatpush2.bf16.msra.mxu0 0
        %3726 = vmatprep.subr.bf16.mxu0 0
        %3727 = vmatpush2.bf16.msra.mxu0 0
        %3728 = vmatprep.subr.bf16.mxu0 0
        %3729 = vmatpush2.bf16.msra.mxu0 0
        %3730 = vmatprep.subr.bf16.mxu0 0
        %3731 = vmatpush2.bf16.msra.mxu0 0
        %3732 = vmatprep.subr.bf16.mxu0 0
        %3733 = vmatpush2.bf16.msra.mxu0 0
        %3734 = vmatprep.subr.bf16.mxu0 0
        %3735 = vmatpush2.bf16.msra.mxu0 0
        %3736 = vmatprep.subr.bf16.mxu0 0
        %3737 = vmatpush2.bf16.msra.mxu0 0
        %3738 = vmatprep.subr.bf16.mxu0 0
        %3739 = vmatpush2.bf16.msra.mxu0 0
        %3740 = vmatprep.mubr.bf16.mxu0 0
        %3741 = vmatmul.mubr.bf16.gmra.mxu0 %v3240
        %v3742 = vpop.f32.mrf.mxu0
        %v3743 = vadd.f32 0.0, %v3742
        %v3744 = vpop.f32.mrf.mxu0
        %v3745 = vpop.f32.mrf.mxu0
        %v3746 = vadd.f32 0.0, %v3745
        %v3747 = vpop.f32.mrf.mxu0
        %3748 = vmatprep.mubr.bf16.mxu0 0
        %3749 = vmatmul.mubr.bf16.gmra.mxu0 %v3243
        %v3750 = vpop.f32.mrf.mxu0
        %v3751 = vadd.f32 0.0, %v3750
        %v3752 = vpop.f32.mrf.mxu0
        %v3753 = vpop.f32.mrf.mxu0
        %v3754 = vadd.f32 0.0, %v3753
        %v3755 = vpop.f32.mrf.mxu0
        %3756 = vmatprep.mubr.bf16.mxu0 0
        %3757 = vmatmul.mubr.bf16.gmra.mxu0 %v3246
        %v3758 = vpop.f32.mrf.mxu0
        %v3759 = vadd.f32 0.0, %v3758
        %v3760 = vpop.f32.mrf.mxu0
        %v3761 = vpop.f32.mrf.mxu0
        %v3762 = vadd.f32 0.0, %v3761
        %v3763 = vpop.f32.mrf.mxu0
        %3764 = vmatprep.mubr.bf16.mxu0 0
        %3765 = vmatmul.mubr.bf16.gmra.mxu0 %v3249
        %v3766 = vpop.f32.mrf.mxu0
        %v3767 = vadd.f32 0.0, %v3766
        %v3768 = vpop.f32.mrf.mxu0
        %v3769 = vpop.f32.mrf.mxu0
        %v3770 = vadd.f32 0.0, %v3769
        %v3771 = vpop.f32.mrf.mxu0
        %3772 = vmatprep.mubr.bf16.mxu0 0
        %3773 = vmatmul.mubr.bf16.gmra.mxu0 %v3252
        %v3774 = vpop.f32.mrf.mxu0
        %v3775 = vadd.f32 0.0, %v3774
        %v3776 = vpop.f32.mrf.mxu0
        %v3777 = vpop.f32.mrf.mxu0
        %v3778 = vadd.f32 0.0, %v3777
        %v3779 = vpop.f32.mrf.mxu0
        %3780 = vmatprep.mubr.bf16.mxu0 0
        %3781 = vmatmul.mubr.bf16.gmra.mxu0 %v3255
        %v3782 = vpop.f32.mrf.mxu0
        %v3783 = vadd.f32 0.0, %v3782
        %v3784 = vpop.f32.mrf.mxu0
        %v3785 = vpop.f32.mrf.mxu0
        %v3786 = vadd.f32 0.0, %v3785
        %v3787 = vpop.f32.mrf.mxu0
        %3788 = vmatprep.mubr.bf16.mxu0 0
        %3789 = vmatmul.mubr.bf16.gmra.mxu0 %v3258
        %v3790 = vpop.f32.mrf.mxu0
        %v3791 = vadd.f32 0.0, %v3790
        %v3792 = vpop.f32.mrf.mxu0
        %v3793 = vpop.f32.mrf.mxu0
        %v3794 = vadd.f32 0.0, %v3793
        %v3795 = vpop.f32.mrf.mxu0
        %3796 = vmatprep.mubr.bf16.mxu0 0
        %3797 = vmatmul.mubr.bf16.gmra.mxu0 %v3261
        %v3798 = vpop.f32.mrf.mxu0
        %v3799 = vadd.f32 0.0, %v3798
        %v3800 = vpop.f32.mrf.mxu0
        %v3801 = vpop.f32.mrf.mxu0
        %v3802 = vadd.f32 0.0, %v3801
        %v3803 = vpop.f32.mrf.mxu0
        %3804 = vmatprep.mubr.bf16.mxu0 0
        %3805 = vmatmul.mubr.bf16.gmra.mxu0 %v3264
        %v3806 = vpop.f32.mrf.mxu0
        %v3807 = vadd.f32 0.0, %v3806
        %v3808 = vpop.f32.mrf.mxu0
        %v3809 = vpop.f32.mrf.mxu0
        %v3810 = vadd.f32 0.0, %v3809
        %v3811 = vpop.f32.mrf.mxu0
        %3812 = vmatprep.mubr.bf16.mxu0 0
        %3813 = vmatmul.mubr.bf16.gmra.mxu0 %v3267
        %v3814 = vpop.f32.mrf.mxu0
        %v3815 = vadd.f32 0.0, %v3814
        %v3816 = vpop.f32.mrf.mxu0
        %v3817 = vpop.f32.mrf.mxu0
        %v3818 = vadd.f32 0.0, %v3817
        %v3819 = vpop.f32.mrf.mxu0
        %3820 = vmatprep.mubr.bf16.mxu0 0
        %3821 = vmatmul.mubr.bf16.gmra.mxu0 %v3270
        %v3822 = vpop.f32.mrf.mxu0
        %v3823 = vadd.f32 0.0, %v3822
        %v3824 = vpop.f32.mrf.mxu0
        %v3825 = vpop.f32.mrf.mxu0
        %v3826 = vadd.f32 0.0, %v3825
        %v3827 = vpop.f32.mrf.mxu0
        %3828 = vmatprep.mubr.bf16.mxu0 0
        %3829 = vmatmul.mubr.bf16.gmra.mxu0 %v3273
        %v3830 = vpop.f32.mrf.mxu0
        %v3831 = vadd.f32 0.0, %v3830
        %v3832 = vpop.f32.mrf.mxu0
        %v3833 = vpop.f32.mrf.mxu0
        %v3834 = vadd.f32 0.0, %v3833
        %v3835 = vpop.f32.mrf.mxu0
        %3836 = vmatprep.mubr.bf16.mxu0 0
        %3837 = vmatmul.mubr.bf16.gmra.mxu0 %v3276
        %v3838 = vpop.f32.mrf.mxu0
        %v3839 = vadd.f32 0.0, %v3838
        %v3840 = vpop.f32.mrf.mxu0
        %v3841 = vpop.f32.mrf.mxu0
        %v3842 = vadd.f32 0.0, %v3841
        %v3843 = vpop.f32.mrf.mxu0
        %3844 = vmatprep.mubr.bf16.mxu0 0
        %3845 = vmatmul.mubr.bf16.gmra.mxu0 %v3279
        %v3846 = vpop.f32.mrf.mxu0
        %v3847 = vadd.f32 0.0, %v3846
        %v3848 = vpop.f32.mrf.mxu0
        %v3849 = vpop.f32.mrf.mxu0
        %v3850 = vadd.f32 0.0, %v3849
        %v3851 = vpop.f32.mrf.mxu0
        %3852 = vmatprep.mubr.bf16.mxu0 0
        %3853 = vmatmul.mubr.bf16.gmra.mxu0 %v3282
        %v3854 = vpop.f32.mrf.mxu0
        %v3855 = vadd.f32 0.0, %v3854
        %v3856 = vpop.f32.mrf.mxu0
        %v3857 = vpop.f32.mrf.mxu0
        %v3858 = vadd.f32 0.0, %v3857
        %v3859 = vpop.f32.mrf.mxu0
        %3860 = vmatprep.mubr.bf16.mxu0 0
        %3861 = vmatmul.mubr.bf16.gmra.mxu0 %v3285
        %v3862 = vpop.f32.mrf.mxu0
        %v3863 = vadd.f32 0.0, %v3862
        %v3864 = vpop.f32.mrf.mxu0
        %v3865 = vpop.f32.mrf.mxu0
        %v3866 = vadd.f32 0.0, %v3865
        %v3867 = vpop.f32.mrf.mxu0
        %3868 = vmatprep.mubr.bf16.mxu0 0
        %3869 = vmatmul.mubr.bf16.gmra.mxu0 %v3288
        %v3870 = vpop.f32.mrf.mxu0
        %v3871 = vadd.f32 0.0, %v3870
        %v3872 = vpop.f32.mrf.mxu0
        %v3873 = vpop.f32.mrf.mxu0
        %v3874 = vadd.f32 0.0, %v3873
        %v3875 = vpop.f32.mrf.mxu0
        %3876 = vmatprep.mubr.bf16.mxu0 0
        %3877 = vmatmul.mubr.bf16.gmra.mxu0 %v3291
        %v3878 = vpop.f32.mrf.mxu0
        %v3879 = vadd.f32 0.0, %v3878
        %v3880 = vpop.f32.mrf.mxu0
        %v3881 = vpop.f32.mrf.mxu0
        %v3882 = vadd.f32 0.0, %v3881
        %v3883 = vpop.f32.mrf.mxu0
        %3884 = vmatprep.mubr.bf16.mxu0 0
        %3885 = vmatmul.mubr.bf16.gmra.mxu0 %v3294
        %v3886 = vpop.f32.mrf.mxu0
        %v3887 = vadd.f32 0.0, %v3886
        %v3888 = vpop.f32.mrf.mxu0
        %v3889 = vpop.f32.mrf.mxu0
        %v3890 = vadd.f32 0.0, %v3889
        %v3891 = vpop.f32.mrf.mxu0
        %3892 = vmatprep.mubr.bf16.mxu0 0
        %3893 = vmatmul.mubr.bf16.gmra.mxu0 %v3297
        %v3894 = vpop.f32.mrf.mxu0
        %v3895 = vadd.f32 0.0, %v3894
        %v3896 = vpop.f32.mrf.mxu0
        %v3897 = vpop.f32.mrf.mxu0
        %v3898 = vadd.f32 0.0, %v3897
        %v3899 = vpop.f32.mrf.mxu0
        %3900 = vmatprep.mubr.bf16.mxu0 0
        %3901 = vmatmul.mubr.bf16.gmra.mxu0 %v3300
        %v3902 = vpop.f32.mrf.mxu0
        %v3903 = vadd.f32 0.0, %v3902
        %v3904 = vpop.f32.mrf.mxu0
        %v3905 = vpop.f32.mrf.mxu0
        %v3906 = vadd.f32 0.0, %v3905
        %v3907 = vpop.f32.mrf.mxu0
        %3908 = vmatprep.mubr.bf16.mxu0 0
        %3909 = vmatmul.mubr.bf16.gmra.mxu0 %v3303
        %v3910 = vpop.f32.mrf.mxu0
        %v3911 = vadd.f32 0.0, %v3910
        %v3912 = vpop.f32.mrf.mxu0
        %v3913 = vpop.f32.mrf.mxu0
        %v3914 = vadd.f32 0.0, %v3913
        %v3915 = vpop.f32.mrf.mxu0
        %3916 = vmatprep.mubr.bf16.mxu0 0
        %3917 = vmatmul.mubr.bf16.gmra.mxu0 %v3306
        %v3918 = vpop.f32.mrf.mxu0
        %v3919 = vadd.f32 0.0, %v3918
        %v3920 = vpop.f32.mrf.mxu0
        %v3921 = vpop.f32.mrf.mxu0
        %v3922 = vadd.f32 0.0, %v3921
        %v3923 = vpop.f32.mrf.mxu0
        %3924 = vmatprep.mubr.bf16.mxu0 0
        %3925 = vmatmul.mubr.bf16.gmra.mxu0 %v3309
        %v3926 = vpop.f32.mrf.mxu0
        %v3927 = vadd.f32 0.0, %v3926
        %v3928 = vpop.f32.mrf.mxu0
        %v3929 = vpop.f32.mrf.mxu0
        %v3930 = vadd.f32 0.0, %v3929
        %v3931 = vpop.f32.mrf.mxu0
        %3932 = vmatprep.mubr.bf16.mxu0 0
        %3933 = vmatmul.mubr.bf16.gmra.mxu0 %v3312
        %v3934 = vpop.f32.mrf.mxu0
        %v3935 = vadd.f32 0.0, %v3934
        %v3936 = vpop.f32.mrf.mxu0
        %v3937 = vpop.f32.mrf.mxu0
        %v3938 = vadd.f32 0.0, %v3937
        %v3939 = vpop.f32.mrf.mxu0
        %3940 = vmatprep.mubr.bf16.mxu0 0
        %3941 = vmatmul.mubr.bf16.gmra.mxu0 %v3315
        %v3942 = vpop.f32.mrf.mxu0
        %v3943 = vadd.f32 0.0, %v3942
        %v3944 = vpop.f32.mrf.mxu0
        %v3945 = vpop.f32.mrf.mxu0
        %v3946 = vadd.f32 0.0, %v3945
        %v3947 = vpop.f32.mrf.mxu0
        %3948 = vmatprep.mubr.bf16.mxu0 0
        %3949 = vmatmul.mubr.bf16.gmra.mxu0 %v3318
        %v3950 = vpop.f32.mrf.mxu0
        %v3951 = vadd.f32 0.0, %v3950
        %v3952 = vpop.f32.mrf.mxu0
        %v3953 = vpop.f32.mrf.mxu0
        %v3954 = vadd.f32 0.0, %v3953
        %v3955 = vpop.f32.mrf.mxu0
        %3956 = vmatprep.mubr.bf16.mxu0 0
        %3957 = vmatmul.mubr.bf16.gmra.mxu0 %v3321
        %v3958 = vpop.f32.mrf.mxu0
        %v3959 = vadd.f32 0.0, %v3958
        %v3960 = vpop.f32.mrf.mxu0
        %v3961 = vpop.f32.mrf.mxu0
        %v3962 = vadd.f32 0.0, %v3961
        %v3963 = vpop.f32.mrf.mxu0
        %3964 = vmatprep.mubr.bf16.mxu0 0
        %3965 = vmatmul.mubr.bf16.gmra.mxu0 %v3324
        %v3966 = vpop.f32.mrf.mxu0
        %v3967 = vadd.f32 0.0, %v3966
        %v3968 = vpop.f32.mrf.mxu0
        %v3969 = vpop.f32.mrf.mxu0
        %v3970 = vadd.f32 0.0, %v3969
        %v3971 = vpop.f32.mrf.mxu0
        %3972 = vmatprep.mubr.bf16.mxu0 0
        %3973 = vmatmul.mubr.bf16.gmra.mxu0 %v3327
        %v3974 = vpop.f32.mrf.mxu0
        %v3975 = vadd.f32 0.0, %v3974
        %v3976 = vpop.f32.mrf.mxu0
        %v3977 = vpop.f32.mrf.mxu0
        %v3978 = vadd.f32 0.0, %v3977
        %v3979 = vpop.f32.mrf.mxu0
        %3980 = vmatprep.mubr.bf16.mxu0 0
        %3981 = vmatmul.mubr.bf16.gmra.mxu0 %v3703
        %v3982 = vpop.f32.mrf.mxu0
        %v3983 = vadd.f32 0.0, %v3982
        %v3984 = vpop.f32.mrf.mxu0
        %v3985 = vpop.f32.mrf.mxu0
        %v3986 = vadd.f32 0.0, %v3985
        %v3987 = vpop.f32.mrf.mxu0
        %3988 = vmatprep.mubr.bf16.mxu0 0
        %3989 = vmatmul.mubr.bf16.gmra.mxu0 %v3706
        %v3990 = vpop.f32.mrf.mxu0
        %v3991 = vadd.f32 0.0, %v3990
        %v3992 = vpop.f32.mrf.mxu0
        %v3993 = vpop.f32.mrf.mxu0
        %v3994 = vadd.f32 0.0, %v3993
        %v3995 = vpop.f32.mrf.mxu0
        %3996 = vdwg.mxu0
        %v3997 = vadd.f32 %v3621, %v3743
        %v3998 = vadd.f32 %v3622, %v3746
        %v3999 = vadd.f32 %v3623, %v3751
        %v4000 = vadd.f32 %v3624, %v3754
        %v4001 = vadd.f32 %v3625, %v3759
        %v4002 = vadd.f32 %v3626, %v3762
        %v4003 = vadd.f32 %v3627, %v3767
        %v4004 = vadd.f32 %v3628, %v3770
        %v4005 = vadd.f32 %v3629, %v3775
        %v4006 = vadd.f32 %v3630, %v3778
        %v4007 = vadd.f32 %v3631, %v3783
        %v4008 = vadd.f32 %v3632, %v3786
        %v4009 = vadd.f32 %v3633, %v3791
        %v4010 = vadd.f32 %v3634, %v3794
        %v4011 = vadd.f32 %v3635, %v3799
        %v4012 = vadd.f32 %v3636, %v3802
        %v4013 = vadd.f32 %v3637, %v3807
        %v4014 = vadd.f32 %v3638, %v3810
        %v4015 = vadd.f32 %v3639, %v3815
        %v4016 = vadd.f32 %v3640, %v3818
        %v4017 = vadd.f32 %v3641, %v3823
        %v4018 = vadd.f32 %v3642, %v3826
        %v4019 = vadd.f32 %v3643, %v3831
        %v4020 = vadd.f32 %v3644, %v3834
        %v4021 = vadd.f32 %v3645, %v3839
        %v4022 = vadd.f32 %v3646, %v3842
        %v4023 = vadd.f32 %v3647, %v3847
        %v4024 = vadd.f32 %v3648, %v3850
        %v4025 = vadd.f32 %v3649, %v3855
        %v4026 = vadd.f32 %v3650, %v3858
        %v4027 = vadd.f32 %v3651, %v3863
        %v4028 = vadd.f32 %v3652, %v3866
        %v4029 = vadd.f32 %v3653, %v3871
        %v4030 = vadd.f32 %v3654, %v3874
        %v4031 = vadd.f32 %v3655, %v3879
        %v4032 = vadd.f32 %v3656, %v3882
        %v4033 = vadd.f32 %v3657, %v3887
        %v4034 = vadd.f32 %v3658, %v3890
        %v4035 = vadd.f32 %v3659, %v3895
        %v4036 = vadd.f32 %v3660, %v3898
        %v4037 = vadd.f32 %v3661, %v3903
        %v4038 = vadd.f32 %v3662, %v3906
        %v4039 = vadd.f32 %v3663, %v3911
        %v4040 = vadd.f32 %v3664, %v3914
        %v4041 = vadd.f32 %v3665, %v3919
        %v4042 = vadd.f32 %v3666, %v3922
        %v4043 = vadd.f32 %v3667, %v3927
        %v4044 = vadd.f32 %v3668, %v3930
        %v4045 = vadd.f32 %v3669, %v3935
        %v4046 = vadd.f32 %v3670, %v3938
        %v4047 = vadd.f32 %v3671, %v3943
        %v4048 = vadd.f32 %v3672, %v3946
        %v4049 = vadd.f32 %v3673, %v3951
        %v4050 = vadd.f32 %v3674, %v3954
        %v4051 = vadd.f32 %v3675, %v3959
        %v4052 = vadd.f32 %v3676, %v3962
        %v4053 = vadd.f32 %v3677, %v3967
        %v4054 = vadd.f32 %v3678, %v3970
        %v4055 = vadd.f32 %v3679, %v3975
        %v4056 = vadd.f32 %v3680, %v3978
        %v4057 = vadd.f32 %v3681, %v3983
        %v4058 = vadd.f32 %v3682, %v3986
        %v4059 = vadd.f32 %v3683, %v3991
        %v4060 = vadd.f32 %v3684, %v3994
        %s4061 = scalar_lea.vmem %s2, 56
        %v4062 = vld [vmem:[%s4061] sm:$0xf]
        %v4063 = vld [vmem:[%s4061 + $0x4] sm:$0xf]
        %vm4064 = vsmask.f32 5376
        %v4065 = vrot.slane %v637, 2
        %v4066 = vrot.slane %v633, 3
        %v4067 = vor.u32 %v4065, %v4066
        %v4068 = vrot.slane %v645, 2
        %v4069 = vrot.slane %v641, 3
        %v4070 = vor.u32 %v4068, %v4069
        %v4071 = vsel %vm4064, %v4067, %v4070
        %v4072 = vrot.slane %v653, 2
        %v4073 = vrot.slane %v649, 3
        %v4074 = vor.u32 %v4072, %v4073
        %v4075 = vsel %vm4064, %v4070, %v4074
        %v4076 = vrot.slane %v661, 2
        %v4077 = vrot.slane %v657, 3
        %v4078 = vor.u32 %v4076, %v4077
        %v4079 = vsel %vm4064, %v4074, %v4078
        %v4080 = vrot.slane %v669, 2
        %v4081 = vrot.slane %v665, 3
        %v4082 = vor.u32 %v4080, %v4081
        %v4083 = vsel %vm4064, %v4078, %v4082
        %v4084 = vrot.slane %v677, 2
        %v4085 = vrot.slane %v673, 3
        %v4086 = vor.u32 %v4084, %v4085
        %v4087 = vsel %vm4064, %v4082, %v4086
        %v4088 = vrot.slane %v685, 2
        %v4089 = vrot.slane %v681, 3
        %v4090 = vor.u32 %v4088, %v4089
        %v4091 = vsel %vm4064, %v4086, %v4090
        %v4092 = vrot.slane %v693, 2
        %v4093 = vrot.slane %v689, 3
        %v4094 = vor.u32 %v4092, %v4093
        %v4095 = vsel %vm4064, %v4090, %v4094
        %v4096 = vrot.slane %v701, 2
        %v4097 = vrot.slane %v697, 3
        %v4098 = vor.u32 %v4096, %v4097
        %v4099 = vsel %vm4064, %v4094, %v4098
        %v4100 = vrot.slane %v709, 2
        %v4101 = vrot.slane %v705, 3
        %v4102 = vor.u32 %v4100, %v4101
        %v4103 = vsel %vm4064, %v4098, %v4102
        %v4104 = vrot.slane %v717, 2
        %v4105 = vrot.slane %v713, 3
        %v4106 = vor.u32 %v4104, %v4105
        %v4107 = vsel %vm4064, %v4102, %v4106
        %v4108 = vrot.slane %v725, 2
        %v4109 = vrot.slane %v721, 3
        %v4110 = vor.u32 %v4108, %v4109
        %v4111 = vsel %vm4064, %v4106, %v4110
        %v4112 = vrot.slane %v733, 2
        %v4113 = vrot.slane %v729, 3
        %v4114 = vor.u32 %v4112, %v4113
        %v4115 = vsel %vm4064, %v4110, %v4114
        %v4116 = vrot.slane %v741, 2
        %v4117 = vrot.slane %v737, 3
        %v4118 = vor.u32 %v4116, %v4117
        %v4119 = vsel %vm4064, %v4114, %v4118
        %v4120 = vrot.slane %v749, 2
        %v4121 = vrot.slane %v745, 3
        %v4122 = vor.u32 %v4120, %v4121
        %v4123 = vsel %vm4064, %v4118, %v4122
        %v4124 = vrot.slane %v757, 2
        %v4125 = vrot.slane %v753, 3
        %v4126 = vor.u32 %v4124, %v4125
        %v4127 = vsel %vm4064, %v4122, %v4126
        %v4128 = vrot.slane %v765, 2
        %v4129 = vrot.slane %v761, 3
        %v4130 = vor.u32 %v4128, %v4129
        %v4131 = vsel %vm4064, %v4126, %v4130
        %v4132 = vrot.slane %v773, 2
        %v4133 = vrot.slane %v769, 3
        %v4134 = vor.u32 %v4132, %v4133
        %v4135 = vsel %vm4064, %v4130, %v4134
        %v4136 = vrot.slane %v781, 2
        %v4137 = vrot.slane %v777, 3
        %v4138 = vor.u32 %v4136, %v4137
        %v4139 = vsel %vm4064, %v4134, %v4138
        %v4140 = vrot.slane %v789, 2
        %v4141 = vrot.slane %v785, 3
        %v4142 = vor.u32 %v4140, %v4141
        %v4143 = vsel %vm4064, %v4138, %v4142
        %v4144 = vrot.slane %v797, 2
        %v4145 = vrot.slane %v793, 3
        %v4146 = vor.u32 %v4144, %v4145
        %v4147 = vsel %vm4064, %v4142, %v4146
        %v4148 = vrot.slane %v805, 2
        %v4149 = vrot.slane %v801, 3
        %v4150 = vor.u32 %v4148, %v4149
        %v4151 = vsel %vm4064, %v4146, %v4150
        %v4152 = vrot.slane %v813, 2
        %v4153 = vrot.slane %v809, 3
        %v4154 = vor.u32 %v4152, %v4153
        %v4155 = vsel %vm4064, %v4150, %v4154
        %v4156 = vrot.slane %v821, 2
        %v4157 = vrot.slane %v817, 3
        %v4158 = vor.u32 %v4156, %v4157
        %v4159 = vsel %vm4064, %v4154, %v4158
        %v4160 = vrot.slane %v829, 2
        %v4161 = vrot.slane %v825, 3
        %v4162 = vor.u32 %v4160, %v4161
        %v4163 = vsel %vm4064, %v4158, %v4162
        %v4164 = vrot.slane %v837, 2
        %v4165 = vrot.slane %v833, 3
        %v4166 = vor.u32 %v4164, %v4165
        %v4167 = vsel %vm4064, %v4162, %v4166
        %v4168 = vrot.slane %v845, 2
        %v4169 = vrot.slane %v841, 3
        %v4170 = vor.u32 %v4168, %v4169
        %v4171 = vsel %vm4064, %v4166, %v4170
        %v4172 = vrot.slane %v853, 2
        %v4173 = vrot.slane %v849, 3
        %v4174 = vor.u32 %v4172, %v4173
        %v4175 = vsel %vm4064, %v4170, %v4174
        %v4176 = vrot.slane %v861, 2
        %v4177 = vrot.slane %v857, 3
        %v4178 = vor.u32 %v4176, %v4177
        %v4179 = vsel %vm4064, %v4174, %v4178
        %v4180 = vrot.slane %v869, 2
        %v4181 = vrot.slane %v865, 3
        %v4182 = vor.u32 %v4180, %v4181
        %v4183 = vsel %vm4064, %v4178, %v4182
        %v4184 = vrot.slane %v2689, 2
        %v4185 = vrot.slane %v2692, 3
        %v4186 = vor.u32 %v4184, %v4185
        %v4187 = vsel %vm4064, %v4182, %v4186
        %v4189 = vshrl.u32 %v3685, 16
        %v4191 = vrot.slane %v4189, 2
        %v4192 = vshll.u32 %v3685, 16
        %v4194 = vrot.slane %v4192, 3
        %v4195 = vor.u32 %v4191, %v4194
        %v4196 = vsel %vm4064, %v4186, %v4195
        %v4198 = vshrl.u32 %v3686, 16
        %v4200 = vrot.slane %v4198, 2
        %v4201 = vshll.u32 %v3686, 16
        %v4203 = vrot.slane %v4201, 3
        %v4204 = vor.u32 %v4200, %v4203
        %v4205 = vsel %vm4064, %v4195, %v4204
        %v4208 = vunpack.c.l.b16 %v4062
        %v4209 = vunpack.c.l.b16 %v4063
        %v4210 = vpack.c.b16 %v4209, %v4208
        %v4213 = vsel %vm883, %v4071, 0
        %v4216 = vsel %vm883, %v4075, 0
        %v4219 = vsel %vm883, %v4079, 0
        %v4222 = vsel %vm883, %v4083, 0
        %v4225 = vsel %vm883, %v4087, 0
        %v4228 = vsel %vm883, %v4091, 0
        %v4231 = vsel %vm883, %v4095, 0
        %v4234 = vsel %vm883, %v4099, 0
        %v4237 = vsel %vm883, %v4103, 0
        %v4240 = vsel %vm883, %v4107, 0
        %v4243 = vsel %vm883, %v4111, 0
        %v4246 = vsel %vm883, %v4115, 0
        %v4249 = vsel %vm883, %v4119, 0
        %v4252 = vsel %vm883, %v4123, 0
        %v4255 = vsel %vm883, %v4127, 0
        %v4258 = vsel %vm883, %v4131, 0
        %v4261 = vsel %vm883, %v4135, 0
        %v4264 = vsel %vm883, %v4139, 0
        %v4267 = vsel %vm883, %v4143, 0
        %v4270 = vsel %vm883, %v4147, 0
        %v4273 = vsel %vm883, %v4151, 0
        %v4276 = vsel %vm883, %v4155, 0
        %v4279 = vsel %vm883, %v4159, 0
        %v4282 = vsel %vm883, %v4163, 0
        %v4285 = vsel %vm883, %v4167, 0
        %v4288 = vsel %vm883, %v4171, 0
        %v4291 = vsel %vm883, %v4175, 0
        %v4294 = vsel %vm883, %v4179, 0
        %v4297 = vsel %vm883, %v4183, 0
        %v4300 = vsel %vm883, %v4187, 0
        %v4303 = vsel %vm883, %v4196, 0
        %v4306 = vsel %vm883, %v4205, 0
        %4308 = vmatprep.subr.bf16.mxu0 0
        %4309 = vmatpush1.bf16.msra.mxu0 0
        %4310 = vmatprep.subr.bf16.mxu0 0
        %4311 = vmatpush1.bf16.msra.mxu0 0
        %4312 = vmatprep.subr.bf16.mxu0 0
        %4313 = vmatpush1.bf16.msra.mxu0 0
        %4314 = vmatprep.subr.bf16.mxu0 0
        %4315 = vmatpush1.bf16.msra.mxu0 0
        %4316 = vmatprep.subr.bf16.mxu0 0
        %4317 = vmatpush1.bf16.msra.mxu0 0
        %4318 = vmatprep.subr.bf16.mxu0 0
        %4319 = vmatpush1.bf16.msra.mxu0 0
        %4320 = vmatprep.subr.bf16.mxu0 0
        %4321 = vmatpush1.bf16.msra.mxu0 0
        %4322 = vmatprep.subr.bf16.mxu0 0
        %4323 = vmatpush1.bf16.msra.mxu0 %v4210
        %4324 = vmatprep.subr.bf16.mxu0 0
        %4325 = vmatpush2.bf16.msra.mxu0 0
        %4326 = vmatprep.subr.bf16.mxu0 0
        %4327 = vmatpush2.bf16.msra.mxu0 0
        %4328 = vmatprep.subr.bf16.mxu0 0
        %4329 = vmatpush2.bf16.msra.mxu0 0
        %4330 = vmatprep.subr.bf16.mxu0 0
        %4331 = vmatpush2.bf16.msra.mxu0 0
        %4332 = vmatprep.subr.bf16.mxu0 0
        %4333 = vmatpush2.bf16.msra.mxu0 0
        %4334 = vmatprep.subr.bf16.mxu0 0
        %4335 = vmatpush2.bf16.msra.mxu0 0
        %4336 = vmatprep.subr.bf16.mxu0 0
        %4337 = vmatpush2.bf16.msra.mxu0 0
        %4338 = vmatprep.subr.bf16.mxu0 0
        %4339 = vmatpush2.bf16.msra.mxu0 0
        %4340 = vmatprep.mubr.bf16.mxu0 0
        %4341 = vmatmul.mubr.bf16.gmra.mxu0 %v4213
        %v4342 = vpop.f32.mrf.mxu0
        %v4343 = vadd.f32 0.0, %v4342
        %v4344 = vpop.f32.mrf.mxu0
        %v4345 = vpop.f32.mrf.mxu0
        %v4346 = vadd.f32 0.0, %v4345
        %v4347 = vpop.f32.mrf.mxu0
        %4348 = vmatprep.mubr.bf16.mxu0 0
        %4349 = vmatmul.mubr.bf16.gmra.mxu0 %v4216
        %v4350 = vpop.f32.mrf.mxu0
        %v4351 = vadd.f32 0.0, %v4350
        %v4352 = vpop.f32.mrf.mxu0
        %v4353 = vpop.f32.mrf.mxu0
        %v4354 = vadd.f32 0.0, %v4353
        %v4355 = vpop.f32.mrf.mxu0
        %4356 = vmatprep.mubr.bf16.mxu0 0
        %4357 = vmatmul.mubr.bf16.gmra.mxu0 %v4219
        %v4358 = vpop.f32.mrf.mxu0
        %v4359 = vadd.f32 0.0, %v4358
        %v4360 = vpop.f32.mrf.mxu0
        %v4361 = vpop.f32.mrf.mxu0
        %v4362 = vadd.f32 0.0, %v4361
        %v4363 = vpop.f32.mrf.mxu0
        %4364 = vmatprep.mubr.bf16.mxu0 0
        %4365 = vmatmul.mubr.bf16.gmra.mxu0 %v4222
        %v4366 = vpop.f32.mrf.mxu0
        %v4367 = vadd.f32 0.0, %v4366
        %v4368 = vpop.f32.mrf.mxu0
        %v4369 = vpop.f32.mrf.mxu0
        %v4370 = vadd.f32 0.0, %v4369
        %v4371 = vpop.f32.mrf.mxu0
        %4372 = vmatprep.mubr.bf16.mxu0 0
        %4373 = vmatmul.mubr.bf16.gmra.mxu0 %v4225
        %v4374 = vpop.f32.mrf.mxu0
        %v4375 = vadd.f32 0.0, %v4374
        %v4376 = vpop.f32.mrf.mxu0
        %v4377 = vpop.f32.mrf.mxu0
        %v4378 = vadd.f32 0.0, %v4377
        %v4379 = vpop.f32.mrf.mxu0
        %4380 = vmatprep.mubr.bf16.mxu0 0
        %4381 = vmatmul.mubr.bf16.gmra.mxu0 %v4228
        %v4382 = vpop.f32.mrf.mxu0
        %v4383 = vadd.f32 0.0, %v4382
        %v4384 = vpop.f32.mrf.mxu0
        %v4385 = vpop.f32.mrf.mxu0
        %v4386 = vadd.f32 0.0, %v4385
        %v4387 = vpop.f32.mrf.mxu0
        %4388 = vmatprep.mubr.bf16.mxu0 0
        %4389 = vmatmul.mubr.bf16.gmra.mxu0 %v4231
        %v4390 = vpop.f32.mrf.mxu0
        %v4391 = vadd.f32 0.0, %v4390
        %v4392 = vpop.f32.mrf.mxu0
        %v4393 = vpop.f32.mrf.mxu0
        %v4394 = vadd.f32 0.0, %v4393
        %v4395 = vpop.f32.mrf.mxu0
        %4396 = vmatprep.mubr.bf16.mxu0 0
        %4397 = vmatmul.mubr.bf16.gmra.mxu0 %v4234
        %v4398 = vpop.f32.mrf.mxu0
        %v4399 = vadd.f32 0.0, %v4398
        %v4400 = vpop.f32.mrf.mxu0
        %v4401 = vpop.f32.mrf.mxu0
        %v4402 = vadd.f32 0.0, %v4401
        %v4403 = vpop.f32.mrf.mxu0
        %4404 = vmatprep.mubr.bf16.mxu0 0
        %4405 = vmatmul.mubr.bf16.gmra.mxu0 %v4237
        %v4406 = vpop.f32.mrf.mxu0
        %v4407 = vadd.f32 0.0, %v4406
        %v4408 = vpop.f32.mrf.mxu0
        %v4409 = vpop.f32.mrf.mxu0
        %v4410 = vadd.f32 0.0, %v4409
        %v4411 = vpop.f32.mrf.mxu0
        %4412 = vmatprep.mubr.bf16.mxu0 0
        %4413 = vmatmul.mubr.bf16.gmra.mxu0 %v4240
        %v4414 = vpop.f32.mrf.mxu0
        %v4415 = vadd.f32 0.0, %v4414
        %v4416 = vpop.f32.mrf.mxu0
        %v4417 = vpop.f32.mrf.mxu0
        %v4418 = vadd.f32 0.0, %v4417
        %v4419 = vpop.f32.mrf.mxu0
        %4420 = vmatprep.mubr.bf16.mxu0 0
        %4421 = vmatmul.mubr.bf16.gmra.mxu0 %v4243
        %v4422 = vpop.f32.mrf.mxu0
        %v4423 = vadd.f32 0.0, %v4422
        %v4424 = vpop.f32.mrf.mxu0
        %v4425 = vpop.f32.mrf.mxu0
        %v4426 = vadd.f32 0.0, %v4425
        %v4427 = vpop.f32.mrf.mxu0
        %4428 = vmatprep.mubr.bf16.mxu0 0
        %4429 = vmatmul.mubr.bf16.gmra.mxu0 %v4246
        %v4430 = vpop.f32.mrf.mxu0
        %v4431 = vadd.f32 0.0, %v4430
        %v4432 = vpop.f32.mrf.mxu0
        %v4433 = vpop.f32.mrf.mxu0
        %v4434 = vadd.f32 0.0, %v4433
        %v4435 = vpop.f32.mrf.mxu0
        %4436 = vmatprep.mubr.bf16.mxu0 0
        %4437 = vmatmul.mubr.bf16.gmra.mxu0 %v4249
        %v4438 = vpop.f32.mrf.mxu0
        %v4439 = vadd.f32 0.0, %v4438
        %v4440 = vpop.f32.mrf.mxu0
        %v4441 = vpop.f32.mrf.mxu0
        %v4442 = vadd.f32 0.0, %v4441
        %v4443 = vpop.f32.mrf.mxu0
        %4444 = vmatprep.mubr.bf16.mxu0 0
        %4445 = vmatmul.mubr.bf16.gmra.mxu0 %v4252
        %v4446 = vpop.f32.mrf.mxu0
        %v4447 = vadd.f32 0.0, %v4446
        %v4448 = vpop.f32.mrf.mxu0
        %v4449 = vpop.f32.mrf.mxu0
        %v4450 = vadd.f32 0.0, %v4449
        %v4451 = vpop.f32.mrf.mxu0
        %4452 = vmatprep.mubr.bf16.mxu0 0
        %4453 = vmatmul.mubr.bf16.gmra.mxu0 %v4255
        %v4454 = vpop.f32.mrf.mxu0
        %v4455 = vadd.f32 0.0, %v4454
        %v4456 = vpop.f32.mrf.mxu0
        %v4457 = vpop.f32.mrf.mxu0
        %v4458 = vadd.f32 0.0, %v4457
        %v4459 = vpop.f32.mrf.mxu0
        %4460 = vmatprep.mubr.bf16.mxu0 0
        %4461 = vmatmul.mubr.bf16.gmra.mxu0 %v4258
        %v4462 = vpop.f32.mrf.mxu0
        %v4463 = vadd.f32 0.0, %v4462
        %v4464 = vpop.f32.mrf.mxu0
        %v4465 = vpop.f32.mrf.mxu0
        %v4466 = vadd.f32 0.0, %v4465
        %v4467 = vpop.f32.mrf.mxu0
        %4468 = vmatprep.mubr.bf16.mxu0 0
        %4469 = vmatmul.mubr.bf16.gmra.mxu0 %v4261
        %v4470 = vpop.f32.mrf.mxu0
        %v4471 = vadd.f32 0.0, %v4470
        %v4472 = vpop.f32.mrf.mxu0
        %v4473 = vpop.f32.mrf.mxu0
        %v4474 = vadd.f32 0.0, %v4473
        %v4475 = vpop.f32.mrf.mxu0
        %4476 = vmatprep.mubr.bf16.mxu0 0
        %4477 = vmatmul.mubr.bf16.gmra.mxu0 %v4264
        %v4478 = vpop.f32.mrf.mxu0
        %v4479 = vadd.f32 0.0, %v4478
        %v4480 = vpop.f32.mrf.mxu0
        %v4481 = vpop.f32.mrf.mxu0
        %v4482 = vadd.f32 0.0, %v4481
        %v4483 = vpop.f32.mrf.mxu0
        %4484 = vmatprep.mubr.bf16.mxu0 0
        %4485 = vmatmul.mubr.bf16.gmra.mxu0 %v4267
        %v4486 = vpop.f32.mrf.mxu0
        %v4487 = vadd.f32 0.0, %v4486
        %v4488 = vpop.f32.mrf.mxu0
        %v4489 = vpop.f32.mrf.mxu0
        %v4490 = vadd.f32 0.0, %v4489
        %v4491 = vpop.f32.mrf.mxu0
        %4492 = vmatprep.mubr.bf16.mxu0 0
        %4493 = vmatmul.mubr.bf16.gmra.mxu0 %v4270
        %v4494 = vpop.f32.mrf.mxu0
        %v4495 = vadd.f32 0.0, %v4494
        %v4496 = vpop.f32.mrf.mxu0
        %v4497 = vpop.f32.mrf.mxu0
        %v4498 = vadd.f32 0.0, %v4497
        %v4499 = vpop.f32.mrf.mxu0
        %4500 = vmatprep.mubr.bf16.mxu0 0
        %4501 = vmatmul.mubr.bf16.gmra.mxu0 %v4273
        %v4502 = vpop.f32.mrf.mxu0
        %v4503 = vadd.f32 0.0, %v4502
        %v4504 = vpop.f32.mrf.mxu0
        %v4505 = vpop.f32.mrf.mxu0
        %v4506 = vadd.f32 0.0, %v4505
        %v4507 = vpop.f32.mrf.mxu0
        %4508 = vmatprep.mubr.bf16.mxu0 0
        %4509 = vmatmul.mubr.bf16.gmra.mxu0 %v4276
        %v4510 = vpop.f32.mrf.mxu0
        %v4511 = vadd.f32 0.0, %v4510
        %v4512 = vpop.f32.mrf.mxu0
        %v4513 = vpop.f32.mrf.mxu0
        %v4514 = vadd.f32 0.0, %v4513
        %v4515 = vpop.f32.mrf.mxu0
        %4516 = vmatprep.mubr.bf16.mxu0 0
        %4517 = vmatmul.mubr.bf16.gmra.mxu0 %v4279
        %v4518 = vpop.f32.mrf.mxu0
        %v4519 = vadd.f32 0.0, %v4518
        %v4520 = vpop.f32.mrf.mxu0
        %v4521 = vpop.f32.mrf.mxu0
        %v4522 = vadd.f32 0.0, %v4521
        %v4523 = vpop.f32.mrf.mxu0
        %4524 = vmatprep.mubr.bf16.mxu0 0
        %4525 = vmatmul.mubr.bf16.gmra.mxu0 %v4282
        %v4526 = vpop.f32.mrf.mxu0
        %v4527 = vadd.f32 0.0, %v4526
        %v4528 = vpop.f32.mrf.mxu0
        %v4529 = vpop.f32.mrf.mxu0
        %v4530 = vadd.f32 0.0, %v4529
        %v4531 = vpop.f32.mrf.mxu0
        %4532 = vmatprep.mubr.bf16.mxu0 0
        %4533 = vmatmul.mubr.bf16.gmra.mxu0 %v4285
        %v4534 = vpop.f32.mrf.mxu0
        %v4535 = vadd.f32 0.0, %v4534
        %v4536 = vpop.f32.mrf.mxu0
        %v4537 = vpop.f32.mrf.mxu0
        %v4538 = vadd.f32 0.0, %v4537
        %v4539 = vpop.f32.mrf.mxu0
        %4540 = vmatprep.mubr.bf16.mxu0 0
        %4541 = vmatmul.mubr.bf16.gmra.mxu0 %v4288
        %v4542 = vpop.f32.mrf.mxu0
        %v4543 = vadd.f32 0.0, %v4542
        %v4544 = vpop.f32.mrf.mxu0
        %v4545 = vpop.f32.mrf.mxu0
        %v4546 = vadd.f32 0.0, %v4545
        %v4547 = vpop.f32.mrf.mxu0
        %4548 = vmatprep.mubr.bf16.mxu0 0
        %4549 = vmatmul.mubr.bf16.gmra.mxu0 %v4291
        %v4550 = vpop.f32.mrf.mxu0
        %v4551 = vadd.f32 0.0, %v4550
        %v4552 = vpop.f32.mrf.mxu0
        %v4553 = vpop.f32.mrf.mxu0
        %v4554 = vadd.f32 0.0, %v4553
        %v4555 = vpop.f32.mrf.mxu0
        %4556 = vmatprep.mubr.bf16.mxu0 0
        %4557 = vmatmul.mubr.bf16.gmra.mxu0 %v4294
        %v4558 = vpop.f32.mrf.mxu0
        %v4559 = vadd.f32 0.0, %v4558
        %v4560 = vpop.f32.mrf.mxu0
        %v4561 = vpop.f32.mrf.mxu0
        %v4562 = vadd.f32 0.0, %v4561
        %v4563 = vpop.f32.mrf.mxu0
        %4564 = vmatprep.mubr.bf16.mxu0 0
        %4565 = vmatmul.mubr.bf16.gmra.mxu0 %v4297
        %v4566 = vpop.f32.mrf.mxu0
        %v4567 = vadd.f32 0.0, %v4566
        %v4568 = vpop.f32.mrf.mxu0
        %v4569 = vpop.f32.mrf.mxu0
        %v4570 = vadd.f32 0.0, %v4569
        %v4571 = vpop.f32.mrf.mxu0
        %4572 = vmatprep.mubr.bf16.mxu0 0
        %4573 = vmatmul.mubr.bf16.gmra.mxu0 %v4300
        %v4574 = vpop.f32.mrf.mxu0
        %v4575 = vadd.f32 0.0, %v4574
        %v4576 = vpop.f32.mrf.mxu0
        %v4577 = vpop.f32.mrf.mxu0
        %v4578 = vadd.f32 0.0, %v4577
        %v4579 = vpop.f32.mrf.mxu0
        %4580 = vmatprep.mubr.bf16.mxu0 0
        %4581 = vmatmul.mubr.bf16.gmra.mxu0 %v4303
        %v4582 = vpop.f32.mrf.mxu0
        %v4583 = vadd.f32 0.0, %v4582
        %v4584 = vpop.f32.mrf.mxu0
        %v4585 = vpop.f32.mrf.mxu0
        %v4586 = vadd.f32 0.0, %v4585
        %v4587 = vpop.f32.mrf.mxu0
        %4588 = vmatprep.mubr.bf16.mxu0 0
        %4589 = vmatmul.mubr.bf16.gmra.mxu0 %v4306
        %v4590 = vpop.f32.mrf.mxu0
        %v4591 = vadd.f32 0.0, %v4590
        %v4592 = vpop.f32.mrf.mxu0
        %v4593 = vpop.f32.mrf.mxu0
        %v4594 = vadd.f32 0.0, %v4593
        %v4595 = vpop.f32.mrf.mxu0
        %4596 = vdwg.mxu0
        %v4597 = vadd.f32 %v3997, %v4343
        %v4598 = vadd.f32 %v3998, %v4346
        %v4599 = vadd.f32 %v3999, %v4351
        %v4600 = vadd.f32 %v4000, %v4354
        %v4601 = vadd.f32 %v4001, %v4359
        %v4602 = vadd.f32 %v4002, %v4362
        %v4603 = vadd.f32 %v4003, %v4367
        %v4604 = vadd.f32 %v4004, %v4370
        %v4605 = vadd.f32 %v4005, %v4375
        %v4606 = vadd.f32 %v4006, %v4378
        %v4607 = vadd.f32 %v4007, %v4383
        %v4608 = vadd.f32 %v4008, %v4386
        %v4609 = vadd.f32 %v4009, %v4391
        %v4610 = vadd.f32 %v4010, %v4394
        %v4611 = vadd.f32 %v4011, %v4399
        %v4612 = vadd.f32 %v4012, %v4402
        %v4613 = vadd.f32 %v4013, %v4407
        %v4614 = vadd.f32 %v4014, %v4410
        %v4615 = vadd.f32 %v4015, %v4415
        %v4616 = vadd.f32 %v4016, %v4418
        %v4617 = vadd.f32 %v4017, %v4423
        %v4618 = vadd.f32 %v4018, %v4426
        %v4619 = vadd.f32 %v4019, %v4431
        %v4620 = vadd.f32 %v4020, %v4434
        %v4621 = vadd.f32 %v4021, %v4439
        %v4622 = vadd.f32 %v4022, %v4442
        %v4623 = vadd.f32 %v4023, %v4447
        %v4624 = vadd.f32 %v4024, %v4450
        %v4625 = vadd.f32 %v4025, %v4455
        %v4626 = vadd.f32 %v4026, %v4458
        %v4627 = vadd.f32 %v4027, %v4463
        %v4628 = vadd.f32 %v4028, %v4466
        %v4629 = vadd.f32 %v4029, %v4471
        %v4630 = vadd.f32 %v4030, %v4474
        %v4631 = vadd.f32 %v4031, %v4479
        %v4632 = vadd.f32 %v4032, %v4482
        %v4633 = vadd.f32 %v4033, %v4487
        %v4634 = vadd.f32 %v4034, %v4490
        %v4635 = vadd.f32 %v4035, %v4495
        %v4636 = vadd.f32 %v4036, %v4498
        %v4637 = vadd.f32 %v4037, %v4503
        %v4638 = vadd.f32 %v4038, %v4506
        %v4639 = vadd.f32 %v4039, %v4511
        %v4640 = vadd.f32 %v4040, %v4514
        %v4641 = vadd.f32 %v4041, %v4519
        %v4642 = vadd.f32 %v4042, %v4522
        %v4643 = vadd.f32 %v4043, %v4527
        %v4644 = vadd.f32 %v4044, %v4530
        %v4645 = vadd.f32 %v4045, %v4535
        %v4646 = vadd.f32 %v4046, %v4538
        %v4647 = vadd.f32 %v4047, %v4543
        %v4648 = vadd.f32 %v4048, %v4546
        %v4649 = vadd.f32 %v4049, %v4551
        %v4650 = vadd.f32 %v4050, %v4554
        %v4651 = vadd.f32 %v4051, %v4559
        %v4652 = vadd.f32 %v4052, %v4562
        %v4653 = vadd.f32 %v4053, %v4567
        %v4654 = vadd.f32 %v4054, %v4570
        %v4655 = vadd.f32 %v4055, %v4575
        %v4656 = vadd.f32 %v4056, %v4578
        %v4657 = vadd.f32 %v4057, %v4583
        %v4658 = vadd.f32 %v4058, %v4586
        %v4659 = vadd.f32 %v4059, %v4591
        %v4660 = vadd.f32 %v4060, %v4594
        %s4661 = scalar_lea.vmem %s2, 64
        %v4662 = vld [vmem:[%s4661] sm:$0xf]
        %v4663 = vld [vmem:[%s4661 + $0x4] sm:$0xf]
        %vm4664 = vcmask 1044480
        %v4665 = vrot.slane %v580, 3
        %v4666 = vrot.slane %v581, 3
        %v4667 = vsel %vm4664, %v4665, %v4666
        %v4668 = vrot.slane %v582, 3
        %v4669 = vsel %vm4664, %v4666, %v4668
        %v4670 = vrot.slane %v583, 3
        %v4671 = vsel %vm4664, %v4668, %v4670
        %v4672 = vrot.slane %v584, 3
        %v4673 = vsel %vm4664, %v4670, %v4672
        %v4674 = vrot.slane %v585, 3
        %v4675 = vsel %vm4664, %v4672, %v4674
        %v4676 = vrot.slane %v586, 3
        %v4677 = vsel %vm4664, %v4674, %v4676
        %v4678 = vrot.slane %v587, 3
        %v4679 = vsel %vm4664, %v4676, %v4678
        %v4680 = vrot.slane %v588, 3
        %v4681 = vsel %vm4664, %v4678, %v4680
        %v4682 = vrot.slane %v589, 3
        %v4683 = vsel %vm4664, %v4680, %v4682
        %v4684 = vrot.slane %v590, 3
        %v4685 = vsel %vm4664, %v4682, %v4684
        %v4686 = vrot.slane %v591, 3
        %v4687 = vsel %vm4664, %v4684, %v4686
        %v4688 = vrot.slane %v592, 3
        %v4689 = vsel %vm4664, %v4686, %v4688
        %v4690 = vrot.slane %v593, 3
        %v4691 = vsel %vm4664, %v4688, %v4690
        %v4692 = vrot.slane %v594, 3
        %v4693 = vsel %vm4664, %v4690, %v4692
        %v4694 = vrot.slane %v595, 3
        %v4695 = vsel %vm4664, %v4692, %v4694
        %v4696 = vrot.slane %v596, 3
        %v4697 = vsel %vm4664, %v4694, %v4696
        %v4698 = vrot.slane %v597, 3
        %v4699 = vsel %vm4664, %v4696, %v4698
        %v4700 = vrot.slane %v598, 3
        %v4701 = vsel %vm4664, %v4698, %v4700
        %v4702 = vrot.slane %v599, 3
        %v4703 = vsel %vm4664, %v4700, %v4702
        %v4704 = vrot.slane %v600, 3
        %v4705 = vsel %vm4664, %v4702, %v4704
        %v4706 = vrot.slane %v601, 3
        %v4707 = vsel %vm4664, %v4704, %v4706
        %v4708 = vrot.slane %v602, 3
        %v4709 = vsel %vm4664, %v4706, %v4708
        %v4710 = vrot.slane %v603, 3
        %v4711 = vsel %vm4664, %v4708, %v4710
        %v4712 = vrot.slane %v604, 3
        %v4713 = vsel %vm4664, %v4710, %v4712
        %v4714 = vrot.slane %v605, 3
        %v4715 = vsel %vm4664, %v4712, %v4714
        %v4716 = vrot.slane %v606, 3
        %v4717 = vsel %vm4664, %v4714, %v4716
        %v4718 = vrot.slane %v607, 3
        %v4719 = vsel %vm4664, %v4716, %v4718
        %v4720 = vrot.slane %v608, 3
        %v4721 = vsel %vm4664, %v4718, %v4720
        %v4722 = vrot.slane %v609, 3
        %v4723 = vsel %vm4664, %v4720, %v4722
        %v4724 = vrot.slane %v2185, 3
        %v4725 = vsel %vm4664, %v4722, %v4724
        %v4726 = vrot.slane %v3685, 3
        %v4727 = vsel %vm4664, %v4724, %v4726
        %v4728 = vrot.slane %v3686, 3
        %v4729 = vsel %vm4664, %v4726, %v4728
        %v4732 = vunpack.c.l.b16 %v4662
        %v4733 = vunpack.c.l.b16 %v4663
        %v4734 = vpack.c.b16 %v4733, %v4732
        %v4737 = vsel %vm883, %v4667, 0
        %v4740 = vsel %vm883, %v4669, 0
        %v4743 = vsel %vm883, %v4671, 0
        %v4746 = vsel %vm883, %v4673, 0
        %v4749 = vsel %vm883, %v4675, 0
        %v4752 = vsel %vm883, %v4677, 0
        %v4755 = vsel %vm883, %v4679, 0
        %v4758 = vsel %vm883, %v4681, 0
        %v4761 = vsel %vm883, %v4683, 0
        %v4764 = vsel %vm883, %v4685, 0
        %v4767 = vsel %vm883, %v4687, 0
        %v4770 = vsel %vm883, %v4689, 0
        %v4773 = vsel %vm883, %v4691, 0
        %v4776 = vsel %vm883, %v4693, 0
        %v4779 = vsel %vm883, %v4695, 0
        %v4782 = vsel %vm883, %v4697, 0
        %v4785 = vsel %vm883, %v4699, 0
        %v4788 = vsel %vm883, %v4701, 0
        %v4791 = vsel %vm883, %v4703, 0
        %v4794 = vsel %vm883, %v4705, 0
        %v4797 = vsel %vm883, %v4707, 0
        %v4800 = vsel %vm883, %v4709, 0
        %v4803 = vsel %vm883, %v4711, 0
        %v4806 = vsel %vm883, %v4713, 0
        %v4809 = vsel %vm883, %v4715, 0
        %v4812 = vsel %vm883, %v4717, 0
        %v4815 = vsel %vm883, %v4719, 0
        %v4818 = vsel %vm883, %v4721, 0
        %v4821 = vsel %vm883, %v4723, 0
        %v4824 = vsel %vm883, %v4725, 0
        %v4827 = vsel %vm883, %v4727, 0
        %v4830 = vsel %vm883, %v4729, 0
        %4832 = vmatprep.subr.bf16.mxu0 0
        %4833 = vmatpush1.bf16.msra.mxu0 0
        %4834 = vmatprep.subr.bf16.mxu0 0
        %4835 = vmatpush1.bf16.msra.mxu0 0
        %4836 = vmatprep.subr.bf16.mxu0 0
        %4837 = vmatpush1.bf16.msra.mxu0 0
        %4838 = vmatprep.subr.bf16.mxu0 0
        %4839 = vmatpush1.bf16.msra.mxu0 0
        %4840 = vmatprep.subr.bf16.mxu0 0
        %4841 = vmatpush1.bf16.msra.mxu0 0
        %4842 = vmatprep.subr.bf16.mxu0 0
        %4843 = vmatpush1.bf16.msra.mxu0 0
        %4844 = vmatprep.subr.bf16.mxu0 0
        %4845 = vmatpush1.bf16.msra.mxu0 0
        %4846 = vmatprep.subr.bf16.mxu0 0
        %4847 = vmatpush1.bf16.msra.mxu0 %v4734
        %4848 = vmatprep.subr.bf16.mxu0 0
        %4849 = vmatpush2.bf16.msra.mxu0 0
        %4850 = vmatprep.subr.bf16.mxu0 0
        %4851 = vmatpush2.bf16.msra.mxu0 0
        %4852 = vmatprep.subr.bf16.mxu0 0
        %4853 = vmatpush2.bf16.msra.mxu0 0
        %4854 = vmatprep.subr.bf16.mxu0 0
        %4855 = vmatpush2.bf16.msra.mxu0 0
        %4856 = vmatprep.subr.bf16.mxu0 0
        %4857 = vmatpush2.bf16.msra.mxu0 0
        %4858 = vmatprep.subr.bf16.mxu0 0
        %4859 = vmatpush2.bf16.msra.mxu0 0
        %4860 = vmatprep.subr.bf16.mxu0 0
        %4861 = vmatpush2.bf16.msra.mxu0 0
        %4862 = vmatprep.subr.bf16.mxu0 0
        %4863 = vmatpush2.bf16.msra.mxu0 0
        %4864 = vmatprep.mubr.bf16.mxu0 0
        %4865 = vmatmul.mubr.bf16.gmra.mxu0 %v4737
        %v4866 = vpop.f32.mrf.mxu0
        %v4867 = vadd.f32 0.0, %v4866
        %v4868 = vpop.f32.mrf.mxu0
        %v4869 = vpop.f32.mrf.mxu0
        %v4870 = vadd.f32 0.0, %v4869
        %v4871 = vpop.f32.mrf.mxu0
        %4872 = vmatprep.mubr.bf16.mxu0 0
        %4873 = vmatmul.mubr.bf16.gmra.mxu0 %v4740
        %v4874 = vpop.f32.mrf.mxu0
        %v4875 = vadd.f32 0.0, %v4874
        %v4876 = vpop.f32.mrf.mxu0
        %v4877 = vpop.f32.mrf.mxu0
        %v4878 = vadd.f32 0.0, %v4877
        %v4879 = vpop.f32.mrf.mxu0
        %4880 = vmatprep.mubr.bf16.mxu0 0
        %4881 = vmatmul.mubr.bf16.gmra.mxu0 %v4743
        %v4882 = vpop.f32.mrf.mxu0
        %v4883 = vadd.f32 0.0, %v4882
        %v4884 = vpop.f32.mrf.mxu0
        %v4885 = vpop.f32.mrf.mxu0
        %v4886 = vadd.f32 0.0, %v4885
        %v4887 = vpop.f32.mrf.mxu0
        %4888 = vmatprep.mubr.bf16.mxu0 0
        %4889 = vmatmul.mubr.bf16.gmra.mxu0 %v4746
        %v4890 = vpop.f32.mrf.mxu0
        %v4891 = vadd.f32 0.0, %v4890
        %v4892 = vpop.f32.mrf.mxu0
        %v4893 = vpop.f32.mrf.mxu0
        %v4894 = vadd.f32 0.0, %v4893
        %v4895 = vpop.f32.mrf.mxu0
        %4896 = vmatprep.mubr.bf16.mxu0 0
        %4897 = vmatmul.mubr.bf16.gmra.mxu0 %v4749
        %v4898 = vpop.f32.mrf.mxu0
        %v4899 = vadd.f32 0.0, %v4898
        %v4900 = vpop.f32.mrf.mxu0
        %v4901 = vpop.f32.mrf.mxu0
        %v4902 = vadd.f32 0.0, %v4901
        %v4903 = vpop.f32.mrf.mxu0
        %4904 = vmatprep.mubr.bf16.mxu0 0
        %4905 = vmatmul.mubr.bf16.gmra.mxu0 %v4752
        %v4906 = vpop.f32.mrf.mxu0
        %v4907 = vadd.f32 0.0, %v4906
        %v4908 = vpop.f32.mrf.mxu0
        %v4909 = vpop.f32.mrf.mxu0
        %v4910 = vadd.f32 0.0, %v4909
        %v4911 = vpop.f32.mrf.mxu0
        %4912 = vmatprep.mubr.bf16.mxu0 0
        %4913 = vmatmul.mubr.bf16.gmra.mxu0 %v4755
        %v4914 = vpop.f32.mrf.mxu0
        %v4915 = vadd.f32 0.0, %v4914
        %v4916 = vpop.f32.mrf.mxu0
        %v4917 = vpop.f32.mrf.mxu0
        %v4918 = vadd.f32 0.0, %v4917
        %v4919 = vpop.f32.mrf.mxu0
        %4920 = vmatprep.mubr.bf16.mxu0 0
        %4921 = vmatmul.mubr.bf16.gmra.mxu0 %v4758
        %v4922 = vpop.f32.mrf.mxu0
        %v4923 = vadd.f32 0.0, %v4922
        %v4924 = vpop.f32.mrf.mxu0
        %v4925 = vpop.f32.mrf.mxu0
        %v4926 = vadd.f32 0.0, %v4925
        %v4927 = vpop.f32.mrf.mxu0
        %4928 = vmatprep.mubr.bf16.mxu0 0
        %4929 = vmatmul.mubr.bf16.gmra.mxu0 %v4761
        %v4930 = vpop.f32.mrf.mxu0
        %v4931 = vadd.f32 0.0, %v4930
        %v4932 = vpop.f32.mrf.mxu0
        %v4933 = vpop.f32.mrf.mxu0
        %v4934 = vadd.f32 0.0, %v4933
        %v4935 = vpop.f32.mrf.mxu0
        %4936 = vmatprep.mubr.bf16.mxu0 0
        %4937 = vmatmul.mubr.bf16.gmra.mxu0 %v4764
        %v4938 = vpop.f32.mrf.mxu0
        %v4939 = vadd.f32 0.0, %v4938
        %v4940 = vpop.f32.mrf.mxu0
        %v4941 = vpop.f32.mrf.mxu0
        %v4942 = vadd.f32 0.0, %v4941
        %v4943 = vpop.f32.mrf.mxu0
        %4944 = vmatprep.mubr.bf16.mxu0 0
        %4945 = vmatmul.mubr.bf16.gmra.mxu0 %v4767
        %v4946 = vpop.f32.mrf.mxu0
        %v4947 = vadd.f32 0.0, %v4946
        %v4948 = vpop.f32.mrf.mxu0
        %v4949 = vpop.f32.mrf.mxu0
        %v4950 = vadd.f32 0.0, %v4949
        %v4951 = vpop.f32.mrf.mxu0
        %4952 = vmatprep.mubr.bf16.mxu0 0
        %4953 = vmatmul.mubr.bf16.gmra.mxu0 %v4770
        %v4954 = vpop.f32.mrf.mxu0
        %v4955 = vadd.f32 0.0, %v4954
        %v4956 = vpop.f32.mrf.mxu0
        %v4957 = vpop.f32.mrf.mxu0
        %v4958 = vadd.f32 0.0, %v4957
        %v4959 = vpop.f32.mrf.mxu0
        %4960 = vmatprep.mubr.bf16.mxu0 0
        %4961 = vmatmul.mubr.bf16.gmra.mxu0 %v4773
        %v4962 = vpop.f32.mrf.mxu0
        %v4963 = vadd.f32 0.0, %v4962
        %v4964 = vpop.f32.mrf.mxu0
        %v4965 = vpop.f32.mrf.mxu0
        %v4966 = vadd.f32 0.0, %v4965
        %v4967 = vpop.f32.mrf.mxu0
        %4968 = vmatprep.mubr.bf16.mxu0 0
        %4969 = vmatmul.mubr.bf16.gmra.mxu0 %v4776
        %v4970 = vpop.f32.mrf.mxu0
        %v4971 = vadd.f32 0.0, %v4970
        %v4972 = vpop.f32.mrf.mxu0
        %v4973 = vpop.f32.mrf.mxu0
        %v4974 = vadd.f32 0.0, %v4973
        %v4975 = vpop.f32.mrf.mxu0
        %4976 = vmatprep.mubr.bf16.mxu0 0
        %4977 = vmatmul.mubr.bf16.gmra.mxu0 %v4779
        %v4978 = vpop.f32.mrf.mxu0
        %v4979 = vadd.f32 0.0, %v4978
        %v4980 = vpop.f32.mrf.mxu0
        %v4981 = vpop.f32.mrf.mxu0
        %v4982 = vadd.f32 0.0, %v4981
        %v4983 = vpop.f32.mrf.mxu0
        %4984 = vmatprep.mubr.bf16.mxu0 0
        %4985 = vmatmul.mubr.bf16.gmra.mxu0 %v4782
        %v4986 = vpop.f32.mrf.mxu0
        %v4987 = vadd.f32 0.0, %v4986
        %v4988 = vpop.f32.mrf.mxu0
        %v4989 = vpop.f32.mrf.mxu0
        %v4990 = vadd.f32 0.0, %v4989
        %v4991 = vpop.f32.mrf.mxu0
        %4992 = vmatprep.mubr.bf16.mxu0 0
        %4993 = vmatmul.mubr.bf16.gmra.mxu0 %v4785
        %v4994 = vpop.f32.mrf.mxu0
        %v4995 = vadd.f32 0.0, %v4994
        %v4996 = vpop.f32.mrf.mxu0
        %v4997 = vpop.f32.mrf.mxu0
        %v4998 = vadd.f32 0.0, %v4997
        %v4999 = vpop.f32.mrf.mxu0
        %5000 = vmatprep.mubr.bf16.mxu0 0
        %5001 = vmatmul.mubr.bf16.gmra.mxu0 %v4788
        %v5002 = vpop.f32.mrf.mxu0
        %v5003 = vadd.f32 0.0, %v5002
        %v5004 = vpop.f32.mrf.mxu0
        %v5005 = vpop.f32.mrf.mxu0
        %v5006 = vadd.f32 0.0, %v5005
        %v5007 = vpop.f32.mrf.mxu0
        %5008 = vmatprep.mubr.bf16.mxu0 0
        %5009 = vmatmul.mubr.bf16.gmra.mxu0 %v4791
        %v5010 = vpop.f32.mrf.mxu0
        %v5011 = vadd.f32 0.0, %v5010
        %v5012 = vpop.f32.mrf.mxu0
        %v5013 = vpop.f32.mrf.mxu0
        %v5014 = vadd.f32 0.0, %v5013
        %v5015 = vpop.f32.mrf.mxu0
        %5016 = vmatprep.mubr.bf16.mxu0 0
        %5017 = vmatmul.mubr.bf16.gmra.mxu0 %v4794
        %v5018 = vpop.f32.mrf.mxu0
        %v5019 = vadd.f32 0.0, %v5018
        %v5020 = vpop.f32.mrf.mxu0
        %v5021 = vpop.f32.mrf.mxu0
        %v5022 = vadd.f32 0.0, %v5021
        %v5023 = vpop.f32.mrf.mxu0
        %5024 = vmatprep.mubr.bf16.mxu0 0
        %5025 = vmatmul.mubr.bf16.gmra.mxu0 %v4797
        %v5026 = vpop.f32.mrf.mxu0
        %v5027 = vadd.f32 0.0, %v5026
        %v5028 = vpop.f32.mrf.mxu0
        %v5029 = vpop.f32.mrf.mxu0
        %v5030 = vadd.f32 0.0, %v5029
        %v5031 = vpop.f32.mrf.mxu0
        %5032 = vmatprep.mubr.bf16.mxu0 0
        %5033 = vmatmul.mubr.bf16.gmra.mxu0 %v4800
        %v5034 = vpop.f32.mrf.mxu0
        %v5035 = vadd.f32 0.0, %v5034
        %v5036 = vpop.f32.mrf.mxu0
        %v5037 = vpop.f32.mrf.mxu0
        %v5038 = vadd.f32 0.0, %v5037
        %v5039 = vpop.f32.mrf.mxu0
        %5040 = vmatprep.mubr.bf16.mxu0 0
        %5041 = vmatmul.mubr.bf16.gmra.mxu0 %v4803
        %v5042 = vpop.f32.mrf.mxu0
        %v5043 = vadd.f32 0.0, %v5042
        %v5044 = vpop.f32.mrf.mxu0
        %v5045 = vpop.f32.mrf.mxu0
        %v5046 = vadd.f32 0.0, %v5045
        %v5047 = vpop.f32.mrf.mxu0
        %5048 = vmatprep.mubr.bf16.mxu0 0
        %5049 = vmatmul.mubr.bf16.gmra.mxu0 %v4806
        %v5050 = vpop.f32.mrf.mxu0
        %v5051 = vadd.f32 0.0, %v5050
        %v5052 = vpop.f32.mrf.mxu0
        %v5053 = vpop.f32.mrf.mxu0
        %v5054 = vadd.f32 0.0, %v5053
        %v5055 = vpop.f32.mrf.mxu0
        %5056 = vmatprep.mubr.bf16.mxu0 0
        %5057 = vmatmul.mubr.bf16.gmra.mxu0 %v4809
        %v5058 = vpop.f32.mrf.mxu0
        %v5059 = vadd.f32 0.0, %v5058
        %v5060 = vpop.f32.mrf.mxu0
        %v5061 = vpop.f32.mrf.mxu0
        %v5062 = vadd.f32 0.0, %v5061
        %v5063 = vpop.f32.mrf.mxu0
        %5064 = vmatprep.mubr.bf16.mxu0 0
        %5065 = vmatmul.mubr.bf16.gmra.mxu0 %v4812
        %v5066 = vpop.f32.mrf.mxu0
        %v5067 = vadd.f32 0.0, %v5066
        %v5068 = vpop.f32.mrf.mxu0
        %v5069 = vpop.f32.mrf.mxu0
        %v5070 = vadd.f32 0.0, %v5069
        %v5071 = vpop.f32.mrf.mxu0
        %5072 = vmatprep.mubr.bf16.mxu0 0
        %5073 = vmatmul.mubr.bf16.gmra.mxu0 %v4815
        %v5074 = vpop.f32.mrf.mxu0
        %v5075 = vadd.f32 0.0, %v5074
        %v5076 = vpop.f32.mrf.mxu0
        %v5077 = vpop.f32.mrf.mxu0
        %v5078 = vadd.f32 0.0, %v5077
        %v5079 = vpop.f32.mrf.mxu0
        %5080 = vmatprep.mubr.bf16.mxu0 0
        %5081 = vmatmul.mubr.bf16.gmra.mxu0 %v4818
        %v5082 = vpop.f32.mrf.mxu0
        %v5083 = vadd.f32 0.0, %v5082
        %v5084 = vpop.f32.mrf.mxu0
        %v5085 = vpop.f32.mrf.mxu0
        %v5086 = vadd.f32 0.0, %v5085
        %v5087 = vpop.f32.mrf.mxu0
        %5088 = vmatprep.mubr.bf16.mxu0 0
        %5089 = vmatmul.mubr.bf16.gmra.mxu0 %v4821
        %v5090 = vpop.f32.mrf.mxu0
        %v5091 = vadd.f32 0.0, %v5090
        %v5092 = vpop.f32.mrf.mxu0
        %v5093 = vpop.f32.mrf.mxu0
        %v5094 = vadd.f32 0.0, %v5093
        %v5095 = vpop.f32.mrf.mxu0
        %5096 = vmatprep.mubr.bf16.mxu0 0
        %5097 = vmatmul.mubr.bf16.gmra.mxu0 %v4824
        %v5098 = vpop.f32.mrf.mxu0
        %v5099 = vadd.f32 0.0, %v5098
        %v5100 = vpop.f32.mrf.mxu0
        %v5101 = vpop.f32.mrf.mxu0
        %v5102 = vadd.f32 0.0, %v5101
        %v5103 = vpop.f32.mrf.mxu0
        %5104 = vmatprep.mubr.bf16.mxu0 0
        %5105 = vmatmul.mubr.bf16.gmra.mxu0 %v4827
        %v5106 = vpop.f32.mrf.mxu0
        %v5107 = vadd.f32 0.0, %v5106
        %v5108 = vpop.f32.mrf.mxu0
        %v5109 = vpop.f32.mrf.mxu0
        %v5110 = vadd.f32 0.0, %v5109
        %v5111 = vpop.f32.mrf.mxu0
        %5112 = vmatprep.mubr.bf16.mxu0 0
        %5113 = vmatmul.mubr.bf16.gmra.mxu0 %v4830
        %v5114 = vpop.f32.mrf.mxu0
        %v5115 = vadd.f32 0.0, %v5114
        %v5116 = vpop.f32.mrf.mxu0
        %v5117 = vpop.f32.mrf.mxu0
        %v5118 = vadd.f32 0.0, %v5117
        %v5119 = vpop.f32.mrf.mxu0
        %5120 = vdwg.mxu0
        %v5121 = vadd.f32 %v4597, %v4867
        %v5122 = vadd.f32 %v4598, %v4870
        %v5123 = vadd.f32 %v4599, %v4875
        %v5124 = vadd.f32 %v4600, %v4878
        %v5125 = vadd.f32 %v4601, %v4883
        %v5126 = vadd.f32 %v4602, %v4886
        %v5127 = vadd.f32 %v4603, %v4891
        %v5128 = vadd.f32 %v4604, %v4894
        %v5129 = vadd.f32 %v4605, %v4899
        %v5130 = vadd.f32 %v4606, %v4902
        %v5131 = vadd.f32 %v4607, %v4907
        %v5132 = vadd.f32 %v4608, %v4910
        %v5133 = vadd.f32 %v4609, %v4915
        %v5134 = vadd.f32 %v4610, %v4918
        %v5135 = vadd.f32 %v4611, %v4923
        %v5136 = vadd.f32 %v4612, %v4926
        %v5137 = vadd.f32 %v4613, %v4931
        %v5138 = vadd.f32 %v4614, %v4934
        %v5139 = vadd.f32 %v4615, %v4939
        %v5140 = vadd.f32 %v4616, %v4942
        %v5141 = vadd.f32 %v4617, %v4947
        %v5142 = vadd.f32 %v4618, %v4950
        %v5143 = vadd.f32 %v4619, %v4955
        %v5144 = vadd.f32 %v4620, %v4958
        %v5145 = vadd.f32 %v4621, %v4963
        %v5146 = vadd.f32 %v4622, %v4966
        %v5147 = vadd.f32 %v4623, %v4971
        %v5148 = vadd.f32 %v4624, %v4974
        %v5149 = vadd.f32 %v4625, %v4979
        %v5150 = vadd.f32 %v4626, %v4982
        %v5151 = vadd.f32 %v4627, %v4987
        %v5152 = vadd.f32 %v4628, %v4990
        %v5153 = vadd.f32 %v4629, %v4995
        %v5154 = vadd.f32 %v4630, %v4998
        %v5155 = vadd.f32 %v4631, %v5003
        %v5156 = vadd.f32 %v4632, %v5006
        %v5157 = vadd.f32 %v4633, %v5011
        %v5158 = vadd.f32 %v4634, %v5014
        %v5159 = vadd.f32 %v4635, %v5019
        %v5160 = vadd.f32 %v4636, %v5022
        %v5161 = vadd.f32 %v4637, %v5027
        %v5162 = vadd.f32 %v4638, %v5030
        %v5163 = vadd.f32 %v4639, %v5035
        %v5164 = vadd.f32 %v4640, %v5038
        %v5165 = vadd.f32 %v4641, %v5043
        %v5166 = vadd.f32 %v4642, %v5046
        %v5167 = vadd.f32 %v4643, %v5051
        %v5168 = vadd.f32 %v4644, %v5054
        %v5169 = vadd.f32 %v4645, %v5059
        %v5170 = vadd.f32 %v4646, %v5062
        %v5171 = vadd.f32 %v4647, %v5067
        %v5172 = vadd.f32 %v4648, %v5070
        %v5173 = vadd.f32 %v4649, %v5075
        %v5174 = vadd.f32 %v4650, %v5078
        %v5175 = vadd.f32 %v4651, %v5083
        %v5176 = vadd.f32 %v4652, %v5086
        %v5177 = vadd.f32 %v4653, %v5091
        %v5178 = vadd.f32 %v4654, %v5094
        %v5179 = vadd.f32 %v4655, %v5099
        %v5180 = vadd.f32 %v4656, %v5102
        %v5181 = vadd.f32 %v4657, %v5107
        %v5182 = vadd.f32 %v4658, %v5110
        %v5183 = vadd.f32 %v4659, %v5115
        %v5184 = vadd.f32 %v4660, %v5118
        %v5185 = vld [vmem:[%s3] sm:$0x1]
        %v5187 = vlaneseq
        %v5188 = vshrl.u32 %v5187, 7
        %v5189 = vsub.s32 0, %v5188
        %v5190 = vrot.slane %v5185, %v5189
        %v5192 = vadd.f32 %v5121, %v5190
        %v5193 = vadd.f32 %v5122, %v5190
        %v5194 = vadd.f32 %v5123, %v5190
        %v5195 = vadd.f32 %v5124, %v5190
        %v5196 = vadd.f32 %v5125, %v5190
        %v5197 = vadd.f32 %v5126, %v5190
        %v5198 = vadd.f32 %v5127, %v5190
        %v5199 = vadd.f32 %v5128, %v5190
        %v5200 = vadd.f32 %v5129, %v5190
        %v5201 = vadd.f32 %v5130, %v5190
        %v5202 = vadd.f32 %v5131, %v5190
        %v5203 = vadd.f32 %v5132, %v5190
        %v5204 = vadd.f32 %v5133, %v5190
        %v5205 = vadd.f32 %v5134, %v5190
        %v5206 = vadd.f32 %v5135, %v5190
        %v5207 = vadd.f32 %v5136, %v5190
        %v5208 = vadd.f32 %v5137, %v5190
        %v5209 = vadd.f32 %v5138, %v5190
        %v5210 = vadd.f32 %v5139, %v5190
        %v5211 = vadd.f32 %v5140, %v5190
        %v5212 = vadd.f32 %v5141, %v5190
        %v5213 = vadd.f32 %v5142, %v5190
        %v5214 = vadd.f32 %v5143, %v5190
        %v5215 = vadd.f32 %v5144, %v5190
        %v5216 = vadd.f32 %v5145, %v5190
        %v5217 = vadd.f32 %v5146, %v5190
        %v5218 = vadd.f32 %v5147, %v5190
        %v5219 = vadd.f32 %v5148, %v5190
        %v5220 = vadd.f32 %v5149, %v5190
        %v5221 = vadd.f32 %v5150, %v5190
        %v5222 = vadd.f32 %v5151, %v5190
        %v5223 = vadd.f32 %v5152, %v5190
        %v5224 = vadd.f32 %v5153, %v5190
        %v5225 = vadd.f32 %v5154, %v5190
        %v5226 = vadd.f32 %v5155, %v5190
        %v5227 = vadd.f32 %v5156, %v5190
        %v5228 = vadd.f32 %v5157, %v5190
        %v5229 = vadd.f32 %v5158, %v5190
        %v5230 = vadd.f32 %v5159, %v5190
        %v5231 = vadd.f32 %v5160, %v5190
        %v5232 = vadd.f32 %v5161, %v5190
        %v5233 = vadd.f32 %v5162, %v5190
        %v5234 = vadd.f32 %v5163, %v5190
        %v5235 = vadd.f32 %v5164, %v5190
        %v5236 = vadd.f32 %v5165, %v5190
        %v5237 = vadd.f32 %v5166, %v5190
        %v5238 = vadd.f32 %v5167, %v5190
        %v5239 = vadd.f32 %v5168, %v5190
        %v5240 = vadd.f32 %v5169, %v5190
        %v5241 = vadd.f32 %v5170, %v5190
        %v5242 = vadd.f32 %v5171, %v5190
        %v5243 = vadd.f32 %v5172, %v5190
        %v5244 = vadd.f32 %v5173, %v5190
        %v5245 = vadd.f32 %v5174, %v5190
        %v5246 = vadd.f32 %v5175, %v5190
        %v5247 = vadd.f32 %v5176, %v5190
        %v5248 = vadd.f32 %v5177, %v5190
        %v5249 = vadd.f32 %v5178, %v5190
        %v5250 = vadd.f32 %v5179, %v5190
        %v5251 = vadd.f32 %v5180, %v5190
        %v5252 = vadd.f32 %v5181, %v5190
        %v5253 = vadd.f32 %v5182, %v5190
        %v5254 = vadd.f32 %v5183, %v5190
        %v5255 = vadd.f32 %v5184, %v5190
        %v5256 = vmax.f32 %v5192, 0.0
        %v5257 = vmax.f32 %v5193, 0.0
        %v5258 = vmax.f32 %v5194, 0.0
        %v5259 = vmax.f32 %v5195, 0.0
        %v5260 = vmax.f32 %v5196, 0.0
        %v5261 = vmax.f32 %v5197, 0.0
        %v5262 = vmax.f32 %v5198, 0.0
        %v5263 = vmax.f32 %v5199, 0.0
        %v5264 = vmax.f32 %v5200, 0.0
        %v5265 = vmax.f32 %v5201, 0.0
        %v5266 = vmax.f32 %v5202, 0.0
        %v5267 = vmax.f32 %v5203, 0.0
        %v5268 = vmax.f32 %v5204, 0.0
        %v5269 = vmax.f32 %v5205, 0.0
        %v5270 = vmax.f32 %v5206, 0.0
        %v5271 = vmax.f32 %v5207, 0.0
        %v5272 = vmax.f32 %v5208, 0.0
        %v5273 = vmax.f32 %v5209, 0.0
        %v5274 = vmax.f32 %v5210, 0.0
        %v5275 = vmax.f32 %v5211, 0.0
        %v5276 = vmax.f32 %v5212, 0.0
        %v5277 = vmax.f32 %v5213, 0.0
        %v5278 = vmax.f32 %v5214, 0.0
        %v5279 = vmax.f32 %v5215, 0.0
        %v5280 = vmax.f32 %v5216, 0.0
        %v5281 = vmax.f32 %v5217, 0.0
        %v5282 = vmax.f32 %v5218, 0.0
        %v5283 = vmax.f32 %v5219, 0.0
        %v5284 = vmax.f32 %v5220, 0.0
        %v5285 = vmax.f32 %v5221, 0.0
        %v5286 = vmax.f32 %v5222, 0.0
        %v5287 = vmax.f32 %v5223, 0.0
        %v5288 = vmax.f32 %v5224, 0.0
        %v5289 = vmax.f32 %v5225, 0.0
        %v5290 = vmax.f32 %v5226, 0.0
        %v5291 = vmax.f32 %v5227, 0.0
        %v5292 = vmax.f32 %v5228, 0.0
        %v5293 = vmax.f32 %v5229, 0.0
        %v5294 = vmax.f32 %v5230, 0.0
        %v5295 = vmax.f32 %v5231, 0.0
        %v5296 = vmax.f32 %v5232, 0.0
        %v5297 = vmax.f32 %v5233, 0.0
        %v5298 = vmax.f32 %v5234, 0.0
        %v5299 = vmax.f32 %v5235, 0.0
        %v5300 = vmax.f32 %v5236, 0.0
        %v5301 = vmax.f32 %v5237, 0.0
        %v5302 = vmax.f32 %v5238, 0.0
        %v5303 = vmax.f32 %v5239, 0.0
        %v5304 = vmax.f32 %v5240, 0.0
        %v5305 = vmax.f32 %v5241, 0.0
        %v5306 = vmax.f32 %v5242, 0.0
        %v5307 = vmax.f32 %v5243, 0.0
        %v5308 = vmax.f32 %v5244, 0.0
        %v5309 = vmax.f32 %v5245, 0.0
        %v5310 = vmax.f32 %v5246, 0.0
        %v5311 = vmax.f32 %v5247, 0.0
        %v5312 = vmax.f32 %v5248, 0.0
        %v5313 = vmax.f32 %v5249, 0.0
        %v5314 = vmax.f32 %v5250, 0.0
        %v5315 = vmax.f32 %v5251, 0.0
        %v5316 = vmax.f32 %v5252, 0.0
        %v5317 = vmax.f32 %v5253, 0.0
        %v5318 = vmax.f32 %v5254, 0.0
        %v5319 = vmax.f32 %v5255, 0.0
        %v5320 = vpack.c.bf16 %v5257, %v5256
        %v5321 = vpack.c.bf16 %v5259, %v5258
        %v5322 = vpack.c.bf16 %v5261, %v5260
        %v5323 = vpack.c.bf16 %v5263, %v5262
        %v5324 = vpack.c.bf16 %v5265, %v5264
        %v5325 = vpack.c.bf16 %v5267, %v5266
        %v5326 = vpack.c.bf16 %v5269, %v5268
        %v5327 = vpack.c.bf16 %v5271, %v5270
        %v5328 = vpack.c.bf16 %v5273, %v5272
        %v5329 = vpack.c.bf16 %v5275, %v5274
        %v5330 = vpack.c.bf16 %v5277, %v5276
        %v5331 = vpack.c.bf16 %v5279, %v5278
        %v5332 = vpack.c.bf16 %v5281, %v5280
        %v5333 = vpack.c.bf16 %v5283, %v5282
        %v5334 = vpack.c.bf16 %v5285, %v5284
        %v5335 = vpack.c.bf16 %v5287, %v5286
        %v5336 = vpack.c.bf16 %v5289, %v5288
        %v5337 = vpack.c.bf16 %v5291, %v5290
        %v5338 = vpack.c.bf16 %v5293, %v5292
        %v5339 = vpack.c.bf16 %v5295, %v5294
        %v5340 = vpack.c.bf16 %v5297, %v5296
        %v5341 = vpack.c.bf16 %v5299, %v5298
        %v5342 = vpack.c.bf16 %v5301, %v5300
        %v5343 = vpack.c.bf16 %v5303, %v5302
        %v5344 = vpack.c.bf16 %v5305, %v5304
        %v5345 = vpack.c.bf16 %v5307, %v5306
        %v5346 = vpack.c.bf16 %v5309, %v5308
        %v5347 = vpack.c.bf16 %v5311, %v5310
        %v5348 = vpack.c.bf16 %v5313, %v5312
        %v5349 = vpack.c.bf16 %v5315, %v5314
        %v5350 = vpack.c.bf16 %v5317, %v5316
        %v5351 = vpack.c.bf16 %v5319, %v5318
        %v5384 = vunpack.c.l.b16 %v5320
        %v5385 = vunpack.c.h.b16 %v5320
        %v5386 = vunpack.c.l.b16 %v5321
        %v5387 = vunpack.c.h.b16 %v5321
        %v5388 = vunpack.c.l.b16 %v5322
        %v5389 = vunpack.c.h.b16 %v5322
        %v5390 = vunpack.c.l.b16 %v5323
        %v5391 = vunpack.c.h.b16 %v5323
        %v5392 = vunpack.c.l.b16 %v5324
        %v5393 = vunpack.c.h.b16 %v5324
        %v5394 = vunpack.c.l.b16 %v5325
        %v5395 = vunpack.c.h.b16 %v5325
        %v5396 = vunpack.c.l.b16 %v5326
        %v5397 = vunpack.c.h.b16 %v5326
        %v5398 = vunpack.c.l.b16 %v5327
        %v5399 = vunpack.c.h.b16 %v5327
        %v5400 = vunpack.c.l.b16 %v5328
        %v5401 = vunpack.c.h.b16 %v5328
        %v5402 = vunpack.c.l.b16 %v5329
        %v5403 = vunpack.c.h.b16 %v5329
        %v5404 = vunpack.c.l.b16 %v5330
        %v5405 = vunpack.c.h.b16 %v5330
        %v5406 = vunpack.c.l.b16 %v5331
        %v5407 = vunpack.c.h.b16 %v5331
        %v5408 = vunpack.c.l.b16 %v5332
        %v5409 = vunpack.c.h.b16 %v5332
        %v5410 = vunpack.c.l.b16 %v5333
        %v5411 = vunpack.c.h.b16 %v5333
        %v5412 = vunpack.c.l.b16 %v5334
        %v5413 = vunpack.c.h.b16 %v5334
        %v5414 = vunpack.c.l.b16 %v5335
        %v5415 = vunpack.c.h.b16 %v5335
        %v5416 = vunpack.c.l.b16 %v5336
        %v5417 = vunpack.c.h.b16 %v5336
        %v5418 = vunpack.c.l.b16 %v5337
        %v5419 = vunpack.c.h.b16 %v5337
        %v5420 = vunpack.c.l.b16 %v5338
        %v5421 = vunpack.c.h.b16 %v5338
        %v5422 = vunpack.c.l.b16 %v5339
        %v5423 = vunpack.c.h.b16 %v5339
        %v5424 = vunpack.c.l.b16 %v5340
        %v5425 = vunpack.c.h.b16 %v5340
        %v5426 = vunpack.c.l.b16 %v5341
        %v5427 = vunpack.c.h.b16 %v5341
        %v5428 = vunpack.c.l.b16 %v5342
        %v5429 = vunpack.c.h.b16 %v5342
        %v5430 = vunpack.c.l.b16 %v5343
        %v5431 = vunpack.c.h.b16 %v5343
        %v5432 = vunpack.c.l.b16 %v5344
        %v5433 = vunpack.c.h.b16 %v5344
        %v5434 = vunpack.c.l.b16 %v5345
        %v5435 = vunpack.c.h.b16 %v5345
        %v5436 = vunpack.c.l.b16 %v5346
        %v5437 = vunpack.c.h.b16 %v5346
        %v5438 = vunpack.c.l.b16 %v5347
        %v5439 = vunpack.c.h.b16 %v5347
        %v5440 = vunpack.c.l.b16 %v5348
        %v5441 = vunpack.c.h.b16 %v5348
        %v5442 = vunpack.c.l.b16 %v5349
        %v5443 = vunpack.c.h.b16 %v5349
        %v5444 = vunpack.c.l.b16 %v5350
        %v5445 = vunpack.c.h.b16 %v5350
        %v5446 = vunpack.c.l.b16 %v5351
        %v5447 = vunpack.c.h.b16 %v5351
        %v5448 = vpack.c.b16 %v5384, %v5384
        %v5449 = vpack.c.b16 %v5385, %v5385
        %v5450 = vpack.c.b16 %v5386, %v5386
        %v5451 = vpack.c.b16 %v5387, %v5387
        %v5452 = vpack.c.b16 %v5388, %v5388
        %v5453 = vpack.c.b16 %v5389, %v5389
        %v5454 = vpack.c.b16 %v5390, %v5390
        %v5455 = vpack.c.b16 %v5391, %v5391
        %v5456 = vpack.c.b16 %v5392, %v5392
        %v5457 = vpack.c.b16 %v5393, %v5393
        %v5458 = vpack.c.b16 %v5394, %v5394
        %v5459 = vpack.c.b16 %v5395, %v5395
        %v5460 = vpack.c.b16 %v5396, %v5396
        %v5461 = vpack.c.b16 %v5397, %v5397
        %v5462 = vpack.c.b16 %v5398, %v5398
        %v5463 = vpack.c.b16 %v5399, %v5399
        %v5464 = vpack.c.b16 %v5400, %v5400
        %v5465 = vpack.c.b16 %v5401, %v5401
        %v5466 = vpack.c.b16 %v5402, %v5402
        %v5467 = vpack.c.b16 %v5403, %v5403
        %v5468 = vpack.c.b16 %v5404, %v5404
        %v5469 = vpack.c.b16 %v5405, %v5405
        %v5470 = vpack.c.b16 %v5406, %v5406
        %v5471 = vpack.c.b16 %v5407, %v5407
        %v5472 = vpack.c.b16 %v5408, %v5408
        %v5473 = vpack.c.b16 %v5409, %v5409
        %v5474 = vpack.c.b16 %v5410, %v5410
        %v5475 = vpack.c.b16 %v5411, %v5411
        %v5476 = vpack.c.b16 %v5412, %v5412
        %v5477 = vpack.c.b16 %v5413, %v5413
        %v5478 = vpack.c.b16 %v5414, %v5414
        %v5479 = vpack.c.b16 %v5415, %v5415
        %v5480 = vpack.c.b16 %v5416, %v5416
        %v5481 = vpack.c.b16 %v5417, %v5417
        %v5482 = vpack.c.b16 %v5418, %v5418
        %v5483 = vpack.c.b16 %v5419, %v5419
        %v5484 = vpack.c.b16 %v5420, %v5420
        %v5485 = vpack.c.b16 %v5421, %v5421
        %v5486 = vpack.c.b16 %v5422, %v5422
        %v5487 = vpack.c.b16 %v5423, %v5423
        %v5488 = vpack.c.b16 %v5424, %v5424
        %v5489 = vpack.c.b16 %v5425, %v5425
        %v5490 = vpack.c.b16 %v5426, %v5426
        %v5491 = vpack.c.b16 %v5427, %v5427
        %v5492 = vpack.c.b16 %v5428, %v5428
        %v5493 = vpack.c.b16 %v5429, %v5429
        %v5494 = vpack.c.b16 %v5430, %v5430
        %v5495 = vpack.c.b16 %v5431, %v5431
        %v5496 = vpack.c.b16 %v5432, %v5432
        %v5497 = vpack.c.b16 %v5433, %v5433
        %v5498 = vpack.c.b16 %v5434, %v5434
        %v5499 = vpack.c.b16 %v5435, %v5435
        %v5500 = vpack.c.b16 %v5436, %v5436
        %v5501 = vpack.c.b16 %v5437, %v5437
        %v5502 = vpack.c.b16 %v5438, %v5438
        %v5503 = vpack.c.b16 %v5439, %v5439
        %v5504 = vpack.c.b16 %v5440, %v5440
        %v5505 = vpack.c.b16 %v5441, %v5441
        %v5506 = vpack.c.b16 %v5442, %v5442
        %v5507 = vpack.c.b16 %v5443, %v5443
        %v5508 = vpack.c.b16 %v5444, %v5444
        %v5509 = vpack.c.b16 %v5445, %v5445
        %v5510 = vpack.c.b16 %v5446, %v5446
        %v5511 = vpack.c.b16 %v5447, %v5447
        %5576 = vst [vmem:[%s212] sm:$0xf] %v5448
        %5577 = vst [vmem:[%s212 + $0x4] sm:$0xf] %v5449
        %5578 = vst [vmem:[%s212 + $0x8] sm:$0xf] %v5450
        %5579 = vst [vmem:[%s212 + $0xc] sm:$0xf] %v5451
        %5580 = vst [vmem:[%s212 + $0x10] sm:$0xf] %v5452
        %5581 = vst [vmem:[%s212 + $0x14] sm:$0xf] %v5453
        %5582 = vst [vmem:[%s212 + $0x18] sm:$0xf] %v5454
        %5583 = vst [vmem:[%s212 + $0x1c] sm:$0xf] %v5455
        %5584 = vst [vmem:[%s212 + $0x20] sm:$0xf] %v5456
        %5585 = vst [vmem:[%s212 + $0x24] sm:$0xf] %v5457
        %5586 = vst [vmem:[%s212 + $0x28] sm:$0xf] %v5458
        %5587 = vst [vmem:[%s212 + $0x2c] sm:$0xf] %v5459
        %5588 = vst [vmem:[%s212 + $0x30] sm:$0xf] %v5460
        %5589 = vst [vmem:[%s212 + $0x34] sm:$0xf] %v5461
        %5590 = vst [vmem:[%s212 + $0x38] sm:$0xf] %v5462
        %5591 = vst [vmem:[%s212 + $0x3c] sm:$0xf] %v5463
        %5592 = vst [vmem:[%s212 + $0x40] sm:$0xf] %v5464
        %5593 = vst [vmem:[%s212 + $0x44] sm:$0xf] %v5465
        %5594 = vst [vmem:[%s212 + $0x48] sm:$0xf] %v5466
        %5595 = vst [vmem:[%s212 + $0x4c] sm:$0xf] %v5467
        %5596 = vst [vmem:[%s212 + $0x50] sm:$0xf] %v5468
        %5597 = vst [vmem:[%s212 + $0x54] sm:$0xf] %v5469
        %5598 = vst [vmem:[%s212 + $0x58] sm:$0xf] %v5470
        %5599 = vst [vmem:[%s212 + $0x5c] sm:$0xf] %v5471
        %5600 = vst [vmem:[%s212 + $0x60] sm:$0xf] %v5472
        %5601 = vst [vmem:[%s212 + $0x64] sm:$0xf] %v5473
        %5602 = vst [vmem:[%s212 + $0x68] sm:$0xf] %v5474
        %5603 = vst [vmem:[%s212 + $0x6c] sm:$0xf] %v5475
        %5604 = vst [vmem:[%s212 + $0x70] sm:$0xf] %v5476
        %5605 = vst [vmem:[%s212 + $0x74] sm:$0xf] %v5477
        %5606 = vst [vmem:[%s212 + $0x78] sm:$0xf] %v5478
        %5607 = vst [vmem:[%s212 + $0x7c] sm:$0xf] %v5479
        %5608 = vst [vmem:[%s212 + $0x80] sm:$0xf] %v5480
        %5609 = vst [vmem:[%s212 + $0x84] sm:$0xf] %v5481
        %5610 = vst [vmem:[%s212 + $0x88] sm:$0xf] %v5482
        %5611 = vst [vmem:[%s212 + $0x8c] sm:$0xf] %v5483
        %5612 = vst [vmem:[%s212 + $0x90] sm:$0xf] %v5484
        %5613 = vst [vmem:[%s212 + $0x94] sm:$0xf] %v5485
        %5614 = vst [vmem:[%s212 + $0x98] sm:$0xf] %v5486
        %5615 = vst [vmem:[%s212 + $0x9c] sm:$0xf] %v5487
        %5616 = vst [vmem:[%s212 + $0xa0] sm:$0xf] %v5488
        %5617 = vst [vmem:[%s212 + $0xa4] sm:$0xf] %v5489
        %5618 = vst [vmem:[%s212 + $0xa8] sm:$0xf] %v5490
        %5619 = vst [vmem:[%s212 + $0xac] sm:$0xf] %v5491
        %5620 = vst [vmem:[%s212 + $0xb0] sm:$0xf] %v5492
        %5621 = vst [vmem:[%s212 + $0xb4] sm:$0xf] %v5493
        %5622 = vst [vmem:[%s212 + $0xb8] sm:$0xf] %v5494
        %5623 = vst [vmem:[%s212 + $0xbc] sm:$0xf] %v5495
        %5624 = vst [vmem:[%s212 + $0xc0] sm:$0xf] %v5496
        %5625 = vst [vmem:[%s212 + $0xc4] sm:$0xf] %v5497
        %5626 = vst [vmem:[%s212 + $0xc8] sm:$0xf] %v5498
        %5627 = vst [vmem:[%s212 + $0xcc] sm:$0xf] %v5499
        %5628 = vst [vmem:[%s212 + $0xd0] sm:$0xf] %v5500
        %5629 = vst [vmem:[%s212 + $0xd4] sm:$0xf] %v5501
        %5630 = vst [vmem:[%s212 + $0xd8] sm:$0xf] %v5502
        %5631 = vst [vmem:[%s212 + $0xdc] sm:$0xf] %v5503
        %5632 = vst [vmem:[%s212 + $0xe0] sm:$0xf] %v5504
        %5633 = vst [vmem:[%s212 + $0xe4] sm:$0xf] %v5505
        %5634 = vst [vmem:[%s212 + $0xe8] sm:$0xf] %v5506
        %5635 = vst [vmem:[%s212 + $0xec] sm:$0xf] %v5507
        %5636 = vst [vmem:[%s212 + $0xf0] sm:$0xf] %v5508
        %5637 = vst [vmem:[%s212 + $0xf4] sm:$0xf] %v5509
        %5638 = vst [vmem:[%s212 + $0xf8] sm:$0xf] %v5510
        %5639 = vst [vmem:[%s212 + $0xfc] sm:$0xf] %v5511
        %s5640 = sand.u32 %s122, 1
        %s5641 = scalar_lea.sflag [#allocation3], %s5640
        %s5642 = sand.u32 %s122, 1
        %s5643 = smul.addr %s5642, 256
        %s5644 = scalar_lea.vmem [#allocation2], %s5643
        // Predicated region
        $region37: #{tpu_custom_call.1} parent=35 // pred_check
          %p5645 = pneg %p132
        $region38: #{tpu_custom_call.1} parent=35 // pred_check_branch
          %5647 = sbr.rel (%p5645) target = $region40
        $region39: #{tpu_custom_call.1} parent=35 // pred_region
          %s5648 = smul.u32 64, %s18
          %s5650 = ssub.s32 4096, 4096
          %5651 = vsyncadd %s5641, %s5650
          %s5652 = smul.addr %s5648, 64
          %s5653 = scalar_lea.hbm %s4, %s5652
          %s5654 = sshll.u32 %s5644, 4
          %s5655 = int_to_ptr.vmem [resolvable:$true] %s5654
          %5660 = dma.vmem_to_hbm [thread:$0]  %s5655, 4096, %s5653, %s5641, 64, 64, 4
        $region40: #{tpu_custom_call.1} parent=35 // pred_fallthru
          _
      $region36: #{tpu_custom_call.1} parent=5 // pred_fallthru
        _
      %p5661 = scmp.le.s32.totalorder 2, %s13
      // Predicated region
      $region41: #{tpu_custom_call.1} parent=5 // pred_check
        %p5662 = pneg %p5661
      $region42: #{tpu_custom_call.1} parent=5 // pred_check_branch
        %5664 = sbr.rel (%p5662) target = $region44
      $region43: #{tpu_custom_call.1} parent=5 // pred_region
        %s5665 = ssub.s32 %s13, 2
        // Predicated region
        $region45: #{tpu_custom_call.1} parent=43 // pred_check
          %p5666 = pneg %p138
        $region46: #{tpu_custom_call.1} parent=43 // pred_check_branch
          %5668 = sbr.rel (%p5666) target = $region48
        $region47: #{tpu_custom_call.1} parent=43 // pred_region
          %s5669 = sand.u32 %s123, 1
          %s5670 = scalar_lea.sflag [#allocation3], %s5669
          %s5671 = sand.u32 %s123, 1
          %s5672 = smul.addr %s5671, 256
          %s5673 = scalar_lea.vmem [#allocation2], %s5672
          %5674 = dma.done %s5670, 4096
        $region48: #{tpu_custom_call.1} parent=43 // pred_fallthru
          _
      $region44: #{tpu_custom_call.1} parent=5 // pred_fallthru
        _
    $region6: #{tpu_custom_call.1} parent=1 // loop_footer
      %s17 = sadd.s32 1, %s13
    $region7: #{tpu_custom_call.1} parent=1 // loop_footer_branch
      %12 = sbr.rel target = $region3
    $region8: #{tpu_custom_call.1} parent=1 // loop_exit
      _
    %5675 = vsyncpa [#allocation3], 1
    %s5676 = scalar_lea.sflag [#allocation3], 1
    %5677 = vsyncpa %s5676, 1

</llo_original>
